<compile_context>
chip_gen: v7x
topology: tpu7x:2x2x1
jax: 0.10.0
libtpu: 0.0.40
codegen_flags: <defaults>
</compile_context>

<pallas_src>
import functools

import jax
import jax.numpy as jnp
from jax.experimental import pallas as pl
from jax.experimental.pallas import tpu as pltpu


# ----------------------------------------------------------------------------
# Pallas kernel: Tc timesteps of 1 or 2 LSTM directions per grid step.
# ----------------------------------------------------------------------------
def _lstm_chunk_kernel(*refs, chunk, hidden, n_dirs):
    """Ref layout (n_dirs = 1 or 2, D below):

      refs[0:D]          gates[d]   (Tc, B, 4H) bf16   x@W_ih^T + b (per dir)
                                    (backward dir's chunk index is reversed
                                     via its BlockSpec index_map)
      refs[D:2D]         whh[d]     (H, 4H)     bf16   W_hh^T (resident)
      refs[2D]           h0         (D, B, H)   f32
      refs[2D+1]         c0         (D, B, H)   f32
      refs[2D+2:3D+2]    out[d]     (1, B, Tc*H) f32   lane-dense chunk output
      refs[3D+2]         hT         (D, B, H)   f32    (resident, last step)
      refs[3D+3]         cT         (D, B, H)   f32
      refs[3D+4:3D+6]    h_sc, c_sc (D, B, H)   f32    VMEM carry scratch
    """
    D = n_dirs
    gates_refs = refs[:D]
    whh_refs = refs[D:2 * D]
    h0_ref = refs[2 * D]
    c0_ref = refs[2 * D + 1]
    out_refs = refs[2 * D + 2:3 * D + 2]
    hT_ref = refs[3 * D + 2]
    cT_ref = refs[3 * D + 3]
    h_sc = refs[3 * D + 4]
    c_sc = refs[3 * D + 5]

    t = pl.program_id(0)
    H = hidden

    @pl.when(t == 0)
    def _init():
        h_sc[...] = h0_ref[...]
        c_sc[...] = c0_ref[...]

    # Per-direction carries and resident weights.
    h = [h_sc[d] for d in range(D)]          # each (B, H) f32
    c = [c_sc[d] for d in range(D)]
    w = [whh_refs[d][...] for d in range(D)]  # each (H, 4H) bf16

    # Statically unrolled chunk loop. Both direction chains advance in the
    # same iteration so their matmul/EUP/VPU work interleaves in the schedule.
    # Forward dir walks positions 0..Tc-1; backward dir walks Tc-1..0 within
    # its (already reversed via index_map) chunk.
    for li in range(chunk):
        for d in range(D):
            pos = li if d == 0 else chunk - 1 - li
            g = gates_refs[d][pos].astype(jnp.float32) + jnp.dot(
                h[d].astype(jnp.bfloat16), w[d],
                preferred_element_type=jnp.float32)
            # PyTorch gate order: i, f, g, o
            i_g = jax.nn.sigmoid(g[:, 0 * H:1 * H])
            f_g = jax.nn.sigmoid(g[:, 1 * H:2 * H])
            g_g = jnp.tanh(g[:, 2 * H:3 * H])
            o_g = jax.nn.sigmoid(g[:, 3 * H:4 * H])
            c[d] = f_g * c[d] + i_g * g_g
            h[d] = o_g * jnp.tanh(c[d])
            # Lane-dense output block (last dim Tc*H); static slice offsets.
            out_refs[d][0, :, pos * H:(pos + 1) * H] = h[d]

    for d in range(D):
        h_sc[d] = h[d]
        c_sc[d] = c[d]

    @pl.when(t == pl.num_programs(0) - 1)
    def _finalize():
        for d in range(D):
            hT_ref[d] = h[d]
            cT_ref[d] = c[d]


def _pick_chunk(T, B, H, n_dirs, *, max_chunk=32, vmem_budget=8 * 2 ** 20):
    """Largest divisor of T that fits a conservative VMEM budget (v7x-safe)."""
    # Double-buffered streaming bytes per timestep: gates (bf16) + out (f32).
    per_step = n_dirs * (2 * B * 4 * H * 2 + 2 * B * H * 4)
    cap = max(1, min(max_chunk, vmem_budget // max(per_step, 1)))
    tc = max(1, min(cap, T))
    while T % tc:
        tc -= 1
    return tc


def _lstm_layer(gates_list, whh_list, h0, c0, *, hidden):
    """Run one LSTM layer (1 or 2 fused directions) over precomputed
    pre-activations.

    gates_list : [ (T, B, 4H) bf16 ] per direction   (x @ W_ih^T + b)
    whh_list   : [ (H, 4H) bf16 ]    per direction
    h0, c0     : (D, B, H) f32
    Returns    : [out_seq (T,B,H) f32 per dir], h_T (D,B,H), c_T (D,B,H)
    """
    D = len(gates_list)
    T, B, G = gates_list[0].shape
    H = hidden
    assert G == 4 * H
    Tc = _pick_chunk(T, B, H, D)
    nT = T // Tc

    def fwd_map(t):
        return (t, 0, 0)

    def bwd_map(t):
        return (nT - 1 - t, 0, 0)

    t_maps = [fwd_map, bwd_map][:D]

    in_specs = (
        [pl.BlockSpec((Tc, B, 4 * H), m) for m in t_maps]             # gates
        + [pl.BlockSpec((H, 4 * H), lambda t: (0, 0))
           for _ in range(D)]                                          # W_hh^T
        + [pl.BlockSpec((D, B, H), lambda t: (0, 0, 0)),               # h0
           pl.BlockSpec((D, B, H), lambda t: (0, 0, 0))]               # c0
    )
    out_specs = (
        [pl.BlockSpec((1, B, Tc * H), m) for m in t_maps]              # out
        + [pl.BlockSpec((D, B, H), lambda t: (0, 0, 0)),               # h_T
           pl.BlockSpec((D, B, H), lambda t: (0, 0, 0))]               # c_T
    )
    out_shape = (
        tuple(jax.ShapeDtypeStruct((nT, B, Tc * H), jnp.float32)
              for _ in range(D))
        + (jax.ShapeDtypeStruct((D, B, H), jnp.float32),
           jax.ShapeDtypeStruct((D, B, H), jnp.float32))
    )

    # VMEM budget (double-buffered streaming blocks + resident weights/state)
    # and an explicit scoped-VMEM limit that is safe on all generations.
    gate_chunk = D * Tc * B * 4 * H * 2
    out_chunk = D * B * Tc * H * 4
    whh_bytes = D * H * 4 * H * 2
    state_bytes = 6 * D * B * H * 4
    vmem_needed = 2 * (gate_chunk + out_chunk + whh_bytes) + state_bytes
    vmem_limit = int(min(max(4 * vmem_needed, 32 * 2 ** 20), 64 * 2 ** 20))

    cost = pl.CostEstimate(
        flops=int(2 * D * T * B * H * 4 * H),
        transcendentals=int(5 * D * T * B * H),
        bytes_accessed=int(D * T * B * 4 * H * 2 + D * T * B * H * 4
                           + whh_bytes + state_bytes),
    )

    grid_spec = pltpu.PrefetchScalarGridSpec(
        num_scalar_prefetch=0,
        grid=(nT,),
        in_specs=in_specs,
        out_specs=out_specs,
        scratch_shapes=[
            pltpu.VMEM((D, B, H), jnp.float32),   # h carry
            pltpu.VMEM((D, B, H), jnp.float32),   # c carry
        ],
    )

    outs = pl.pallas_call(
        functools.partial(_lstm_chunk_kernel, chunk=Tc, hidden=H, n_dirs=D),
        out_shape=out_shape,
        grid_spec=grid_spec,
        compiler_params=pltpu.CompilerParams(
            dimension_semantics=("arbitrary",),   # sequential recurrence
            vmem_limit_bytes=vmem_limit),
        cost_estimate=cost,
    )(*gates_list, *whh_list, h0, c0)

    out_chunks = outs[:D]
    h_T, c_T = outs[D], outs[D + 1]

    # Undo the lane-dense (nT, B, Tc*H) chunk layout -> (T, B, H).
    seqs = []
    for oc in out_chunks:
        seq = (oc.reshape(nT, B, Tc, H)
                 .transpose(0, 2, 1, 3)
                 .reshape(T, B, H))
        seqs.append(seq)
    return seqs, h_T, c_T


# ----------------------------------------------------------------------------
# Encoder: parameter init + multi-layer / bidirectional stacking (glue).
# ----------------------------------------------------------------------------
def init_encoder_params(key, input_size, hidden_size, num_layers,
                        bidirectional):
    """PyTorch-style init U(-1/sqrt(H), 1/sqrt(H)); weights stored
    pre-transposed, biases pre-combined, W_hh^T pre-cast to bf16."""
    D = 2 if bidirectional else 1
    k = 1.0 / jnp.sqrt(jnp.float32(hidden_size))
    params = []
    for layer in range(num_layers):
        in_l = input_size if layer == 0 else D * hidden_size
        for _ in range(D):
            key, k1, k2, k3, k4 = jax.random.split(key, 5)
            w_ih = jax.random.uniform(k1, (4 * hidden_size, in_l),
                                      jnp.float32, -k, k)
            w_hh = jax.random.uniform(k2, (4 * hidden_size, hidden_size),
                                      jnp.float32, -k, k)
            b_ih = jax.random.uniform(k3, (4 * hidden_size,),
                                      jnp.float32, -k, k)
            b_hh = jax.random.uniform(k4, (4 * hidden_size,),
                                      jnp.float32, -k, k)
            params.append(dict(
                w_ih_t=jnp.transpose(w_ih),                       # (In, 4H) f32
                w_hh_t=jnp.transpose(w_hh).astype(jnp.bfloat16),  # (H, 4H) bf16
                bias=(b_ih + b_hh),                               # (4H,) f32
            ))
    return params


def encoder_forward(params, x, h_0, c_0, *, hidden_size, num_layers,
                    bidirectional):
    """Matches Encoder.forward: returns (h, c) of shape (num_layers*D, B, H).

    x  : (B, T, input_size)  -- batch_first, like PyTorch
    h_0: (num_layers*D, B, H)
    c_0: (num_layers*D, B, H)
    """
    D = 2 if bidirectional else 1
    H = hidden_size
    layer_input = jnp.transpose(x, (1, 0, 2)).astype(jnp.float32)  # (T, B, In)
    T, B, _ = layer_input.shape

    h_finals, c_finals = [], []
    for layer in range(num_layers):
        ps = [params[layer * D + d] for d in range(D)]
        in_dim = layer_input.shape[-1]
        # Hoisted input projection for ALL directions: one big GEMM
        # (T*B, In) @ (In, D*4H) in f32, emitted as bf16 for the kernel.
        w_cat = jnp.concatenate([p["w_ih_t"] for p in ps], axis=-1)
        b_cat = jnp.concatenate([p["bias"] for p in ps], axis=-1)
        gates_all = (jnp.dot(layer_input.reshape(T * B, in_dim), w_cat,
                             preferred_element_type=jnp.float32)
                     + b_cat).astype(jnp.bfloat16).reshape(T, B, D * 4 * H)
        gates_list = [gates_all[..., d * 4 * H:(d + 1) * 4 * H]
                      for d in range(D)]
        whh_list = [p["w_hh_t"] for p in ps]

        h0 = h_0[layer * D:(layer + 1) * D]
        c0 = c_0[layer * D:(layer + 1) * D]
        seqs, h_T, c_T = _lstm_layer(gates_list, whh_list, h0, c0, hidden=H)

        for d in range(D):
            h_finals.append(h_T[d])
            c_finals.append(c_T[d])
        layer_input = (seqs[0] if D == 1
                       else jnp.concatenate(seqs, axis=-1))       # (T, B, D*H)

    h = jnp.stack(h_finals, axis=0)   # (num_layers*D, B, H)
    c = jnp.stack(c_finals, axis=0)
    return h, c


# ----------------------------------------------------------------------------
# Pure-JAX reference (lax.scan) with identical bf16 casts, for correctness.
# ----------------------------------------------------------------------------
def _encoder_ref(params, x, h_0, c_0, *, hidden_size, num_layers,
                 bidirectional):
    D = 2 if bidirectional else 1
    H = hidden_size
    layer_input = jnp.transpose(x, (1, 0, 2)).astype(jnp.float32)
    h_fin, c_fin = [], []
    for layer in range(num_layers):
        T, B, In = layer_input.shape
        outs = []
        for d in range(D):
            idx = layer * D + d
            p = params[idx]
            g_in = (jnp.dot(layer_input.reshape(T * B, In), p["w_ih_t"],
                            preferred_element_type=jnp.float32)
                    + p["bias"]).astype(jnp.bfloat16).reshape(T, B, 4 * H)
            xs = g_in if d == 0 else g_in[::-1]

            def step(carry, g_t, p=p):
                h, c = carry
                g = g_t.astype(jnp.float32) + jnp.dot(
                    h.astype(jnp.bfloat16), p["w_hh_t"],
                    preferred_element_type=jnp.float32)
                i = jax.nn.sigmoid(g[:, 0 * H:1 * H])
                f = jax.nn.sigmoid(g[:, 1 * H:2 * H])
                gg = jnp.tanh(g[:, 2 * H:3 * H])
                o = jax.nn.sigmoid(g[:, 3 * H:4 * H])
                c = f * c + i * gg
                h = o * jnp.tanh(c)
                return (h, c), h

            (hT, cT), out = jax.lax.scan(step, (h_0[idx], c_0[idx]), xs)
            if d == 1:
                out = out[::-1]
            outs.append(out)
            h_fin.append(hT)
            c_fin.append(cT)
        layer_input = outs[0] if D == 1 else jnp.concatenate(outs, axis=-1)
    return jnp.stack(h_fin, axis=0), jnp.stack(c_fin, axis=0)


# ----------------------------------------------------------------------------
# Demo
# ----------------------------------------------------------------------------
if __name__ == "__main__":
    cfg = {
        "Global": {"input_size": 8, "output_size": 8},
        "Architecture": {"hidden_size": 32, "num_layers": 2,
                         "bidirectional": True},
    }
    input_size = cfg["Global"]["input_size"]
    hidden_size = cfg["Architecture"]["hidden_size"]
    num_layers = cfg["Architecture"]["num_layers"]
    bidirectional = cfg["Architecture"]["bidirectional"]
    D = 2 if bidirectional else 1

    batch, seq_len = 2, 8

    key = jax.random.PRNGKey(0)
    key, kp, kx, kh, kc = jax.random.split(key, 5)

    params = init_encoder_params(kp, input_size, hidden_size, num_layers,
                                 bidirectional)

    x = jax.random.normal(kx, (batch, seq_len, input_size), jnp.float32)
    # Encoder.forward draws h_0/c_0 with torch.randn each call; drawn here
    # deterministically with JAX RNG and passed in.
    h_0 = jax.random.normal(kh, (num_layers * D, batch, hidden_size),
                            jnp.float32)
    c_0 = jax.random.normal(kc, (num_layers * D, batch, hidden_size),
                            jnp.float32)

    fwd = functools.partial(encoder_forward, hidden_size=hidden_size,
                            num_layers=num_layers,
                            bidirectional=bidirectional)
    h, c = jax.jit(fwd)(params, x, h_0, c_0)
    jax.block_until_ready((h, c))

    assert h.shape == (num_layers * D, batch, hidden_size)
    assert c.shape == (num_layers * D, batch, hidden_size)
    assert jnp.all(jnp.isfinite(h)) and jnp.all(jnp.isfinite(c))

    # Correctness check against a pure-JAX lax.scan reference (same precision).
    h_ref, c_ref = _encoder_ref(params, x, h_0, c_0,
                                hidden_size=hidden_size,
                                num_layers=num_layers,
                                bidirectional=bidirectional)
    assert jnp.allclose(h, h_ref, rtol=1e-2, atol=1e-2)
    assert jnp.allclose(c, c_ref, rtol=1e-2, atol=1e-2)

    print("KERNEL_OK")
</pallas_src>

<mosaic_0001>
module attributes {stable_mosaic.version = 11 : i64} {
  func.func @_lstm_chunk_kernel(%arg0: i32, %arg1: memref<8x2x128xbf16, #tpu.memory_space<vmem>>, %arg2: memref<8x2x128xbf16, #tpu.memory_space<vmem>>, %arg3: memref<32x128xbf16, #tpu.memory_space<vmem>>, %arg4: memref<32x128xbf16, #tpu.memory_space<vmem>>, %arg5: memref<2x2x32xf32, #tpu.memory_space<vmem>>, %arg6: memref<2x2x32xf32, #tpu.memory_space<vmem>>, %arg7: memref<1x2x256xf32, #tpu.memory_space<vmem>>, %arg8: memref<1x2x256xf32, #tpu.memory_space<vmem>>, %arg9: memref<2x2x32xf32, #tpu.memory_space<vmem>>, %arg10: memref<2x2x32xf32, #tpu.memory_space<vmem>>, %arg11: memref<2x2x32xf32, #tpu.memory_space<vmem>>, %arg12: memref<2x2x32xf32, #tpu.memory_space<vmem>>) attributes {dimension_semantics = [#tpu.dimension_semantics<arbitrary>], iteration_bounds = array<i64: 1>, scalar_prefetch = 0 : i64, scratch_operands = 2 : i64, tpu.core_type = #tpu.core_type<tc>, window_params = [{transform_indices = @transform_0, window_bounds = array<i64: 8, 2, 128>}, {transform_indices = @transform_1, window_bounds = array<i64: 8, 2, 128>}, {pipeline_mode = #tpu.pipeline_mode<synchronous>, transform_indices = @transform_2, window_bounds = array<i64: 32, 128>}, {pipeline_mode = #tpu.pipeline_mode<synchronous>, transform_indices = @transform_3, window_bounds = array<i64: 32, 128>}, {pipeline_mode = #tpu.pipeline_mode<synchronous>, transform_indices = @transform_4, window_bounds = array<i64: 2, 2, 32>}, {pipeline_mode = #tpu.pipeline_mode<synchronous>, transform_indices = @transform_5, window_bounds = array<i64: 2, 2, 32>}, {transform_indices = @transform_6, window_bounds = array<i64: 1, 2, 256>}, {transform_indices = @transform_7, window_bounds = array<i64: 1, 2, 256>}, {pipeline_mode = #tpu.pipeline_mode<synchronous>, transform_indices = @transform_8, window_bounds = array<i64: 2, 2, 32>}, {pipeline_mode = #tpu.pipeline_mode<synchronous>, transform_indices = @transform_9, window_bounds = array<i64: 2, 2, 32>}]} {
    %c0_i32 = arith.constant 0 : i32
    %0 = arith.cmpi eq, %arg0, %c0_i32 : i32
    %1 = arith.extui %0 : i1 to i32
    %c0_i32_0 = arith.constant 0 : i32
    %2 = arith.cmpi ne, %1, %c0_i32_0 : i32
    scf.if %2 {
      %c0_175 = arith.constant 0 : index
      %c0_176 = arith.constant 0 : index
      %c0_177 = arith.constant 0 : index
      %572 = vector.load %arg5[%c0_175, %c0_176, %c0_177] : memref<2x2x32xf32, #tpu.memory_space<vmem>>, vector<2x2x32xf32>
      %c0_178 = arith.constant 0 : index
      %c0_179 = arith.constant 0 : index
      %c0_180 = arith.constant 0 : index
      %573 = vector.load %arg11[%c0_178, %c0_179, %c0_180] : memref<2x2x32xf32, #tpu.memory_space<vmem>>, vector<2x2x32xf32>
      tpu.vector_store %arg11[%c0_178, %c0_179, %c0_180], %572 {strides = array<i32>} : memref<2x2x32xf32, #tpu.memory_space<vmem>>, vector<2x2x32xf32>,
      %c0_181 = arith.constant 0 : index
      %c0_182 = arith.constant 0 : index
      %c0_183 = arith.constant 0 : index
      %574 = vector.load %arg6[%c0_181, %c0_182, %c0_183] : memref<2x2x32xf32, #tpu.memory_space<vmem>>, vector<2x2x32xf32>
      %c0_184 = arith.constant 0 : index
      %c0_185 = arith.constant 0 : index
      %c0_186 = arith.constant 0 : index
      %575 = vector.load %arg12[%c0_184, %c0_185, %c0_186] : memref<2x2x32xf32, #tpu.memory_space<vmem>>, vector<2x2x32xf32>
      tpu.vector_store %arg12[%c0_184, %c0_185, %c0_186], %574 {strides = array<i32>} : memref<2x2x32xf32, #tpu.memory_space<vmem>>, vector<2x2x32xf32>,
    } else {
    }
    %c0 = arith.constant 0 : index
    %c0_1 = arith.constant 0 : index
    %c0_2 = arith.constant 0 : index
    %3 = vector.load %arg11[%c0, %c0_1, %c0_2] : memref<2x2x32xf32, #tpu.memory_space<vmem>>, vector<1x2x32xf32>
    %4 = vector.shape_cast %3 : vector<1x2x32xf32> to vector<2x32xf32>
    %c1 = arith.constant 1 : index
    %c0_3 = arith.constant 0 : index
    %c0_4 = arith.constant 0 : index
    %5 = vector.load %arg11[%c1, %c0_3, %c0_4] : memref<2x2x32xf32, #tpu.memory_space<vmem>>, vector<1x2x32xf32>
    %6 = vector.shape_cast %5 : vector<1x2x32xf32> to vector<2x32xf32>
    %c0_5 = arith.constant 0 : index
    %c0_6 = arith.constant 0 : index
    %c0_7 = arith.constant 0 : index
    %7 = vector.load %arg12[%c0_5, %c0_6, %c0_7] : memref<2x2x32xf32, #tpu.memory_space<vmem>>, vector<1x2x32xf32>
    %8 = vector.shape_cast %7 : vector<1x2x32xf32> to vector<2x32xf32>
    %c1_8 = arith.constant 1 : index
    %c0_9 = arith.constant 0 : index
    %c0_10 = arith.constant 0 : index
    %9 = vector.load %arg12[%c1_8, %c0_9, %c0_10] : memref<2x2x32xf32, #tpu.memory_space<vmem>>, vector<1x2x32xf32>
    %10 = vector.shape_cast %9 : vector<1x2x32xf32> to vector<2x32xf32>
    %c0_11 = arith.constant 0 : index
    %c0_12 = arith.constant 0 : index
    %11 = vector.load %arg3[%c0_11, %c0_12] : memref<32x128xbf16, #tpu.memory_space<vmem>>, vector<32x128xbf16>
    %c0_13 = arith.constant 0 : index
    %c0_14 = arith.constant 0 : index
    %12 = vector.load %arg4[%c0_13, %c0_14] : memref<32x128xbf16, #tpu.memory_space<vmem>>, vector<32x128xbf16>
    %c0_15 = arith.constant 0 : index
    %c0_16 = arith.constant 0 : index
    %c0_17 = arith.constant 0 : index
    %13 = vector.load %arg1[%c0_15, %c0_16, %c0_17] : memref<8x2x128xbf16, #tpu.memory_space<vmem>>, vector<1x2x128xbf16>
    %14 = vector.shape_cast %13 : vector<1x2x128xbf16> to vector<2x128xbf16>
    %15 = arith.extf %14 : vector<2x128xbf16> to vector<2x128xf32>
    %16 = arith.truncf %4 : vector<2x32xf32> to vector<2x32xbf16>
    %cst = arith.constant dense<0.000000e+00> : vector<2x128xf32>
    %17 = tpu.matmul %16, %11, %cst {dimension_numbers = #tpu.dot_dimension_numbers<[1], [0], [0], [1], [0, 0, 1, 1], [], []>} : vector<2x32xbf16>, vector<32x128xbf16>, vector<2x128xf32> -> vector<2x128xf32>
    %18 = arith.addf %15, %17 : vector<2x128xf32>
    %19 = vector.extract_strided_slice %18 {offsets = [0, 0], sizes = [2, 32], strides = [1, 1]} : vector<2x128xf32> to vector<2x32xf32>
    %20 = arith.negf %19 : vector<2x32xf32>
    %21 = math.exp %20 : vector<2x32xf32>
    %cst_18 = arith.constant 1.000000e+00 : f32
    %22 = vector.broadcast %cst_18 : f32 to vector<2x32xf32>
    %23 = arith.addf %22, %21 : vector<2x32xf32>
    %24 = arith.divf %22, %23 : vector<2x32xf32>
    %25 = vector.extract_strided_slice %18 {offsets = [0, 32], sizes = [2, 32], strides = [1, 1]} : vector<2x128xf32> to vector<2x32xf32>
    %26 = arith.negf %25 : vector<2x32xf32>
    %27 = math.exp %26 : vector<2x32xf32>
    %cst_19 = arith.constant 1.000000e+00 : f32
    %28 = vector.broadcast %cst_19 : f32 to vector<2x32xf32>
    %29 = arith.addf %28, %27 : vector<2x32xf32>
    %30 = arith.divf %28, %29 : vector<2x32xf32>
    %31 = vector.extract_strided_slice %18 {offsets = [0, 64], sizes = [2, 32], strides = [1, 1]} : vector<2x128xf32> to vector<2x32xf32>
    %32 = math.tanh %31 : vector<2x32xf32>
    %33 = vector.extract_strided_slice %18 {offsets = [0, 96], sizes = [2, 32], strides = [1, 1]} : vector<2x128xf32> to vector<2x32xf32>
    %34 = arith.negf %33 : vector<2x32xf32>
    %35 = math.exp %34 : vector<2x32xf32>
    %cst_20 = arith.constant 1.000000e+00 : f32
    %36 = vector.broadcast %cst_20 : f32 to vector<2x32xf32>
    %37 = arith.addf %36, %35 : vector<2x32xf32>
    %38 = arith.divf %36, %37 : vector<2x32xf32>
    %39 = arith.mulf %30, %8 : vector<2x32xf32>
    %40 = arith.mulf %24, %32 : vector<2x32xf32>
    %41 = arith.addf %39, %40 : vector<2x32xf32>
    %42 = math.tanh %41 : vector<2x32xf32>
    %43 = arith.mulf %38, %42 : vector<2x32xf32>
    %c0_21 = arith.constant 0 : index
    %c0_22 = arith.constant 0 : index
    %c0_23 = arith.constant 0 : index
    %44 = vector.load %arg7[%c0_21, %c0_22, %c0_23] : memref<1x2x256xf32, #tpu.memory_space<vmem>>, vector<1x2x32xf32>
    %45 = vector.shape_cast %44 : vector<1x2x32xf32> to vector<2x32xf32>
    %46 = vector.shape_cast %43 : vector<2x32xf32> to vector<1x2x32xf32>
    tpu.vector_store %arg7[%c0_21, %c0_22, %c0_23], %46 {strides = array<i32>} : memref<1x2x256xf32, #tpu.memory_space<vmem>>, vector<1x2x32xf32>,
    %c7 = arith.constant 7 : index
    %c0_24 = arith.constant 0 : index
    %c0_25 = arith.constant 0 : index
    %47 = vector.load %arg2[%c7, %c0_24, %c0_25] : memref<8x2x128xbf16, #tpu.memory_space<vmem>>, vector<1x2x128xbf16>
    %48 = vector.shape_cast %47 : vector<1x2x128xbf16> to vector<2x128xbf16>
    %49 = arith.extf %48 : vector<2x128xbf16> to vector<2x128xf32>
    %50 = arith.truncf %6 : vector<2x32xf32> to vector<2x32xbf16>
    %cst_26 = arith.constant dense<0.000000e+00> : vector<2x128xf32>
    %51 = tpu.matmul %50, %12, %cst_26 {dimension_numbers = #tpu.dot_dimension_numbers<[1], [0], [0], [1], [0, 0, 1, 1], [], []>} : vector<2x32xbf16>, vector<32x128xbf16>, vector<2x128xf32> -> vector<2x128xf32>
    %52 = arith.addf %49, %51 : vector<2x128xf32>
    %53 = vector.extract_strided_slice %52 {offsets = [0, 0], sizes = [2, 32], strides = [1, 1]} : vector<2x128xf32> to vector<2x32xf32>
    %54 = arith.negf %53 : vector<2x32xf32>
    %55 = math.exp %54 : vector<2x32xf32>
    %cst_27 = arith.constant 1.000000e+00 : f32
    %56 = vector.broadcast %cst_27 : f32 to vector<2x32xf32>
    %57 = arith.addf %56, %55 : vector<2x32xf32>
    %58 = arith.divf %56, %57 : vector<2x32xf32>
    %59 = vector.extract_strided_slice %52 {offsets = [0, 32], sizes = [2, 32], strides = [1, 1]} : vector<2x128xf32> to vector<2x32xf32>
    %60 = arith.negf %59 : vector<2x32xf32>
    %61 = math.exp %60 : vector<2x32xf32>
    %cst_28 = arith.constant 1.000000e+00 : f32
    %62 = vector.broadcast %cst_28 : f32 to vector<2x32xf32>
    %63 = arith.addf %62, %61 : vector<2x32xf32>
    %64 = arith.divf %62, %63 : vector<2x32xf32>
    %65 = vector.extract_strided_slice %52 {offsets = [0, 64], sizes = [2, 32], strides = [1, 1]} : vector<2x128xf32> to vector<2x32xf32>
    %66 = math.tanh %65 : vector<2x32xf32>
    %67 = vector.extract_strided_slice %52 {offsets = [0, 96], sizes = [2, 32], strides = [1, 1]} : vector<2x128xf32> to vector<2x32xf32>
    %68 = arith.negf %67 : vector<2x32xf32>
    %69 = math.exp %68 : vector<2x32xf32>
    %cst_29 = arith.constant 1.000000e+00 : f32
    %70 = vector.broadcast %cst_29 : f32 to vector<2x32xf32>
    %71 = arith.addf %70, %69 : vector<2x32xf32>
    %72 = arith.divf %70, %71 : vector<2x32xf32>
    %73 = arith.mulf %64, %10 : vector<2x32xf32>
    %74 = arith.mulf %58, %66 : vector<2x32xf32>
    %75 = arith.addf %73, %74 : vector<2x32xf32>
    %76 = math.tanh %75 : vector<2x32xf32>
    %77 = arith.mulf %72, %76 : vector<2x32xf32>
    %c0_30 = arith.constant 0 : index
    %c0_31 = arith.constant 0 : index
    %c224 = arith.constant 224 : index
    %78 = vector.load %arg8[%c0_30, %c0_31, %c224] : memref<1x2x256xf32, #tpu.memory_space<vmem>>, vector<1x2x32xf32>
    %79 = vector.shape_cast %78 : vector<1x2x32xf32> to vector<2x32xf32>
    %80 = vector.shape_cast %77 : vector<2x32xf32> to vector<1x2x32xf32>
    tpu.vector_store %arg8[%c0_30, %c0_31, %c224], %80 {strides = array<i32>} : memref<1x2x256xf32, #tpu.memory_space<vmem>>, vector<1x2x32xf32>,
    %c1_32 = arith.constant 1 : index
    %c0_33 = arith.constant 0 : index
    %c0_34 = arith.constant 0 : index
    %81 = vector.load %arg1[%c1_32, %c0_33, %c0_34] : memref<8x2x128xbf16, #tpu.memory_space<vmem>>, vector<1x2x128xbf16>
    %82 = vector.shape_cast %81 : vector<1x2x128xbf16> to vector<2x128xbf16>
    %83 = arith.extf %82 : vector<2x128xbf16> to vector<2x128xf32>
    %84 = arith.truncf %43 : vector<2x32xf32> to vector<2x32xbf16>
    %cst_35 = arith.constant dense<0.000000e+00> : vector<2x128xf32>
    %85 = tpu.matmul %84, %11, %cst_35 {dimension_numbers = #tpu.dot_dimension_numbers<[1], [0], [0], [1], [0, 0, 1, 1], [], []>} : vector<2x32xbf16>, vector<32x128xbf16>, vector<2x128xf32> -> vector<2x128xf32>
    %86 = arith.addf %83, %85 : vector<2x128xf32>
    %87 = vector.extract_strided_slice %86 {offsets = [0, 0], sizes = [2, 32], strides = [1, 1]} : vector<2x128xf32> to vector<2x32xf32>
    %88 = arith.negf %87 : vector<2x32xf32>
    %89 = math.exp %88 : vector<2x32xf32>
    %cst_36 = arith.constant 1.000000e+00 : f32
    %90 = vector.broadcast %cst_36 : f32 to vector<2x32xf32>
    %91 = arith.addf %90, %89 : vector<2x32xf32>
    %92 = arith.divf %90, %91 : vector<2x32xf32>
    %93 = vector.extract_strided_slice %86 {offsets = [0, 32], sizes = [2, 32], strides = [1, 1]} : vector<2x128xf32> to vector<2x32xf32>
    %94 = arith.negf %93 : vector<2x32xf32>
    %95 = math.exp %94 : vector<2x32xf32>
    %cst_37 = arith.constant 1.000000e+00 : f32
    %96 = vector.broadcast %cst_37 : f32 to vector<2x32xf32>
    %97 = arith.addf %96, %95 : vector<2x32xf32>
    %98 = arith.divf %96, %97 : vector<2x32xf32>
    %99 = vector.extract_strided_slice %86 {offsets = [0, 64], sizes = [2, 32], strides = [1, 1]} : vector<2x128xf32> to vector<2x32xf32>
    %100 = math.tanh %99 : vector<2x32xf32>
    %101 = vector.extract_strided_slice %86 {offsets = [0, 96], sizes = [2, 32], strides = [1, 1]} : vector<2x128xf32> to vector<2x32xf32>
    %102 = arith.negf %101 : vector<2x32xf32>
    %103 = math.exp %102 : vector<2x32xf32>
    %cst_38 = arith.constant 1.000000e+00 : f32
    %104 = vector.broadcast %cst_38 : f32 to vector<2x32xf32>
    %105 = arith.addf %104, %103 : vector<2x32xf32>
    %106 = arith.divf %104, %105 : vector<2x32xf32>
    %107 = arith.mulf %98, %41 : vector<2x32xf32>
    %108 = arith.mulf %92, %100 : vector<2x32xf32>
    %109 = arith.addf %107, %108 : vector<2x32xf32>
    %110 = math.tanh %109 : vector<2x32xf32>
    %111 = arith.mulf %106, %110 : vector<2x32xf32>
    %c0_39 = arith.constant 0 : index
    %c0_40 = arith.constant 0 : index
    %c32 = arith.constant 32 : index
    %112 = vector.load %arg7[%c0_39, %c0_40, %c32] : memref<1x2x256xf32, #tpu.memory_space<vmem>>, vector<1x2x32xf32>
    %113 = vector.shape_cast %112 : vector<1x2x32xf32> to vector<2x32xf32>
    %114 = vector.shape_cast %111 : vector<2x32xf32> to vector<1x2x32xf32>
    tpu.vector_store %arg7[%c0_39, %c0_40, %c32], %114 {strides = array<i32>} : memref<1x2x256xf32, #tpu.memory_space<vmem>>, vector<1x2x32xf32>,
    %c6 = arith.constant 6 : index
    %c0_41 = arith.constant 0 : index
    %c0_42 = arith.constant 0 : index
    %115 = vector.load %arg2[%c6, %c0_41, %c0_42] : memref<8x2x128xbf16, #tpu.memory_space<vmem>>, vector<1x2x128xbf16>
    %116 = vector.shape_cast %115 : vector<1x2x128xbf16> to vector<2x128xbf16>
    %117 = arith.extf %116 : vector<2x128xbf16> to vector<2x128xf32>
    %118 = arith.truncf %77 : vector<2x32xf32> to vector<2x32xbf16>
    %cst_43 = arith.constant dense<0.000000e+00> : vector<2x128xf32>
    %119 = tpu.matmul %118, %12, %cst_43 {dimension_numbers = #tpu.dot_dimension_numbers<[1], [0], [0], [1], [0, 0, 1, 1], [], []>} : vector<2x32xbf16>, vector<32x128xbf16>, vector<2x128xf32> -> vector<2x128xf32>
    %120 = arith.addf %117, %119 : vector<2x128xf32>
    %121 = vector.extract_strided_slice %120 {offsets = [0, 0], sizes = [2, 32], strides = [1, 1]} : vector<2x128xf32> to vector<2x32xf32>
    %122 = arith.negf %121 : vector<2x32xf32>
    %123 = math.exp %122 : vector<2x32xf32>
    %cst_44 = arith.constant 1.000000e+00 : f32
    %124 = vector.broadcast %cst_44 : f32 to vector<2x32xf32>
    %125 = arith.addf %124, %123 : vector<2x32xf32>
    %126 = arith.divf %124, %125 : vector<2x32xf32>
    %127 = vector.extract_strided_slice %120 {offsets = [0, 32], sizes = [2, 32], strides = [1, 1]} : vector<2x128xf32> to vector<2x32xf32>
    %128 = arith.negf %127 : vector<2x32xf32>
    %129 = math.exp %128 : vector<2x32xf32>
    %cst_45 = arith.constant 1.000000e+00 : f32
    %130 = vector.broadcast %cst_45 : f32 to vector<2x32xf32>
    %131 = arith.addf %130, %129 : vector<2x32xf32>
    %132 = arith.divf %130, %131 : vector<2x32xf32>
    %133 = vector.extract_strided_slice %120 {offsets = [0, 64], sizes = [2, 32], strides = [1, 1]} : vector<2x128xf32> to vector<2x32xf32>
    %134 = math.tanh %133 : vector<2x32xf32>
    %135 = vector.extract_strided_slice %120 {offsets = [0, 96], sizes = [2, 32], strides = [1, 1]} : vector<2x128xf32> to vector<2x32xf32>
    %136 = arith.negf %135 : vector<2x32xf32>
    %137 = math.exp %136 : vector<2x32xf32>
    %cst_46 = arith.constant 1.000000e+00 : f32
    %138 = vector.broadcast %cst_46 : f32 to vector<2x32xf32>
    %139 = arith.addf %138, %137 : vector<2x32xf32>
    %140 = arith.divf %138, %139 : vector<2x32xf32>
    %141 = arith.mulf %132, %75 : vector<2x32xf32>
    %142 = arith.mulf %126, %134 : vector<2x32xf32>
    %143 = arith.addf %141, %142 : vector<2x32xf32>
    %144 = math.tanh %143 : vector<2x32xf32>
    %145 = arith.mulf %140, %144 : vector<2x32xf32>
    %c0_47 = arith.constant 0 : index
    %c0_48 = arith.constant 0 : index
    %c192 = arith.constant 192 : index
    %146 = vector.load %arg8[%c0_47, %c0_48, %c192] : memref<1x2x256xf32, #tpu.memory_space<vmem>>, vector<1x2x32xf32>
    %147 = vector.shape_cast %146 : vector<1x2x32xf32> to vector<2x32xf32>
    %148 = vector.shape_cast %145 : vector<2x32xf32> to vector<1x2x32xf32>
    tpu.vector_store %arg8[%c0_47, %c0_48, %c192], %148 {strides = array<i32>} : memref<1x2x256xf32, #tpu.memory_space<vmem>>, vector<1x2x32xf32>,
    %c2 = arith.constant 2 : index
    %c0_49 = arith.constant 0 : index
    %c0_50 = arith.constant 0 : index
    %149 = vector.load %arg1[%c2, %c0_49, %c0_50] : memref<8x2x128xbf16, #tpu.memory_space<vmem>>, vector<1x2x128xbf16>
    %150 = vector.shape_cast %149 : vector<1x2x128xbf16> to vector<2x128xbf16>
    %151 = arith.extf %150 : vector<2x128xbf16> to vector<2x128xf32>
    %152 = arith.truncf %111 : vector<2x32xf32> to vector<2x32xbf16>
    %cst_51 = arith.constant dense<0.000000e+00> : vector<2x128xf32>
    %153 = tpu.matmul %152, %11, %cst_51 {dimension_numbers = #tpu.dot_dimension_numbers<[1], [0], [0], [1], [0, 0, 1, 1], [], []>} : vector<2x32xbf16>, vector<32x128xbf16>, vector<2x128xf32> -> vector<2x128xf32>
    %154 = arith.addf %151, %153 : vector<2x128xf32>
    %155 = vector.extract_strided_slice %154 {offsets = [0, 0], sizes = [2, 32], strides = [1, 1]} : vector<2x128xf32> to vector<2x32xf32>
    %156 = arith.negf %155 : vector<2x32xf32>
    %157 = math.exp %156 : vector<2x32xf32>
    %cst_52 = arith.constant 1.000000e+00 : f32
    %158 = vector.broadcast %cst_52 : f32 to vector<2x32xf32>
    %159 = arith.addf %158, %157 : vector<2x32xf32>
    %160 = arith.divf %158, %159 : vector<2x32xf32>
    %161 = vector.extract_strided_slice %154 {offsets = [0, 32], sizes = [2, 32], strides = [1, 1]} : vector<2x128xf32> to vector<2x32xf32>
    %162 = arith.negf %161 : vector<2x32xf32>
    %163 = math.exp %162 : vector<2x32xf32>
    %cst_53 = arith.constant 1.000000e+00 : f32
    %164 = vector.broadcast %cst_53 : f32 to vector<2x32xf32>
    %165 = arith.addf %164, %163 : vector<2x32xf32>
    %166 = arith.divf %164, %165 : vector<2x32xf32>
    %167 = vector.extract_strided_slice %154 {offsets = [0, 64], sizes = [2, 32], strides = [1, 1]} : vector<2x128xf32> to vector<2x32xf32>
    %168 = math.tanh %167 : vector<2x32xf32>
    %169 = vector.extract_strided_slice %154 {offsets = [0, 96], sizes = [2, 32], strides = [1, 1]} : vector<2x128xf32> to vector<2x32xf32>
    %170 = arith.negf %169 : vector<2x32xf32>
    %171 = math.exp %170 : vector<2x32xf32>
    %cst_54 = arith.constant 1.000000e+00 : f32
    %172 = vector.broadcast %cst_54 : f32 to vector<2x32xf32>
    %173 = arith.addf %172, %171 : vector<2x32xf32>
    %174 = arith.divf %172, %173 : vector<2x32xf32>
    %175 = arith.mulf %166, %109 : vector<2x32xf32>
    %176 = arith.mulf %160, %168 : vector<2x32xf32>
    %177 = arith.addf %175, %176 : vector<2x32xf32>
    %178 = math.tanh %177 : vector<2x32xf32>
    %179 = arith.mulf %174, %178 : vector<2x32xf32>
    %c0_55 = arith.constant 0 : index
    %c0_56 = arith.constant 0 : index
    %c64 = arith.constant 64 : index
    %180 = vector.load %arg7[%c0_55, %c0_56, %c64] : memref<1x2x256xf32, #tpu.memory_space<vmem>>, vector<1x2x32xf32>
    %181 = vector.shape_cast %180 : vector<1x2x32xf32> to vector<2x32xf32>
    %182 = vector.shape_cast %179 : vector<2x32xf32> to vector<1x2x32xf32>
    tpu.vector_store %arg7[%c0_55, %c0_56, %c64], %182 {strides = array<i32>} : memref<1x2x256xf32, #tpu.memory_space<vmem>>, vector<1x2x32xf32>,
    %c5 = arith.constant 5 : index
    %c0_57 = arith.constant 0 : index
    %c0_58 = arith.constant 0 : index
    %183 = vector.load %arg2[%c5, %c0_57, %c0_58] : memref<8x2x128xbf16, #tpu.memory_space<vmem>>, vector<1x2x128xbf16>
    %184 = vector.shape_cast %183 : vector<1x2x128xbf16> to vector<2x128xbf16>
    %185 = arith.extf %184 : vector<2x128xbf16> to vector<2x128xf32>
    %186 = arith.truncf %145 : vector<2x32xf32> to vector<2x32xbf16>
    %cst_59 = arith.constant dense<0.000000e+00> : vector<2x128xf32>
    %187 = tpu.matmul %186, %12, %cst_59 {dimension_numbers = #tpu.dot_dimension_numbers<[1], [0], [0], [1], [0, 0, 1, 1], [], []>} : vector<2x32xbf16>, vector<32x128xbf16>, vector<2x128xf32> -> vector<2x128xf32>
    %188 = arith.addf %185, %187 : vector<2x128xf32>
    %189 = vector.extract_strided_slice %188 {offsets = [0, 0], sizes = [2, 32], strides = [1, 1]} : vector<2x128xf32> to vector<2x32xf32>
    %190 = arith.negf %189 : vector<2x32xf32>
    %191 = math.exp %190 : vector<2x32xf32>
    %cst_60 = arith.constant 1.000000e+00 : f32
    %192 = vector.broadcast %cst_60 : f32 to vector<2x32xf32>
    %193 = arith.addf %192, %191 : vector<2x32xf32>
    %194 = arith.divf %192, %193 : vector<2x32xf32>
    %195 = vector.extract_strided_slice %188 {offsets = [0, 32], sizes = [2, 32], strides = [1, 1]} : vector<2x128xf32> to vector<2x32xf32>
    %196 = arith.negf %195 : vector<2x32xf32>
    %197 = math.exp %196 : vector<2x32xf32>
    %cst_61 = arith.constant 1.000000e+00 : f32
    %198 = vector.broadcast %cst_61 : f32 to vector<2x32xf32>
    %199 = arith.addf %198, %197 : vector<2x32xf32>
    %200 = arith.divf %198, %199 : vector<2x32xf32>
    %201 = vector.extract_strided_slice %188 {offsets = [0, 64], sizes = [2, 32], strides = [1, 1]} : vector<2x128xf32> to vector<2x32xf32>
    %202 = math.tanh %201 : vector<2x32xf32>
    %203 = vector.extract_strided_slice %188 {offsets = [0, 96], sizes = [2, 32], strides = [1, 1]} : vector<2x128xf32> to vector<2x32xf32>
    %204 = arith.negf %203 : vector<2x32xf32>
    %205 = math.exp %204 : vector<2x32xf32>
    %cst_62 = arith.constant 1.000000e+00 : f32
    %206 = vector.broadcast %cst_62 : f32 to vector<2x32xf32>
    %207 = arith.addf %206, %205 : vector<2x32xf32>
    %208 = arith.divf %206, %207 : vector<2x32xf32>
    %209 = arith.mulf %200, %143 : vector<2x32xf32>
    %210 = arith.mulf %194, %202 : vector<2x32xf32>
    %211 = arith.addf %209, %210 : vector<2x32xf32>
    %212 = math.tanh %211 : vector<2x32xf32>
    %213 = arith.mulf %208, %212 : vector<2x32xf32>
    %c0_63 = arith.constant 0 : index
    %c0_64 = arith.constant 0 : index
    %c160 = arith.constant 160 : index
    %214 = vector.load %arg8[%c0_63, %c0_64, %c160] : memref<1x2x256xf32, #tpu.memory_space<vmem>>, vector<1x2x32xf32>
    %215 = vector.shape_cast %214 : vector<1x2x32xf32> to vector<2x32xf32>
    %216 = vector.shape_cast %213 : vector<2x32xf32> to vector<1x2x32xf32>
    tpu.vector_store %arg8[%c0_63, %c0_64, %c160], %216 {strides = array<i32>} : memref<1x2x256xf32, #tpu.memory_space<vmem>>, vector<1x2x32xf32>,
    %c3 = arith.constant 3 : index
    %c0_65 = arith.constant 0 : index
    %c0_66 = arith.constant 0 : index
    %217 = vector.load %arg1[%c3, %c0_65, %c0_66] : memref<8x2x128xbf16, #tpu.memory_space<vmem>>, vector<1x2x128xbf16>
    %218 = vector.shape_cast %217 : vector<1x2x128xbf16> to vector<2x128xbf16>
    %219 = arith.extf %218 : vector<2x128xbf16> to vector<2x128xf32>
    %220 = arith.truncf %179 : vector<2x32xf32> to vector<2x32xbf16>
    %cst_67 = arith.constant dense<0.000000e+00> : vector<2x128xf32>
    %221 = tpu.matmul %220, %11, %cst_67 {dimension_numbers = #tpu.dot_dimension_numbers<[1], [0], [0], [1], [0, 0, 1, 1], [], []>} : vector<2x32xbf16>, vector<32x128xbf16>, vector<2x128xf32> -> vector<2x128xf32>
    %222 = arith.addf %219, %221 : vector<2x128xf32>
    %223 = vector.extract_strided_slice %222 {offsets = [0, 0], sizes = [2, 32], strides = [1, 1]} : vector<2x128xf32> to vector<2x32xf32>
    %224 = arith.negf %223 : vector<2x32xf32>
    %225 = math.exp %224 : vector<2x32xf32>
    %cst_68 = arith.constant 1.000000e+00 : f32
    %226 = vector.broadcast %cst_68 : f32 to vector<2x32xf32>
    %227 = arith.addf %226, %225 : vector<2x32xf32>
    %228 = arith.divf %226, %227 : vector<2x32xf32>
    %229 = vector.extract_strided_slice %222 {offsets = [0, 32], sizes = [2, 32], strides = [1, 1]} : vector<2x128xf32> to vector<2x32xf32>
    %230 = arith.negf %229 : vector<2x32xf32>
    %231 = math.exp %230 : vector<2x32xf32>
    %cst_69 = arith.constant 1.000000e+00 : f32
    %232 = vector.broadcast %cst_69 : f32 to vector<2x32xf32>
    %233 = arith.addf %232, %231 : vector<2x32xf32>
    %234 = arith.divf %232, %233 : vector<2x32xf32>
    %235 = vector.extract_strided_slice %222 {offsets = [0, 64], sizes = [2, 32], strides = [1, 1]} : vector<2x128xf32> to vector<2x32xf32>
    %236 = math.tanh %235 : vector<2x32xf32>
    %237 = vector.extract_strided_slice %222 {offsets = [0, 96], sizes = [2, 32], strides = [1, 1]} : vector<2x128xf32> to vector<2x32xf32>
    %238 = arith.negf %237 : vector<2x32xf32>
    %239 = math.exp %238 : vector<2x32xf32>
    %cst_70 = arith.constant 1.000000e+00 : f32
    %240 = vector.broadcast %cst_70 : f32 to vector<2x32xf32>
    %241 = arith.addf %240, %239 : vector<2x32xf32>
    %242 = arith.divf %240, %241 : vector<2x32xf32>
    %243 = arith.mulf %234, %177 : vector<2x32xf32>
    %244 = arith.mulf %228, %236 : vector<2x32xf32>
    %245 = arith.addf %243, %244 : vector<2x32xf32>
    %246 = math.tanh %245 : vector<2x32xf32>
    %247 = arith.mulf %242, %246 : vector<2x32xf32>
    %c0_71 = arith.constant 0 : index
    %c0_72 = arith.constant 0 : index
    %c96 = arith.constant 96 : index
    %248 = vector.load %arg7[%c0_71, %c0_72, %c96] : memref<1x2x256xf32, #tpu.memory_space<vmem>>, vector<1x2x32xf32>
    %249 = vector.shape_cast %248 : vector<1x2x32xf32> to vector<2x32xf32>
    %250 = vector.shape_cast %247 : vector<2x32xf32> to vector<1x2x32xf32>
    tpu.vector_store %arg7[%c0_71, %c0_72, %c96], %250 {strides = array<i32>} : memref<1x2x256xf32, #tpu.memory_space<vmem>>, vector<1x2x32xf32>,
    %c4 = arith.constant 4 : index
    %c0_73 = arith.constant 0 : index
    %c0_74 = arith.constant 0 : index
    %251 = vector.load %arg2[%c4, %c0_73, %c0_74] : memref<8x2x128xbf16, #tpu.memory_space<vmem>>, vector<1x2x128xbf16>
    %252 = vector.shape_cast %251 : vector<1x2x128xbf16> to vector<2x128xbf16>
    %253 = arith.extf %252 : vector<2x128xbf16> to vector<2x128xf32>
    %254 = arith.truncf %213 : vector<2x32xf32> to vector<2x32xbf16>
    %cst_75 = arith.constant dense<0.000000e+00> : vector<2x128xf32>
    %255 = tpu.matmul %254, %12, %cst_75 {dimension_numbers = #tpu.dot_dimension_numbers<[1], [0], [0], [1], [0, 0, 1, 1], [], []>} : vector<2x32xbf16>, vector<32x128xbf16>, vector<2x128xf32> -> vector<2x128xf32>
    %256 = arith.addf %253, %255 : vector<2x128xf32>
    %257 = vector.extract_strided_slice %256 {offsets = [0, 0], sizes = [2, 32], strides = [1, 1]} : vector<2x128xf32> to vector<2x32xf32>
    %258 = arith.negf %257 : vector<2x32xf32>
    %259 = math.exp %258 : vector<2x32xf32>
    %cst_76 = arith.constant 1.000000e+00 : f32
    %260 = vector.broadcast %cst_76 : f32 to vector<2x32xf32>
    %261 = arith.addf %260, %259 : vector<2x32xf32>
    %262 = arith.divf %260, %261 : vector<2x32xf32>
    %263 = vector.extract_strided_slice %256 {offsets = [0, 32], sizes = [2, 32], strides = [1, 1]} : vector<2x128xf32> to vector<2x32xf32>
    %264 = arith.negf %263 : vector<2x32xf32>
    %265 = math.exp %264 : vector<2x32xf32>
    %cst_77 = arith.constant 1.000000e+00 : f32
    %266 = vector.broadcast %cst_77 : f32 to vector<2x32xf32>
    %267 = arith.addf %266, %265 : vector<2x32xf32>
    %268 = arith.divf %266, %267 : vector<2x32xf32>
    %269 = vector.extract_strided_slice %256 {offsets = [0, 64], sizes = [2, 32], strides = [1, 1]} : vector<2x128xf32> to vector<2x32xf32>
    %270 = math.tanh %269 : vector<2x32xf32>
    %271 = vector.extract_strided_slice %256 {offsets = [0, 96], sizes = [2, 32], strides = [1, 1]} : vector<2x128xf32> to vector<2x32xf32>
    %272 = arith.negf %271 : vector<2x32xf32>
    %273 = math.exp %272 : vector<2x32xf32>
    %cst_78 = arith.constant 1.000000e+00 : f32
    %274 = vector.broadcast %cst_78 : f32 to vector<2x32xf32>
    %275 = arith.addf %274, %273 : vector<2x32xf32>
    %276 = arith.divf %274, %275 : vector<2x32xf32>
    %277 = arith.mulf %268, %211 : vector<2x32xf32>
    %278 = arith.mulf %262, %270 : vector<2x32xf32>
    %279 = arith.addf %277, %278 : vector<2x32xf32>
    %280 = math.tanh %279 : vector<2x32xf32>
    %281 = arith.mulf %276, %280 : vector<2x32xf32>
    %c0_79 = arith.constant 0 : index
    %c0_80 = arith.constant 0 : index
    %c128 = arith.constant 128 : index
    %282 = vector.load %arg8[%c0_79, %c0_80, %c128] : memref<1x2x256xf32, #tpu.memory_space<vmem>>, vector<1x2x32xf32>
    %283 = vector.shape_cast %282 : vector<1x2x32xf32> to vector<2x32xf32>
    %284 = vector.shape_cast %281 : vector<2x32xf32> to vector<1x2x32xf32>
    tpu.vector_store %arg8[%c0_79, %c0_80, %c128], %284 {strides = array<i32>} : memref<1x2x256xf32, #tpu.memory_space<vmem>>, vector<1x2x32xf32>,
    %c4_81 = arith.constant 4 : index
    %c0_82 = arith.constant 0 : index
    %c0_83 = arith.constant 0 : index
    %285 = vector.load %arg1[%c4_81, %c0_82, %c0_83] : memref<8x2x128xbf16, #tpu.memory_space<vmem>>, vector<1x2x128xbf16>
    %286 = vector.shape_cast %285 : vector<1x2x128xbf16> to vector<2x128xbf16>
    %287 = arith.extf %286 : vector<2x128xbf16> to vector<2x128xf32>
    %288 = arith.truncf %247 : vector<2x32xf32> to vector<2x32xbf16>
    %cst_84 = arith.constant dense<0.000000e+00> : vector<2x128xf32>
    %289 = tpu.matmul %288, %11, %cst_84 {dimension_numbers = #tpu.dot_dimension_numbers<[1], [0], [0], [1], [0, 0, 1, 1], [], []>} : vector<2x32xbf16>, vector<32x128xbf16>, vector<2x128xf32> -> vector<2x128xf32>
    %290 = arith.addf %287, %289 : vector<2x128xf32>
    %291 = vector.extract_strided_slice %290 {offsets = [0, 0], sizes = [2, 32], strides = [1, 1]} : vector<2x128xf32> to vector<2x32xf32>
    %292 = arith.negf %291 : vector<2x32xf32>
    %293 = math.exp %292 : vector<2x32xf32>
    %cst_85 = arith.constant 1.000000e+00 : f32
    %294 = vector.broadcast %cst_85 : f32 to vector<2x32xf32>
    %295 = arith.addf %294, %293 : vector<2x32xf32>
    %296 = arith.divf %294, %295 : vector<2x32xf32>
    %297 = vector.extract_strided_slice %290 {offsets = [0, 32], sizes = [2, 32], strides = [1, 1]} : vector<2x128xf32> to vector<2x32xf32>
    %298 = arith.negf %297 : vector<2x32xf32>
    %299 = math.exp %298 : vector<2x32xf32>
    %cst_86 = arith.constant 1.000000e+00 : f32
    %300 = vector.broadcast %cst_86 : f32 to vector<2x32xf32>
    %301 = arith.addf %300, %299 : vector<2x32xf32>
    %302 = arith.divf %300, %301 : vector<2x32xf32>
    %303 = vector.extract_strided_slice %290 {offsets = [0, 64], sizes = [2, 32], strides = [1, 1]} : vector<2x128xf32> to vector<2x32xf32>
    %304 = math.tanh %303 : vector<2x32xf32>
    %305 = vector.extract_strided_slice %290 {offsets = [0, 96], sizes = [2, 32], strides = [1, 1]} : vector<2x128xf32> to vector<2x32xf32>
    %306 = arith.negf %305 : vector<2x32xf32>
    %307 = math.exp %306 : vector<2x32xf32>
    %cst_87 = arith.constant 1.000000e+00 : f32
    %308 = vector.broadcast %cst_87 : f32 to vector<2x32xf32>
    %309 = arith.addf %308, %307 : vector<2x32xf32>
    %310 = arith.divf %308, %309 : vector<2x32xf32>
    %311 = arith.mulf %302, %245 : vector<2x32xf32>
    %312 = arith.mulf %296, %304 : vector<2x32xf32>
    %313 = arith.addf %311, %312 : vector<2x32xf32>
    %314 = math.tanh %313 : vector<2x32xf32>
    %315 = arith.mulf %310, %314 : vector<2x32xf32>
    %c0_88 = arith.constant 0 : index
    %c0_89 = arith.constant 0 : index
    %c128_90 = arith.constant 128 : index
    %316 = vector.load %arg7[%c0_88, %c0_89, %c128_90] : memref<1x2x256xf32, #tpu.memory_space<vmem>>, vector<1x2x32xf32>
    %317 = vector.shape_cast %316 : vector<1x2x32xf32> to vector<2x32xf32>
    %318 = vector.shape_cast %315 : vector<2x32xf32> to vector<1x2x32xf32>
    tpu.vector_store %arg7[%c0_88, %c0_89, %c128_90], %318 {strides = array<i32>} : memref<1x2x256xf32, #tpu.memory_space<vmem>>, vector<1x2x32xf32>,
    %c3_91 = arith.constant 3 : index
    %c0_92 = arith.constant 0 : index
    %c0_93 = arith.constant 0 : index
    %319 = vector.load %arg2[%c3_91, %c0_92, %c0_93] : memref<8x2x128xbf16, #tpu.memory_space<vmem>>, vector<1x2x128xbf16>
    %320 = vector.shape_cast %319 : vector<1x2x128xbf16> to vector<2x128xbf16>
    %321 = arith.extf %320 : vector<2x128xbf16> to vector<2x128xf32>
    %322 = arith.truncf %281 : vector<2x32xf32> to vector<2x32xbf16>
    %cst_94 = arith.constant dense<0.000000e+00> : vector<2x128xf32>
    %323 = tpu.matmul %322, %12, %cst_94 {dimension_numbers = #tpu.dot_dimension_numbers<[1], [0], [0], [1], [0, 0, 1, 1], [], []>} : vector<2x32xbf16>, vector<32x128xbf16>, vector<2x128xf32> -> vector<2x128xf32>
    %324 = arith.addf %321, %323 : vector<2x128xf32>
    %325 = vector.extract_strided_slice %324 {offsets = [0, 0], sizes = [2, 32], strides = [1, 1]} : vector<2x128xf32> to vector<2x32xf32>
    %326 = arith.negf %325 : vector<2x32xf32>
    %327 = math.exp %326 : vector<2x32xf32>
    %cst_95 = arith.constant 1.000000e+00 : f32
    %328 = vector.broadcast %cst_95 : f32 to vector<2x32xf32>
    %329 = arith.addf %328, %327 : vector<2x32xf32>
    %330 = arith.divf %328, %329 : vector<2x32xf32>
    %331 = vector.extract_strided_slice %324 {offsets = [0, 32], sizes = [2, 32], strides = [1, 1]} : vector<2x128xf32> to vector<2x32xf32>
    %332 = arith.negf %331 : vector<2x32xf32>
    %333 = math.exp %332 : vector<2x32xf32>
    %cst_96 = arith.constant 1.000000e+00 : f32
    %334 = vector.broadcast %cst_96 : f32 to vector<2x32xf32>
    %335 = arith.addf %334, %333 : vector<2x32xf32>
    %336 = arith.divf %334, %335 : vector<2x32xf32>
    %337 = vector.extract_strided_slice %324 {offsets = [0, 64], sizes = [2, 32], strides = [1, 1]} : vector<2x128xf32> to vector<2x32xf32>
    %338 = math.tanh %337 : vector<2x32xf32>
    %339 = vector.extract_strided_slice %324 {offsets = [0, 96], sizes = [2, 32], strides = [1, 1]} : vector<2x128xf32> to vector<2x32xf32>
    %340 = arith.negf %339 : vector<2x32xf32>
    %341 = math.exp %340 : vector<2x32xf32>
    %cst_97 = arith.constant 1.000000e+00 : f32
    %342 = vector.broadcast %cst_97 : f32 to vector<2x32xf32>
    %343 = arith.addf %342, %341 : vector<2x32xf32>
    %344 = arith.divf %342, %343 : vector<2x32xf32>
    %345 = arith.mulf %336, %279 : vector<2x32xf32>
    %346 = arith.mulf %330, %338 : vector<2x32xf32>
    %347 = arith.addf %345, %346 : vector<2x32xf32>
    %348 = math.tanh %347 : vector<2x32xf32>
    %349 = arith.mulf %344, %348 : vector<2x32xf32>
    %c0_98 = arith.constant 0 : index
    %c0_99 = arith.constant 0 : index
    %c96_100 = arith.constant 96 : index
    %350 = vector.load %arg8[%c0_98, %c0_99, %c96_100] : memref<1x2x256xf32, #tpu.memory_space<vmem>>, vector<1x2x32xf32>
    %351 = vector.shape_cast %350 : vector<1x2x32xf32> to vector<2x32xf32>
    %352 = vector.shape_cast %349 : vector<2x32xf32> to vector<1x2x32xf32>
    tpu.vector_store %arg8[%c0_98, %c0_99, %c96_100], %352 {strides = array<i32>} : memref<1x2x256xf32, #tpu.memory_space<vmem>>, vector<1x2x32xf32>,
    %c5_101 = arith.constant 5 : index
    %c0_102 = arith.constant 0 : index
    %c0_103 = arith.constant 0 : index
    %353 = vector.load %arg1[%c5_101, %c0_102, %c0_103] : memref<8x2x128xbf16, #tpu.memory_space<vmem>>, vector<1x2x128xbf16>
    %354 = vector.shape_cast %353 : vector<1x2x128xbf16> to vector<2x128xbf16>
    %355 = arith.extf %354 : vector<2x128xbf16> to vector<2x128xf32>
    %356 = arith.truncf %315 : vector<2x32xf32> to vector<2x32xbf16>
    %cst_104 = arith.constant dense<0.000000e+00> : vector<2x128xf32>
    %357 = tpu.matmul %356, %11, %cst_104 {dimension_numbers = #tpu.dot_dimension_numbers<[1], [0], [0], [1], [0, 0, 1, 1], [], []>} : vector<2x32xbf16>, vector<32x128xbf16>, vector<2x128xf32> -> vector<2x128xf32>
    %358 = arith.addf %355, %357 : vector<2x128xf32>
    %359 = vector.extract_strided_slice %358 {offsets = [0, 0], sizes = [2, 32], strides = [1, 1]} : vector<2x128xf32> to vector<2x32xf32>
    %360 = arith.negf %359 : vector<2x32xf32>
    %361 = math.exp %360 : vector<2x32xf32>
    %cst_105 = arith.constant 1.000000e+00 : f32
    %362 = vector.broadcast %cst_105 : f32 to vector<2x32xf32>
    %363 = arith.addf %362, %361 : vector<2x32xf32>
    %364 = arith.divf %362, %363 : vector<2x32xf32>
    %365 = vector.extract_strided_slice %358 {offsets = [0, 32], sizes = [2, 32], strides = [1, 1]} : vector<2x128xf32> to vector<2x32xf32>
    %366 = arith.negf %365 : vector<2x32xf32>
    %367 = math.exp %366 : vector<2x32xf32>
    %cst_106 = arith.constant 1.000000e+00 : f32
    %368 = vector.broadcast %cst_106 : f32 to vector<2x32xf32>
    %369 = arith.addf %368, %367 : vector<2x32xf32>
    %370 = arith.divf %368, %369 : vector<2x32xf32>
    %371 = vector.extract_strided_slice %358 {offsets = [0, 64], sizes = [2, 32], strides = [1, 1]} : vector<2x128xf32> to vector<2x32xf32>
    %372 = math.tanh %371 : vector<2x32xf32>
    %373 = vector.extract_strided_slice %358 {offsets = [0, 96], sizes = [2, 32], strides = [1, 1]} : vector<2x128xf32> to vector<2x32xf32>
    %374 = arith.negf %373 : vector<2x32xf32>
    %375 = math.exp %374 : vector<2x32xf32>
    %cst_107 = arith.constant 1.000000e+00 : f32
    %376 = vector.broadcast %cst_107 : f32 to vector<2x32xf32>
    %377 = arith.addf %376, %375 : vector<2x32xf32>
    %378 = arith.divf %376, %377 : vector<2x32xf32>
    %379 = arith.mulf %370, %313 : vector<2x32xf32>
    %380 = arith.mulf %364, %372 : vector<2x32xf32>
    %381 = arith.addf %379, %380 : vector<2x32xf32>
    %382 = math.tanh %381 : vector<2x32xf32>
    %383 = arith.mulf %378, %382 : vector<2x32xf32>
    %c0_108 = arith.constant 0 : index
    %c0_109 = arith.constant 0 : index
    %c160_110 = arith.constant 160 : index
    %384 = vector.load %arg7[%c0_108, %c0_109, %c160_110] : memref<1x2x256xf32, #tpu.memory_space<vmem>>, vector<1x2x32xf32>
    %385 = vector.shape_cast %384 : vector<1x2x32xf32> to vector<2x32xf32>
    %386 = vector.shape_cast %383 : vector<2x32xf32> to vector<1x2x32xf32>
    tpu.vector_store %arg7[%c0_108, %c0_109, %c160_110], %386 {strides = array<i32>} : memref<1x2x256xf32, #tpu.memory_space<vmem>>, vector<1x2x32xf32>,
    %c2_111 = arith.constant 2 : index
    %c0_112 = arith.constant 0 : index
    %c0_113 = arith.constant 0 : index
    %387 = vector.load %arg2[%c2_111, %c0_112, %c0_113] : memref<8x2x128xbf16, #tpu.memory_space<vmem>>, vector<1x2x128xbf16>
    %388 = vector.shape_cast %387 : vector<1x2x128xbf16> to vector<2x128xbf16>
    %389 = arith.extf %388 : vector<2x128xbf16> to vector<2x128xf32>
    %390 = arith.truncf %349 : vector<2x32xf32> to vector<2x32xbf16>
    %cst_114 = arith.constant dense<0.000000e+00> : vector<2x128xf32>
    %391 = tpu.matmul %390, %12, %cst_114 {dimension_numbers = #tpu.dot_dimension_numbers<[1], [0], [0], [1], [0, 0, 1, 1], [], []>} : vector<2x32xbf16>, vector<32x128xbf16>, vector<2x128xf32> -> vector<2x128xf32>
    %392 = arith.addf %389, %391 : vector<2x128xf32>
    %393 = vector.extract_strided_slice %392 {offsets = [0, 0], sizes = [2, 32], strides = [1, 1]} : vector<2x128xf32> to vector<2x32xf32>
    %394 = arith.negf %393 : vector<2x32xf32>
    %395 = math.exp %394 : vector<2x32xf32>
    %cst_115 = arith.constant 1.000000e+00 : f32
    %396 = vector.broadcast %cst_115 : f32 to vector<2x32xf32>
    %397 = arith.addf %396, %395 : vector<2x32xf32>
    %398 = arith.divf %396, %397 : vector<2x32xf32>
    %399 = vector.extract_strided_slice %392 {offsets = [0, 32], sizes = [2, 32], strides = [1, 1]} : vector<2x128xf32> to vector<2x32xf32>
    %400 = arith.negf %399 : vector<2x32xf32>
    %401 = math.exp %400 : vector<2x32xf32>
    %cst_116 = arith.constant 1.000000e+00 : f32
    %402 = vector.broadcast %cst_116 : f32 to vector<2x32xf32>
    %403 = arith.addf %402, %401 : vector<2x32xf32>
    %404 = arith.divf %402, %403 : vector<2x32xf32>
    %405 = vector.extract_strided_slice %392 {offsets = [0, 64], sizes = [2, 32], strides = [1, 1]} : vector<2x128xf32> to vector<2x32xf32>
    %406 = math.tanh %405 : vector<2x32xf32>
    %407 = vector.extract_strided_slice %392 {offsets = [0, 96], sizes = [2, 32], strides = [1, 1]} : vector<2x128xf32> to vector<2x32xf32>
    %408 = arith.negf %407 : vector<2x32xf32>
    %409 = math.exp %408 : vector<2x32xf32>
    %cst_117 = arith.constant 1.000000e+00 : f32
    %410 = vector.broadcast %cst_117 : f32 to vector<2x32xf32>
    %411 = arith.addf %410, %409 : vector<2x32xf32>
    %412 = arith.divf %410, %411 : vector<2x32xf32>
    %413 = arith.mulf %404, %347 : vector<2x32xf32>
    %414 = arith.mulf %398, %406 : vector<2x32xf32>
    %415 = arith.addf %413, %414 : vector<2x32xf32>
    %416 = math.tanh %415 : vector<2x32xf32>
    %417 = arith.mulf %412, %416 : vector<2x32xf32>
    %c0_118 = arith.constant 0 : index
    %c0_119 = arith.constant 0 : index
    %c64_120 = arith.constant 64 : index
    %418 = vector.load %arg8[%c0_118, %c0_119, %c64_120] : memref<1x2x256xf32, #tpu.memory_space<vmem>>, vector<1x2x32xf32>
    %419 = vector.shape_cast %418 : vector<1x2x32xf32> to vector<2x32xf32>
    %420 = vector.shape_cast %417 : vector<2x32xf32> to vector<1x2x32xf32>
    tpu.vector_store %arg8[%c0_118, %c0_119, %c64_120], %420 {strides = array<i32>} : memref<1x2x256xf32, #tpu.memory_space<vmem>>, vector<1x2x32xf32>,
    %c6_121 = arith.constant 6 : index
    %c0_122 = arith.constant 0 : index
    %c0_123 = arith.constant 0 : index
    %421 = vector.load %arg1[%c6_121, %c0_122, %c0_123] : memref<8x2x128xbf16, #tpu.memory_space<vmem>>, vector<1x2x128xbf16>
    %422 = vector.shape_cast %421 : vector<1x2x128xbf16> to vector<2x128xbf16>
    %423 = arith.extf %422 : vector<2x128xbf16> to vector<2x128xf32>
    %424 = arith.truncf %383 : vector<2x32xf32> to vector<2x32xbf16>
    %cst_124 = arith.constant dense<0.000000e+00> : vector<2x128xf32>
    %425 = tpu.matmul %424, %11, %cst_124 {dimension_numbers = #tpu.dot_dimension_numbers<[1], [0], [0], [1], [0, 0, 1, 1], [], []>} : vector<2x32xbf16>, vector<32x128xbf16>, vector<2x128xf32> -> vector<2x128xf32>
    %426 = arith.addf %423, %425 : vector<2x128xf32>
    %427 = vector.extract_strided_slice %426 {offsets = [0, 0], sizes = [2, 32], strides = [1, 1]} : vector<2x128xf32> to vector<2x32xf32>
    %428 = arith.negf %427 : vector<2x32xf32>
    %429 = math.exp %428 : vector<2x32xf32>
    %cst_125 = arith.constant 1.000000e+00 : f32
    %430 = vector.broadcast %cst_125 : f32 to vector<2x32xf32>
    %431 = arith.addf %430, %429 : vector<2x32xf32>
    %432 = arith.divf %430, %431 : vector<2x32xf32>
    %433 = vector.extract_strided_slice %426 {offsets = [0, 32], sizes = [2, 32], strides = [1, 1]} : vector<2x128xf32> to vector<2x32xf32>
    %434 = arith.negf %433 : vector<2x32xf32>
    %435 = math.exp %434 : vector<2x32xf32>
    %cst_126 = arith.constant 1.000000e+00 : f32
    %436 = vector.broadcast %cst_126 : f32 to vector<2x32xf32>
    %437 = arith.addf %436, %435 : vector<2x32xf32>
    %438 = arith.divf %436, %437 : vector<2x32xf32>
    %439 = vector.extract_strided_slice %426 {offsets = [0, 64], sizes = [2, 32], strides = [1, 1]} : vector<2x128xf32> to vector<2x32xf32>
    %440 = math.tanh %439 : vector<2x32xf32>
    %441 = vector.extract_strided_slice %426 {offsets = [0, 96], sizes = [2, 32], strides = [1, 1]} : vector<2x128xf32> to vector<2x32xf32>
    %442 = arith.negf %441 : vector<2x32xf32>
    %443 = math.exp %442 : vector<2x32xf32>
    %cst_127 = arith.constant 1.000000e+00 : f32
    %444 = vector.broadcast %cst_127 : f32 to vector<2x32xf32>
    %445 = arith.addf %444, %443 : vector<2x32xf32>
    %446 = arith.divf %444, %445 : vector<2x32xf32>
    %447 = arith.mulf %438, %381 : vector<2x32xf32>
    %448 = arith.mulf %432, %440 : vector<2x32xf32>
    %449 = arith.addf %447, %448 : vector<2x32xf32>
    %450 = math.tanh %449 : vector<2x32xf32>
    %451 = arith.mulf %446, %450 : vector<2x32xf32>
    %c0_128 = arith.constant 0 : index
    %c0_129 = arith.constant 0 : index
    %c192_130 = arith.constant 192 : index
    %452 = vector.load %arg7[%c0_128, %c0_129, %c192_130] : memref<1x2x256xf32, #tpu.memory_space<vmem>>, vector<1x2x32xf32>
    %453 = vector.shape_cast %452 : vector<1x2x32xf32> to vector<2x32xf32>
    %454 = vector.shape_cast %451 : vector<2x32xf32> to vector<1x2x32xf32>
    tpu.vector_store %arg7[%c0_128, %c0_129, %c192_130], %454 {strides = array<i32>} : memref<1x2x256xf32, #tpu.memory_space<vmem>>, vector<1x2x32xf32>,
    %c1_131 = arith.constant 1 : index
    %c0_132 = arith.constant 0 : index
    %c0_133 = arith.constant 0 : index
    %455 = vector.load %arg2[%c1_131, %c0_132, %c0_133] : memref<8x2x128xbf16, #tpu.memory_space<vmem>>, vector<1x2x128xbf16>
    %456 = vector.shape_cast %455 : vector<1x2x128xbf16> to vector<2x128xbf16>
    %457 = arith.extf %456 : vector<2x128xbf16> to vector<2x128xf32>
    %458 = arith.truncf %417 : vector<2x32xf32> to vector<2x32xbf16>
    %cst_134 = arith.constant dense<0.000000e+00> : vector<2x128xf32>
    %459 = tpu.matmul %458, %12, %cst_134 {dimension_numbers = #tpu.dot_dimension_numbers<[1], [0], [0], [1], [0, 0, 1, 1], [], []>} : vector<2x32xbf16>, vector<32x128xbf16>, vector<2x128xf32> -> vector<2x128xf32>
    %460 = arith.addf %457, %459 : vector<2x128xf32>
    %461 = vector.extract_strided_slice %460 {offsets = [0, 0], sizes = [2, 32], strides = [1, 1]} : vector<2x128xf32> to vector<2x32xf32>
    %462 = arith.negf %461 : vector<2x32xf32>
    %463 = math.exp %462 : vector<2x32xf32>
    %cst_135 = arith.constant 1.000000e+00 : f32
    %464 = vector.broadcast %cst_135 : f32 to vector<2x32xf32>
    %465 = arith.addf %464, %463 : vector<2x32xf32>
    %466 = arith.divf %464, %465 : vector<2x32xf32>
    %467 = vector.extract_strided_slice %460 {offsets = [0, 32], sizes = [2, 32], strides = [1, 1]} : vector<2x128xf32> to vector<2x32xf32>
    %468 = arith.negf %467 : vector<2x32xf32>
    %469 = math.exp %468 : vector<2x32xf32>
    %cst_136 = arith.constant 1.000000e+00 : f32
    %470 = vector.broadcast %cst_136 : f32 to vector<2x32xf32>
    %471 = arith.addf %470, %469 : vector<2x32xf32>
    %472 = arith.divf %470, %471 : vector<2x32xf32>
    %473 = vector.extract_strided_slice %460 {offsets = [0, 64], sizes = [2, 32], strides = [1, 1]} : vector<2x128xf32> to vector<2x32xf32>
    %474 = math.tanh %473 : vector<2x32xf32>
    %475 = vector.extract_strided_slice %460 {offsets = [0, 96], sizes = [2, 32], strides = [1, 1]} : vector<2x128xf32> to vector<2x32xf32>
    %476 = arith.negf %475 : vector<2x32xf32>
    %477 = math.exp %476 : vector<2x32xf32>
    %cst_137 = arith.constant 1.000000e+00 : f32
    %478 = vector.broadcast %cst_137 : f32 to vector<2x32xf32>
    %479 = arith.addf %478, %477 : vector<2x32xf32>
    %480 = arith.divf %478, %479 : vector<2x32xf32>
    %481 = arith.mulf %472, %415 : vector<2x32xf32>
    %482 = arith.mulf %466, %474 : vector<2x32xf32>
    %483 = arith.addf %481, %482 : vector<2x32xf32>
    %484 = math.tanh %483 : vector<2x32xf32>
    %485 = arith.mulf %480, %484 : vector<2x32xf32>
    %c0_138 = arith.constant 0 : index
    %c0_139 = arith.constant 0 : index
    %c32_140 = arith.constant 32 : index
    %486 = vector.load %arg8[%c0_138, %c0_139, %c32_140] : memref<1x2x256xf32, #tpu.memory_space<vmem>>, vector<1x2x32xf32>
    %487 = vector.shape_cast %486 : vector<1x2x32xf32> to vector<2x32xf32>
    %488 = vector.shape_cast %485 : vector<2x32xf32> to vector<1x2x32xf32>
    tpu.vector_store %arg8[%c0_138, %c0_139, %c32_140], %488 {strides = array<i32>} : memref<1x2x256xf32, #tpu.memory_space<vmem>>, vector<1x2x32xf32>,
    %c7_141 = arith.constant 7 : index
    %c0_142 = arith.constant 0 : index
    %c0_143 = arith.constant 0 : index
    %489 = vector.load %arg1[%c7_141, %c0_142, %c0_143] : memref<8x2x128xbf16, #tpu.memory_space<vmem>>, vector<1x2x128xbf16>
    %490 = vector.shape_cast %489 : vector<1x2x128xbf16> to vector<2x128xbf16>
    %491 = arith.extf %490 : vector<2x128xbf16> to vector<2x128xf32>
    %492 = arith.truncf %451 : vector<2x32xf32> to vector<2x32xbf16>
    %cst_144 = arith.constant dense<0.000000e+00> : vector<2x128xf32>
    %493 = tpu.matmul %492, %11, %cst_144 {dimension_numbers = #tpu.dot_dimension_numbers<[1], [0], [0], [1], [0, 0, 1, 1], [], []>} : vector<2x32xbf16>, vector<32x128xbf16>, vector<2x128xf32> -> vector<2x128xf32>
    %494 = arith.addf %491, %493 : vector<2x128xf32>
    %495 = vector.extract_strided_slice %494 {offsets = [0, 0], sizes = [2, 32], strides = [1, 1]} : vector<2x128xf32> to vector<2x32xf32>
    %496 = arith.negf %495 : vector<2x32xf32>
    %497 = math.exp %496 : vector<2x32xf32>
    %cst_145 = arith.constant 1.000000e+00 : f32
    %498 = vector.broadcast %cst_145 : f32 to vector<2x32xf32>
    %499 = arith.addf %498, %497 : vector<2x32xf32>
    %500 = arith.divf %498, %499 : vector<2x32xf32>
    %501 = vector.extract_strided_slice %494 {offsets = [0, 32], sizes = [2, 32], strides = [1, 1]} : vector<2x128xf32> to vector<2x32xf32>
    %502 = arith.negf %501 : vector<2x32xf32>
    %503 = math.exp %502 : vector<2x32xf32>
    %cst_146 = arith.constant 1.000000e+00 : f32
    %504 = vector.broadcast %cst_146 : f32 to vector<2x32xf32>
    %505 = arith.addf %504, %503 : vector<2x32xf32>
    %506 = arith.divf %504, %505 : vector<2x32xf32>
    %507 = vector.extract_strided_slice %494 {offsets = [0, 64], sizes = [2, 32], strides = [1, 1]} : vector<2x128xf32> to vector<2x32xf32>
    %508 = math.tanh %507 : vector<2x32xf32>
    %509 = vector.extract_strided_slice %494 {offsets = [0, 96], sizes = [2, 32], strides = [1, 1]} : vector<2x128xf32> to vector<2x32xf32>
    %510 = arith.negf %509 : vector<2x32xf32>
    %511 = math.exp %510 : vector<2x32xf32>
    %cst_147 = arith.constant 1.000000e+00 : f32
    %512 = vector.broadcast %cst_147 : f32 to vector<2x32xf32>
    %513 = arith.addf %512, %511 : vector<2x32xf32>
    %514 = arith.divf %512, %513 : vector<2x32xf32>
    %515 = arith.mulf %506, %449 : vector<2x32xf32>
    %516 = arith.mulf %500, %508 : vector<2x32xf32>
    %517 = arith.addf %515, %516 : vector<2x32xf32>
    %518 = math.tanh %517 : vector<2x32xf32>
    %519 = arith.mulf %514, %518 : vector<2x32xf32>
    %c0_148 = arith.constant 0 : index
    %c0_149 = arith.constant 0 : index
    %c224_150 = arith.constant 224 : index
    %520 = vector.load %arg7[%c0_148, %c0_149, %c224_150] : memref<1x2x256xf32, #tpu.memory_space<vmem>>, vector<1x2x32xf32>
    %521 = vector.shape_cast %520 : vector<1x2x32xf32> to vector<2x32xf32>
    %522 = vector.shape_cast %519 : vector<2x32xf32> to vector<1x2x32xf32>
    tpu.vector_store %arg7[%c0_148, %c0_149, %c224_150], %522 {strides = array<i32>} : memref<1x2x256xf32, #tpu.memory_space<vmem>>, vector<1x2x32xf32>,
    %c0_151 = arith.constant 0 : index
    %c0_152 = arith.constant 0 : index
    %c0_153 = arith.constant 0 : index
    %523 = vector.load %arg2[%c0_151, %c0_152, %c0_153] : memref<8x2x128xbf16, #tpu.memory_space<vmem>>, vector<1x2x128xbf16>
    %524 = vector.shape_cast %523 : vector<1x2x128xbf16> to vector<2x128xbf16>
    %525 = arith.extf %524 : vector<2x128xbf16> to vector<2x128xf32>
    %526 = arith.truncf %485 : vector<2x32xf32> to vector<2x32xbf16>
    %cst_154 = arith.constant dense<0.000000e+00> : vector<2x128xf32>
    %527 = tpu.matmul %526, %12, %cst_154 {dimension_numbers = #tpu.dot_dimension_numbers<[1], [0], [0], [1], [0, 0, 1, 1], [], []>} : vector<2x32xbf16>, vector<32x128xbf16>, vector<2x128xf32> -> vector<2x128xf32>
    %528 = arith.addf %525, %527 : vector<2x128xf32>
    %529 = vector.extract_strided_slice %528 {offsets = [0, 0], sizes = [2, 32], strides = [1, 1]} : vector<2x128xf32> to vector<2x32xf32>
    %530 = arith.negf %529 : vector<2x32xf32>
    %531 = math.exp %530 : vector<2x32xf32>
    %cst_155 = arith.constant 1.000000e+00 : f32
    %532 = vector.broadcast %cst_155 : f32 to vector<2x32xf32>
    %533 = arith.addf %532, %531 : vector<2x32xf32>
    %534 = arith.divf %532, %533 : vector<2x32xf32>
    %535 = vector.extract_strided_slice %528 {offsets = [0, 32], sizes = [2, 32], strides = [1, 1]} : vector<2x128xf32> to vector<2x32xf32>
    %536 = arith.negf %535 : vector<2x32xf32>
    %537 = math.exp %536 : vector<2x32xf32>
    %cst_156 = arith.constant 1.000000e+00 : f32
    %538 = vector.broadcast %cst_156 : f32 to vector<2x32xf32>
    %539 = arith.addf %538, %537 : vector<2x32xf32>
    %540 = arith.divf %538, %539 : vector<2x32xf32>
    %541 = vector.extract_strided_slice %528 {offsets = [0, 64], sizes = [2, 32], strides = [1, 1]} : vector<2x128xf32> to vector<2x32xf32>
    %542 = math.tanh %541 : vector<2x32xf32>
    %543 = vector.extract_strided_slice %528 {offsets = [0, 96], sizes = [2, 32], strides = [1, 1]} : vector<2x128xf32> to vector<2x32xf32>
    %544 = arith.negf %543 : vector<2x32xf32>
    %545 = math.exp %544 : vector<2x32xf32>
    %cst_157 = arith.constant 1.000000e+00 : f32
    %546 = vector.broadcast %cst_157 : f32 to vector<2x32xf32>
    %547 = arith.addf %546, %545 : vector<2x32xf32>
    %548 = arith.divf %546, %547 : vector<2x32xf32>
    %549 = arith.mulf %540, %483 : vector<2x32xf32>
    %550 = arith.mulf %534, %542 : vector<2x32xf32>
    %551 = arith.addf %549, %550 : vector<2x32xf32>
    %552 = math.tanh %551 : vector<2x32xf32>
    %553 = arith.mulf %548, %552 : vector<2x32xf32>
    %c0_158 = arith.constant 0 : index
    %c0_159 = arith.constant 0 : index
    %c0_160 = arith.constant 0 : index
    %554 = vector.load %arg8[%c0_158, %c0_159, %c0_160] : memref<1x2x256xf32, #tpu.memory_space<vmem>>, vector<1x2x32xf32>
    %555 = vector.shape_cast %554 : vector<1x2x32xf32> to vector<2x32xf32>
    %556 = vector.shape_cast %553 : vector<2x32xf32> to vector<1x2x32xf32>
    tpu.vector_store %arg8[%c0_158, %c0_159, %c0_160], %556 {strides = array<i32>} : memref<1x2x256xf32, #tpu.memory_space<vmem>>, vector<1x2x32xf32>,
    %c0_161 = arith.constant 0 : index
    %c0_162 = arith.constant 0 : index
    %c0_163 = arith.constant 0 : index
    %557 = vector.load %arg11[%c0_161, %c0_162, %c0_163] : memref<2x2x32xf32, #tpu.memory_space<vmem>>, vector<1x2x32xf32>
    %558 = vector.shape_cast %557 : vector<1x2x32xf32> to vector<2x32xf32>
    %559 = vector.shape_cast %519 : vector<2x32xf32> to vector<1x2x32xf32>
    tpu.vector_store %arg11[%c0_161, %c0_162, %c0_163], %559 {strides = array<i32>} : memref<2x2x32xf32, #tpu.memory_space<vmem>>, vector<1x2x32xf32>,
    %c0_164 = arith.constant 0 : index
    %c0_165 = arith.constant 0 : index
    %c0_166 = arith.constant 0 : index
    %560 = vector.load %arg12[%c0_164, %c0_165, %c0_166] : memref<2x2x32xf32, #tpu.memory_space<vmem>>, vector<1x2x32xf32>
    %561 = vector.shape_cast %560 : vector<1x2x32xf32> to vector<2x32xf32>
    %562 = vector.shape_cast %517 : vector<2x32xf32> to vector<1x2x32xf32>
    tpu.vector_store %arg12[%c0_164, %c0_165, %c0_166], %562 {strides = array<i32>} : memref<2x2x32xf32, #tpu.memory_space<vmem>>, vector<1x2x32xf32>,
    %c1_167 = arith.constant 1 : index
    %c0_168 = arith.constant 0 : index
    %c0_169 = arith.constant 0 : index
    %563 = vector.load %arg11[%c1_167, %c0_168, %c0_169] : memref<2x2x32xf32, #tpu.memory_space<vmem>>, vector<1x2x32xf32>
    %564 = vector.shape_cast %563 : vector<1x2x32xf32> to vector<2x32xf32>
    %565 = vector.shape_cast %553 : vector<2x32xf32> to vector<1x2x32xf32>
    tpu.vector_store %arg11[%c1_167, %c0_168, %c0_169], %565 {strides = array<i32>} : memref<2x2x32xf32, #tpu.memory_space<vmem>>, vector<1x2x32xf32>,
    %c1_170 = arith.constant 1 : index
    %c0_171 = arith.constant 0 : index
    %c0_172 = arith.constant 0 : index
    %566 = vector.load %arg12[%c1_170, %c0_171, %c0_172] : memref<2x2x32xf32, #tpu.memory_space<vmem>>, vector<1x2x32xf32>
    %567 = vector.shape_cast %566 : vector<1x2x32xf32> to vector<2x32xf32>
    %568 = vector.shape_cast %551 : vector<2x32xf32> to vector<1x2x32xf32>
    tpu.vector_store %arg12[%c1_170, %c0_171, %c0_172], %568 {strides = array<i32>} : memref<2x2x32xf32, #tpu.memory_space<vmem>>, vector<1x2x32xf32>,
    %c0_i32_173 = arith.constant 0 : i32
    %569 = arith.cmpi eq, %arg0, %c0_i32_173 : i32
    %570 = arith.extui %569 : i1 to i32
    %c0_i32_174 = arith.constant 0 : i32
    %571 = arith.cmpi ne, %570, %c0_i32_174 : i32
    scf.if %571 {
      %c0_175 = arith.constant 0 : index
      %c0_176 = arith.constant 0 : index
      %c0_177 = arith.constant 0 : index
      %572 = vector.load %arg9[%c0_175, %c0_176, %c0_177] : memref<2x2x32xf32, #tpu.memory_space<vmem>>, vector<1x2x32xf32>
      %573 = vector.shape_cast %572 : vector<1x2x32xf32> to vector<2x32xf32>
      %574 = vector.shape_cast %519 : vector<2x32xf32> to vector<1x2x32xf32>
      tpu.vector_store %arg9[%c0_175, %c0_176, %c0_177], %574 {strides = array<i32>} : memref<2x2x32xf32, #tpu.memory_space<vmem>>, vector<1x2x32xf32>,
      %c0_178 = arith.constant 0 : index
      %c0_179 = arith.constant 0 : index
      %c0_180 = arith.constant 0 : index
      %575 = vector.load %arg10[%c0_178, %c0_179, %c0_180] : memref<2x2x32xf32, #tpu.memory_space<vmem>>, vector<1x2x32xf32>
      %576 = vector.shape_cast %575 : vector<1x2x32xf32> to vector<2x32xf32>
      %577 = vector.shape_cast %517 : vector<2x32xf32> to vector<1x2x32xf32>
      tpu.vector_store %arg10[%c0_178, %c0_179, %c0_180], %577 {strides = array<i32>} : memref<2x2x32xf32, #tpu.memory_space<vmem>>, vector<1x2x32xf32>,
      %c1_181 = arith.constant 1 : index
      %c0_182 = arith.constant 0 : index
      %c0_183 = arith.constant 0 : index
      %578 = vector.load %arg9[%c1_181, %c0_182, %c0_183] : memref<2x2x32xf32, #tpu.memory_space<vmem>>, vector<1x2x32xf32>
      %579 = vector.shape_cast %578 : vector<1x2x32xf32> to vector<2x32xf32>
      %580 = vector.shape_cast %553 : vector<2x32xf32> to vector<1x2x32xf32>
      tpu.vector_store %arg9[%c1_181, %c0_182, %c0_183], %580 {strides = array<i32>} : memref<2x2x32xf32, #tpu.memory_space<vmem>>, vector<1x2x32xf32>,
      %c1_184 = arith.constant 1 : index
      %c0_185 = arith.constant 0 : index
      %c0_186 = arith.constant 0 : index
      %581 = vector.load %arg10[%c1_184, %c0_185, %c0_186] : memref<2x2x32xf32, #tpu.memory_space<vmem>>, vector<1x2x32xf32>
      %582 = vector.shape_cast %581 : vector<1x2x32xf32> to vector<2x32xf32>
      %583 = vector.shape_cast %551 : vector<2x32xf32> to vector<1x2x32xf32>
      tpu.vector_store %arg10[%c1_184, %c0_185, %c0_186], %583 {strides = array<i32>} : memref<2x2x32xf32, #tpu.memory_space<vmem>>, vector<1x2x32xf32>,
    } else {
    }
    return
  }
  func.func @transform_0(%arg0: i32) -> (i32, i32, i32) {
    %c0_i32 = arith.constant 0 : i32
    %c0_i32_0 = arith.constant 0 : i32
    %c0_i32_1 = arith.constant 0 : i32
    return %arg0, %c0_i32, %c0_i32_0 : i32, i32, i32
  }
  func.func @transform_1(%arg0: i32) -> (i32, i32, i32) {
    %c0_i32 = arith.constant 0 : i32
    %0 = arith.subi %c0_i32, %arg0 : i32
    %c0_i32_0 = arith.constant 0 : i32
    %c0_i32_1 = arith.constant 0 : i32
    %c0_i32_2 = arith.constant 0 : i32
    return %0, %c0_i32_0, %c0_i32_1 : i32, i32, i32
  }
  func.func @transform_2(%arg0: i32) -> (i32, i32) {
    %c0_i32 = arith.constant 0 : i32
    %c0_i32_0 = arith.constant 0 : i32
    %c0_i32_1 = arith.constant 0 : i32
    return %c0_i32, %c0_i32_0 : i32, i32
  }
  func.func @transform_3(%arg0: i32) -> (i32, i32) {
    %c0_i32 = arith.constant 0 : i32
    %c0_i32_0 = arith.constant 0 : i32
    %c0_i32_1 = arith.constant 0 : i32
    return %c0_i32, %c0_i32_0 : i32, i32
  }
  func.func @transform_4(%arg0: i32) -> (i32, i32, i32) {
    %c0_i32 = arith.constant 0 : i32
    %c0_i32_0 = arith.constant 0 : i32
    %c0_i32_1 = arith.constant 0 : i32
    %c0_i32_2 = arith.constant 0 : i32
    return %c0_i32, %c0_i32_0, %c0_i32_1 : i32, i32, i32
  }
  func.func @transform_5(%arg0: i32) -> (i32, i32, i32) {
    %c0_i32 = arith.constant 0 : i32
    %c0_i32_0 = arith.constant 0 : i32
    %c0_i32_1 = arith.constant 0 : i32
    %c0_i32_2 = arith.constant 0 : i32
    return %c0_i32, %c0_i32_0, %c0_i32_1 : i32, i32, i32
  }
  func.func @transform_6(%arg0: i32) -> (i32, i32, i32) {
    %c0_i32 = arith.constant 0 : i32
    %c0_i32_0 = arith.constant 0 : i32
    %c0_i32_1 = arith.constant 0 : i32
    return %arg0, %c0_i32, %c0_i32_0 : i32, i32, i32
  }
  func.func @transform_7(%arg0: i32) -> (i32, i32, i32) {
    %c0_i32 = arith.constant 0 : i32
    %0 = arith.subi %c0_i32, %arg0 : i32
    %c0_i32_0 = arith.constant 0 : i32
    %c0_i32_1 = arith.constant 0 : i32
    %c0_i32_2 = arith.constant 0 : i32
    return %0, %c0_i32_0, %c0_i32_1 : i32, i32, i32
  }
  func.func @transform_8(%arg0: i32) -> (i32, i32, i32) {
    %c0_i32 = arith.constant 0 : i32
    %c0_i32_0 = arith.constant 0 : i32
    %c0_i32_1 = arith.constant 0 : i32
    %c0_i32_2 = arith.constant 0 : i32
    return %c0_i32, %c0_i32_0, %c0_i32_1 : i32, i32, i32
  }
  func.func @transform_9(%arg0: i32) -> (i32, i32, i32) {
    %c0_i32 = arith.constant 0 : i32
    %c0_i32_0 = arith.constant 0 : i32
    %c0_i32_1 = arith.constant 0 : i32
    %c0_i32_2 = arith.constant 0 : i32
    return %c0_i32, %c0_i32_0, %c0_i32_1 : i32, i32, i32
  }
}

module attributes {stable_mosaic.version = 11 : i64} {
  func.func @_lstm_chunk_kernel(%arg0: i32, %arg1: memref<8x2x128xbf16, #tpu.memory_space<vmem>>, %arg2: memref<8x2x128xbf16, #tpu.memory_space<vmem>>, %arg3: memref<32x128xbf16, #tpu.memory_space<vmem>>, %arg4: memref<32x128xbf16, #tpu.memory_space<vmem>>, %arg5: memref<2x2x32xf32, #tpu.memory_space<vmem>>, %arg6: memref<2x2x32xf32, #tpu.memory_space<vmem>>, %arg7: memref<1x2x256xf32, #tpu.memory_space<vmem>>, %arg8: memref<1x2x256xf32, #tpu.memory_space<vmem>>, %arg9: memref<2x2x32xf32, #tpu.memory_space<vmem>>, %arg10: memref<2x2x32xf32, #tpu.memory_space<vmem>>, %arg11: memref<2x2x32xf32, #tpu.memory_space<vmem>>, %arg12: memref<2x2x32xf32, #tpu.memory_space<vmem>>) attributes {dimension_semantics = [#tpu.dimension_semantics<arbitrary>], iteration_bounds = array<i64: 1>, scalar_prefetch = 0 : i64, scratch_operands = 2 : i64, tpu.core_type = #tpu.core_type<tc>, window_params = [{transform_indices = @transform_0, window_bounds = array<i64: 8, 2, 128>}, {transform_indices = @transform_1, window_bounds = array<i64: 8, 2, 128>}, {pipeline_mode = #tpu.pipeline_mode<synchronous>, transform_indices = @transform_2, window_bounds = array<i64: 32, 128>}, {pipeline_mode = #tpu.pipeline_mode<synchronous>, transform_indices = @transform_3, window_bounds = array<i64: 32, 128>}, {pipeline_mode = #tpu.pipeline_mode<synchronous>, transform_indices = @transform_4, window_bounds = array<i64: 2, 2, 32>}, {pipeline_mode = #tpu.pipeline_mode<synchronous>, transform_indices = @transform_5, window_bounds = array<i64: 2, 2, 32>}, {transform_indices = @transform_6, window_bounds = array<i64: 1, 2, 256>}, {transform_indices = @transform_7, window_bounds = array<i64: 1, 2, 256>}, {pipeline_mode = #tpu.pipeline_mode<synchronous>, transform_indices = @transform_8, window_bounds = array<i64: 2, 2, 32>}, {pipeline_mode = #tpu.pipeline_mode<synchronous>, transform_indices = @transform_9, window_bounds = array<i64: 2, 2, 32>}]} {
    %c0_i32 = arith.constant 0 : i32
    %0 = arith.cmpi eq, %arg0, %c0_i32 : i32
    %1 = arith.extui %0 : i1 to i32
    %c0_i32_0 = arith.constant 0 : i32
    %2 = arith.cmpi ne, %1, %c0_i32_0 : i32
    scf.if %2 {
      %c0_175 = arith.constant 0 : index
      %c0_176 = arith.constant 0 : index
      %c0_177 = arith.constant 0 : index
      %572 = vector.load %arg5[%c0_175, %c0_176, %c0_177] : memref<2x2x32xf32, #tpu.memory_space<vmem>>, vector<2x2x32xf32>
      %c0_178 = arith.constant 0 : index
      %c0_179 = arith.constant 0 : index
      %c0_180 = arith.constant 0 : index
      %573 = vector.load %arg11[%c0_178, %c0_179, %c0_180] : memref<2x2x32xf32, #tpu.memory_space<vmem>>, vector<2x2x32xf32>
      tpu.vector_store %arg11[%c0_178, %c0_179, %c0_180], %572 {strides = array<i32>} : memref<2x2x32xf32, #tpu.memory_space<vmem>>, vector<2x2x32xf32>,
      %c0_181 = arith.constant 0 : index
      %c0_182 = arith.constant 0 : index
      %c0_183 = arith.constant 0 : index
      %574 = vector.load %arg6[%c0_181, %c0_182, %c0_183] : memref<2x2x32xf32, #tpu.memory_space<vmem>>, vector<2x2x32xf32>
      %c0_184 = arith.constant 0 : index
      %c0_185 = arith.constant 0 : index
      %c0_186 = arith.constant 0 : index
      %575 = vector.load %arg12[%c0_184, %c0_185, %c0_186] : memref<2x2x32xf32, #tpu.memory_space<vmem>>, vector<2x2x32xf32>
      tpu.vector_store %arg12[%c0_184, %c0_185, %c0_186], %574 {strides = array<i32>} : memref<2x2x32xf32, #tpu.memory_space<vmem>>, vector<2x2x32xf32>,
    } else {
    }
    %c0 = arith.constant 0 : index
    %c0_1 = arith.constant 0 : index
    %c0_2 = arith.constant 0 : index
    %3 = vector.load %arg11[%c0, %c0_1, %c0_2] : memref<2x2x32xf32, #tpu.memory_space<vmem>>, vector<1x2x32xf32>
    %4 = vector.shape_cast %3 : vector<1x2x32xf32> to vector<2x32xf32>
    %c1 = arith.constant 1 : index
    %c0_3 = arith.constant 0 : index
    %c0_4 = arith.constant 0 : index
    %5 = vector.load %arg11[%c1, %c0_3, %c0_4] : memref<2x2x32xf32, #tpu.memory_space<vmem>>, vector<1x2x32xf32>
    %6 = vector.shape_cast %5 : vector<1x2x32xf32> to vector<2x32xf32>
    %c0_5 = arith.constant 0 : index
    %c0_6 = arith.constant 0 : index
    %c0_7 = arith.constant 0 : index
    %7 = vector.load %arg12[%c0_5, %c0_6, %c0_7] : memref<2x2x32xf32, #tpu.memory_space<vmem>>, vector<1x2x32xf32>
    %8 = vector.shape_cast %7 : vector<1x2x32xf32> to vector<2x32xf32>
    %c1_8 = arith.constant 1 : index
    %c0_9 = arith.constant 0 : index
    %c0_10 = arith.constant 0 : index
    %9 = vector.load %arg12[%c1_8, %c0_9, %c0_10] : memref<2x2x32xf32, #tpu.memory_space<vmem>>, vector<1x2x32xf32>
    %10 = vector.shape_cast %9 : vector<1x2x32xf32> to vector<2x32xf32>
    %c0_11 = arith.constant 0 : index
    %c0_12 = arith.constant 0 : index
    %11 = vector.load %arg3[%c0_11, %c0_12] : memref<32x128xbf16, #tpu.memory_space<vmem>>, vector<32x128xbf16>
    %c0_13 = arith.constant 0 : index
    %c0_14 = arith.constant 0 : index
    %12 = vector.load %arg4[%c0_13, %c0_14] : memref<32x128xbf16, #tpu.memory_space<vmem>>, vector<32x128xbf16>
    %c0_15 = arith.constant 0 : index
    %c0_16 = arith.constant 0 : index
    %c0_17 = arith.constant 0 : index
    %13 = vector.load %arg1[%c0_15, %c0_16, %c0_17] : memref<8x2x128xbf16, #tpu.memory_space<vmem>>, vector<1x2x128xbf16>
    %14 = vector.shape_cast %13 : vector<1x2x128xbf16> to vector<2x128xbf16>
    %15 = arith.extf %14 : vector<2x128xbf16> to vector<2x128xf32>
    %16 = arith.truncf %4 : vector<2x32xf32> to vector<2x32xbf16>
    %cst = arith.constant dense<0.000000e+00> : vector<2x128xf32>
    %17 = tpu.matmul %16, %11, %cst {dimension_numbers = #tpu.dot_dimension_numbers<[1], [0], [0], [1], [0, 0, 1, 1], [], []>} : vector<2x32xbf16>, vector<32x128xbf16>, vector<2x128xf32> -> vector<2x128xf32>
    %18 = arith.addf %15, %17 : vector<2x128xf32>
    %19 = vector.extract_strided_slice %18 {offsets = [0, 0], sizes = [2, 32], strides = [1, 1]} : vector<2x128xf32> to vector<2x32xf32>
    %20 = arith.negf %19 : vector<2x32xf32>
    %21 = math.exp %20 : vector<2x32xf32>
    %cst_18 = arith.constant 1.000000e+00 : f32
    %22 = vector.broadcast %cst_18 : f32 to vector<2x32xf32>
    %23 = arith.addf %22, %21 : vector<2x32xf32>
    %24 = arith.divf %22, %23 : vector<2x32xf32>
    %25 = vector.extract_strided_slice %18 {offsets = [0, 32], sizes = [2, 32], strides = [1, 1]} : vector<2x128xf32> to vector<2x32xf32>
    %26 = arith.negf %25 : vector<2x32xf32>
    %27 = math.exp %26 : vector<2x32xf32>
    %cst_19 = arith.constant 1.000000e+00 : f32
    %28 = vector.broadcast %cst_19 : f32 to vector<2x32xf32>
    %29 = arith.addf %28, %27 : vector<2x32xf32>
    %30 = arith.divf %28, %29 : vector<2x32xf32>
    %31 = vector.extract_strided_slice %18 {offsets = [0, 64], sizes = [2, 32], strides = [1, 1]} : vector<2x128xf32> to vector<2x32xf32>
    %32 = math.tanh %31 : vector<2x32xf32>
    %33 = vector.extract_strided_slice %18 {offsets = [0, 96], sizes = [2, 32], strides = [1, 1]} : vector<2x128xf32> to vector<2x32xf32>
    %34 = arith.negf %33 : vector<2x32xf32>
    %35 = math.exp %34 : vector<2x32xf32>
    %cst_20 = arith.constant 1.000000e+00 : f32
    %36 = vector.broadcast %cst_20 : f32 to vector<2x32xf32>
    %37 = arith.addf %36, %35 : vector<2x32xf32>
    %38 = arith.divf %36, %37 : vector<2x32xf32>
    %39 = arith.mulf %30, %8 : vector<2x32xf32>
    %40 = arith.mulf %24, %32 : vector<2x32xf32>
    %41 = arith.addf %39, %40 : vector<2x32xf32>
    %42 = math.tanh %41 : vector<2x32xf32>
    %43 = arith.mulf %38, %42 : vector<2x32xf32>
    %c0_21 = arith.constant 0 : index
    %c0_22 = arith.constant 0 : index
    %c0_23 = arith.constant 0 : index
    %44 = vector.load %arg7[%c0_21, %c0_22, %c0_23] : memref<1x2x256xf32, #tpu.memory_space<vmem>>, vector<1x2x32xf32>
    %45 = vector.shape_cast %44 : vector<1x2x32xf32> to vector<2x32xf32>
    %46 = vector.shape_cast %43 : vector<2x32xf32> to vector<1x2x32xf32>
    tpu.vector_store %arg7[%c0_21, %c0_22, %c0_23], %46 {strides = array<i32>} : memref<1x2x256xf32, #tpu.memory_space<vmem>>, vector<1x2x32xf32>,
    %c7 = arith.constant 7 : index
    %c0_24 = arith.constant 0 : index
    %c0_25 = arith.constant 0 : index
    %47 = vector.load %arg2[%c7, %c0_24, %c0_25] : memref<8x2x128xbf16, #tpu.memory_space<vmem>>, vector<1x2x128xbf16>
    %48 = vector.shape_cast %47 : vector<1x2x128xbf16> to vector<2x128xbf16>
    %49 = arith.extf %48 : vector<2x128xbf16> to vector<2x128xf32>
    %50 = arith.truncf %6 : vector<2x32xf32> to vector<2x32xbf16>
    %cst_26 = arith.constant dense<0.000000e+00> : vector<2x128xf32>
    %51 = tpu.matmul %50, %12, %cst_26 {dimension_numbers = #tpu.dot_dimension_numbers<[1], [0], [0], [1], [0, 0, 1, 1], [], []>} : vector<2x32xbf16>, vector<32x128xbf16>, vector<2x128xf32> -> vector<2x128xf32>
    %52 = arith.addf %49, %51 : vector<2x128xf32>
    %53 = vector.extract_strided_slice %52 {offsets = [0, 0], sizes = [2, 32], strides = [1, 1]} : vector<2x128xf32> to vector<2x32xf32>
    %54 = arith.negf %53 : vector<2x32xf32>
    %55 = math.exp %54 : vector<2x32xf32>
    %cst_27 = arith.constant 1.000000e+00 : f32
    %56 = vector.broadcast %cst_27 : f32 to vector<2x32xf32>
    %57 = arith.addf %56, %55 : vector<2x32xf32>
    %58 = arith.divf %56, %57 : vector<2x32xf32>
    %59 = vector.extract_strided_slice %52 {offsets = [0, 32], sizes = [2, 32], strides = [1, 1]} : vector<2x128xf32> to vector<2x32xf32>
    %60 = arith.negf %59 : vector<2x32xf32>
    %61 = math.exp %60 : vector<2x32xf32>
    %cst_28 = arith.constant 1.000000e+00 : f32
    %62 = vector.broadcast %cst_28 : f32 to vector<2x32xf32>
    %63 = arith.addf %62, %61 : vector<2x32xf32>
    %64 = arith.divf %62, %63 : vector<2x32xf32>
    %65 = vector.extract_strided_slice %52 {offsets = [0, 64], sizes = [2, 32], strides = [1, 1]} : vector<2x128xf32> to vector<2x32xf32>
    %66 = math.tanh %65 : vector<2x32xf32>
    %67 = vector.extract_strided_slice %52 {offsets = [0, 96], sizes = [2, 32], strides = [1, 1]} : vector<2x128xf32> to vector<2x32xf32>
    %68 = arith.negf %67 : vector<2x32xf32>
    %69 = math.exp %68 : vector<2x32xf32>
    %cst_29 = arith.constant 1.000000e+00 : f32
    %70 = vector.broadcast %cst_29 : f32 to vector<2x32xf32>
    %71 = arith.addf %70, %69 : vector<2x32xf32>
    %72 = arith.divf %70, %71 : vector<2x32xf32>
    %73 = arith.mulf %64, %10 : vector<2x32xf32>
    %74 = arith.mulf %58, %66 : vector<2x32xf32>
    %75 = arith.addf %73, %74 : vector<2x32xf32>
    %76 = math.tanh %75 : vector<2x32xf32>
    %77 = arith.mulf %72, %76 : vector<2x32xf32>
    %c0_30 = arith.constant 0 : index
    %c0_31 = arith.constant 0 : index
    %c224 = arith.constant 224 : index
    %78 = vector.load %arg8[%c0_30, %c0_31, %c224] : memref<1x2x256xf32, #tpu.memory_space<vmem>>, vector<1x2x32xf32>
    %79 = vector.shape_cast %78 : vector<1x2x32xf32> to vector<2x32xf32>
    %80 = vector.shape_cast %77 : vector<2x32xf32> to vector<1x2x32xf32>
    tpu.vector_store %arg8[%c0_30, %c0_31, %c224], %80 {strides = array<i32>} : memref<1x2x256xf32, #tpu.memory_space<vmem>>, vector<1x2x32xf32>,
    %c1_32 = arith.constant 1 : index
    %c0_33 = arith.constant 0 : index
    %c0_34 = arith.constant 0 : index
    %81 = vector.load %arg1[%c1_32, %c0_33, %c0_34] : memref<8x2x128xbf16, #tpu.memory_space<vmem>>, vector<1x2x128xbf16>
    %82 = vector.shape_cast %81 : vector<1x2x128xbf16> to vector<2x128xbf16>
    %83 = arith.extf %82 : vector<2x128xbf16> to vector<2x128xf32>
    %84 = arith.truncf %43 : vector<2x32xf32> to vector<2x32xbf16>
    %cst_35 = arith.constant dense<0.000000e+00> : vector<2x128xf32>
    %85 = tpu.matmul %84, %11, %cst_35 {dimension_numbers = #tpu.dot_dimension_numbers<[1], [0], [0], [1], [0, 0, 1, 1], [], []>} : vector<2x32xbf16>, vector<32x128xbf16>, vector<2x128xf32> -> vector<2x128xf32>
    %86 = arith.addf %83, %85 : vector<2x128xf32>
    %87 = vector.extract_strided_slice %86 {offsets = [0, 0], sizes = [2, 32], strides = [1, 1]} : vector<2x128xf32> to vector<2x32xf32>
    %88 = arith.negf %87 : vector<2x32xf32>
    %89 = math.exp %88 : vector<2x32xf32>
    %cst_36 = arith.constant 1.000000e+00 : f32
    %90 = vector.broadcast %cst_36 : f32 to vector<2x32xf32>
    %91 = arith.addf %90, %89 : vector<2x32xf32>
    %92 = arith.divf %90, %91 : vector<2x32xf32>
    %93 = vector.extract_strided_slice %86 {offsets = [0, 32], sizes = [2, 32], strides = [1, 1]} : vector<2x128xf32> to vector<2x32xf32>
    %94 = arith.negf %93 : vector<2x32xf32>
    %95 = math.exp %94 : vector<2x32xf32>
    %cst_37 = arith.constant 1.000000e+00 : f32
    %96 = vector.broadcast %cst_37 : f32 to vector<2x32xf32>
    %97 = arith.addf %96, %95 : vector<2x32xf32>
    %98 = arith.divf %96, %97 : vector<2x32xf32>
    %99 = vector.extract_strided_slice %86 {offsets = [0, 64], sizes = [2, 32], strides = [1, 1]} : vector<2x128xf32> to vector<2x32xf32>
    %100 = math.tanh %99 : vector<2x32xf32>
    %101 = vector.extract_strided_slice %86 {offsets = [0, 96], sizes = [2, 32], strides = [1, 1]} : vector<2x128xf32> to vector<2x32xf32>
    %102 = arith.negf %101 : vector<2x32xf32>
    %103 = math.exp %102 : vector<2x32xf32>
    %cst_38 = arith.constant 1.000000e+00 : f32
    %104 = vector.broadcast %cst_38 : f32 to vector<2x32xf32>
    %105 = arith.addf %104, %103 : vector<2x32xf32>
    %106 = arith.divf %104, %105 : vector<2x32xf32>
    %107 = arith.mulf %98, %41 : vector<2x32xf32>
    %108 = arith.mulf %92, %100 : vector<2x32xf32>
    %109 = arith.addf %107, %108 : vector<2x32xf32>
    %110 = math.tanh %109 : vector<2x32xf32>
    %111 = arith.mulf %106, %110 : vector<2x32xf32>
    %c0_39 = arith.constant 0 : index
    %c0_40 = arith.constant 0 : index
    %c32 = arith.constant 32 : index
    %112 = vector.load %arg7[%c0_39, %c0_40, %c32] : memref<1x2x256xf32, #tpu.memory_space<vmem>>, vector<1x2x32xf32>
    %113 = vector.shape_cast %112 : vector<1x2x32xf32> to vector<2x32xf32>
    %114 = vector.shape_cast %111 : vector<2x32xf32> to vector<1x2x32xf32>
    tpu.vector_store %arg7[%c0_39, %c0_40, %c32], %114 {strides = array<i32>} : memref<1x2x256xf32, #tpu.memory_space<vmem>>, vector<1x2x32xf32>,
    %c6 = arith.constant 6 : index
    %c0_41 = arith.constant 0 : index
    %c0_42 = arith.constant 0 : index
    %115 = vector.load %arg2[%c6, %c0_41, %c0_42] : memref<8x2x128xbf16, #tpu.memory_space<vmem>>, vector<1x2x128xbf16>
    %116 = vector.shape_cast %115 : vector<1x2x128xbf16> to vector<2x128xbf16>
    %117 = arith.extf %116 : vector<2x128xbf16> to vector<2x128xf32>
    %118 = arith.truncf %77 : vector<2x32xf32> to vector<2x32xbf16>
    %cst_43 = arith.constant dense<0.000000e+00> : vector<2x128xf32>
    %119 = tpu.matmul %118, %12, %cst_43 {dimension_numbers = #tpu.dot_dimension_numbers<[1], [0], [0], [1], [0, 0, 1, 1], [], []>} : vector<2x32xbf16>, vector<32x128xbf16>, vector<2x128xf32> -> vector<2x128xf32>
    %120 = arith.addf %117, %119 : vector<2x128xf32>
    %121 = vector.extract_strided_slice %120 {offsets = [0, 0], sizes = [2, 32], strides = [1, 1]} : vector<2x128xf32> to vector<2x32xf32>
    %122 = arith.negf %121 : vector<2x32xf32>
    %123 = math.exp %122 : vector<2x32xf32>
    %cst_44 = arith.constant 1.000000e+00 : f32
    %124 = vector.broadcast %cst_44 : f32 to vector<2x32xf32>
    %125 = arith.addf %124, %123 : vector<2x32xf32>
    %126 = arith.divf %124, %125 : vector<2x32xf32>
    %127 = vector.extract_strided_slice %120 {offsets = [0, 32], sizes = [2, 32], strides = [1, 1]} : vector<2x128xf32> to vector<2x32xf32>
    %128 = arith.negf %127 : vector<2x32xf32>
    %129 = math.exp %128 : vector<2x32xf32>
    %cst_45 = arith.constant 1.000000e+00 : f32
    %130 = vector.broadcast %cst_45 : f32 to vector<2x32xf32>
    %131 = arith.addf %130, %129 : vector<2x32xf32>
    %132 = arith.divf %130, %131 : vector<2x32xf32>
    %133 = vector.extract_strided_slice %120 {offsets = [0, 64], sizes = [2, 32], strides = [1, 1]} : vector<2x128xf32> to vector<2x32xf32>
    %134 = math.tanh %133 : vector<2x32xf32>
    %135 = vector.extract_strided_slice %120 {offsets = [0, 96], sizes = [2, 32], strides = [1, 1]} : vector<2x128xf32> to vector<2x32xf32>
    %136 = arith.negf %135 : vector<2x32xf32>
    %137 = math.exp %136 : vector<2x32xf32>
    %cst_46 = arith.constant 1.000000e+00 : f32
    %138 = vector.broadcast %cst_46 : f32 to vector<2x32xf32>
    %139 = arith.addf %138, %137 : vector<2x32xf32>
    %140 = arith.divf %138, %139 : vector<2x32xf32>
    %141 = arith.mulf %132, %75 : vector<2x32xf32>
    %142 = arith.mulf %126, %134 : vector<2x32xf32>
    %143 = arith.addf %141, %142 : vector<2x32xf32>
    %144 = math.tanh %143 : vector<2x32xf32>
    %145 = arith.mulf %140, %144 : vector<2x32xf32>
    %c0_47 = arith.constant 0 : index
    %c0_48 = arith.constant 0 : index
    %c192 = arith.constant 192 : index
    %146 = vector.load %arg8[%c0_47, %c0_48, %c192] : memref<1x2x256xf32, #tpu.memory_space<vmem>>, vector<1x2x32xf32>
    %147 = vector.shape_cast %146 : vector<1x2x32xf32> to vector<2x32xf32>
    %148 = vector.shape_cast %145 : vector<2x32xf32> to vector<1x2x32xf32>
    tpu.vector_store %arg8[%c0_47, %c0_48, %c192], %148 {strides = array<i32>} : memref<1x2x256xf32, #tpu.memory_space<vmem>>, vector<1x2x32xf32>,
    %c2 = arith.constant 2 : index
    %c0_49 = arith.constant 0 : index
    %c0_50 = arith.constant 0 : index
    %149 = vector.load %arg1[%c2, %c0_49, %c0_50] : memref<8x2x128xbf16, #tpu.memory_space<vmem>>, vector<1x2x128xbf16>
    %150 = vector.shape_cast %149 : vector<1x2x128xbf16> to vector<2x128xbf16>
    %151 = arith.extf %150 : vector<2x128xbf16> to vector<2x128xf32>
    %152 = arith.truncf %111 : vector<2x32xf32> to vector<2x32xbf16>
    %cst_51 = arith.constant dense<0.000000e+00> : vector<2x128xf32>
    %153 = tpu.matmul %152, %11, %cst_51 {dimension_numbers = #tpu.dot_dimension_numbers<[1], [0], [0], [1], [0, 0, 1, 1], [], []>} : vector<2x32xbf16>, vector<32x128xbf16>, vector<2x128xf32> -> vector<2x128xf32>
    %154 = arith.addf %151, %153 : vector<2x128xf32>
    %155 = vector.extract_strided_slice %154 {offsets = [0, 0], sizes = [2, 32], strides = [1, 1]} : vector<2x128xf32> to vector<2x32xf32>
    %156 = arith.negf %155 : vector<2x32xf32>
    %157 = math.exp %156 : vector<2x32xf32>
    %cst_52 = arith.constant 1.000000e+00 : f32
    %158 = vector.broadcast %cst_52 : f32 to vector<2x32xf32>
    %159 = arith.addf %158, %157 : vector<2x32xf32>
    %160 = arith.divf %158, %159 : vector<2x32xf32>
    %161 = vector.extract_strided_slice %154 {offsets = [0, 32], sizes = [2, 32], strides = [1, 1]} : vector<2x128xf32> to vector<2x32xf32>
    %162 = arith.negf %161 : vector<2x32xf32>
    %163 = math.exp %162 : vector<2x32xf32>
    %cst_53 = arith.constant 1.000000e+00 : f32
    %164 = vector.broadcast %cst_53 : f32 to vector<2x32xf32>
    %165 = arith.addf %164, %163 : vector<2x32xf32>
    %166 = arith.divf %164, %165 : vector<2x32xf32>
    %167 = vector.extract_strided_slice %154 {offsets = [0, 64], sizes = [2, 32], strides = [1, 1]} : vector<2x128xf32> to vector<2x32xf32>
    %168 = math.tanh %167 : vector<2x32xf32>
    %169 = vector.extract_strided_slice %154 {offsets = [0, 96], sizes = [2, 32], strides = [1, 1]} : vector<2x128xf32> to vector<2x32xf32>
    %170 = arith.negf %169 : vector<2x32xf32>
    %171 = math.exp %170 : vector<2x32xf32>
    %cst_54 = arith.constant 1.000000e+00 : f32
    %172 = vector.broadcast %cst_54 : f32 to vector<2x32xf32>
    %173 = arith.addf %172, %171 : vector<2x32xf32>
    %174 = arith.divf %172, %173 : vector<2x32xf32>
    %175 = arith.mulf %166, %109 : vector<2x32xf32>
    %176 = arith.mulf %160, %168 : vector<2x32xf32>
    %177 = arith.addf %175, %176 : vector<2x32xf32>
    %178 = math.tanh %177 : vector<2x32xf32>
    %179 = arith.mulf %174, %178 : vector<2x32xf32>
    %c0_55 = arith.constant 0 : index
    %c0_56 = arith.constant 0 : index
    %c64 = arith.constant 64 : index
    %180 = vector.load %arg7[%c0_55, %c0_56, %c64] : memref<1x2x256xf32, #tpu.memory_space<vmem>>, vector<1x2x32xf32>
    %181 = vector.shape_cast %180 : vector<1x2x32xf32> to vector<2x32xf32>
    %182 = vector.shape_cast %179 : vector<2x32xf32> to vector<1x2x32xf32>
    tpu.vector_store %arg7[%c0_55, %c0_56, %c64], %182 {strides = array<i32>} : memref<1x2x256xf32, #tpu.memory_space<vmem>>, vector<1x2x32xf32>,
    %c5 = arith.constant 5 : index
    %c0_57 = arith.constant 0 : index
    %c0_58 = arith.constant 0 : index
    %183 = vector.load %arg2[%c5, %c0_57, %c0_58] : memref<8x2x128xbf16, #tpu.memory_space<vmem>>, vector<1x2x128xbf16>
    %184 = vector.shape_cast %183 : vector<1x2x128xbf16> to vector<2x128xbf16>
    %185 = arith.extf %184 : vector<2x128xbf16> to vector<2x128xf32>
    %186 = arith.truncf %145 : vector<2x32xf32> to vector<2x32xbf16>
    %cst_59 = arith.constant dense<0.000000e+00> : vector<2x128xf32>
    %187 = tpu.matmul %186, %12, %cst_59 {dimension_numbers = #tpu.dot_dimension_numbers<[1], [0], [0], [1], [0, 0, 1, 1], [], []>} : vector<2x32xbf16>, vector<32x128xbf16>, vector<2x128xf32> -> vector<2x128xf32>
    %188 = arith.addf %185, %187 : vector<2x128xf32>
    %189 = vector.extract_strided_slice %188 {offsets = [0, 0], sizes = [2, 32], strides = [1, 1]} : vector<2x128xf32> to vector<2x32xf32>
    %190 = arith.negf %189 : vector<2x32xf32>
    %191 = math.exp %190 : vector<2x32xf32>
    %cst_60 = arith.constant 1.000000e+00 : f32
    %192 = vector.broadcast %cst_60 : f32 to vector<2x32xf32>
    %193 = arith.addf %192, %191 : vector<2x32xf32>
    %194 = arith.divf %192, %193 : vector<2x32xf32>
    %195 = vector.extract_strided_slice %188 {offsets = [0, 32], sizes = [2, 32], strides = [1, 1]} : vector<2x128xf32> to vector<2x32xf32>
    %196 = arith.negf %195 : vector<2x32xf32>
    %197 = math.exp %196 : vector<2x32xf32>
    %cst_61 = arith.constant 1.000000e+00 : f32
    %198 = vector.broadcast %cst_61 : f32 to vector<2x32xf32>
    %199 = arith.addf %198, %197 : vector<2x32xf32>
    %200 = arith.divf %198, %199 : vector<2x32xf32>
    %201 = vector.extract_strided_slice %188 {offsets = [0, 64], sizes = [2, 32], strides = [1, 1]} : vector<2x128xf32> to vector<2x32xf32>
    %202 = math.tanh %201 : vector<2x32xf32>
    %203 = vector.extract_strided_slice %188 {offsets = [0, 96], sizes = [2, 32], strides = [1, 1]} : vector<2x128xf32> to vector<2x32xf32>
    %204 = arith.negf %203 : vector<2x32xf32>
    %205 = math.exp %204 : vector<2x32xf32>
    %cst_62 = arith.constant 1.000000e+00 : f32
    %206 = vector.broadcast %cst_62 : f32 to vector<2x32xf32>
    %207 = arith.addf %206, %205 : vector<2x32xf32>
    %208 = arith.divf %206, %207 : vector<2x32xf32>
    %209 = arith.mulf %200, %143 : vector<2x32xf32>
    %210 = arith.mulf %194, %202 : vector<2x32xf32>
    %211 = arith.addf %209, %210 : vector<2x32xf32>
    %212 = math.tanh %211 : vector<2x32xf32>
    %213 = arith.mulf %208, %212 : vector<2x32xf32>
    %c0_63 = arith.constant 0 : index
    %c0_64 = arith.constant 0 : index
    %c160 = arith.constant 160 : index
    %214 = vector.load %arg8[%c0_63, %c0_64, %c160] : memref<1x2x256xf32, #tpu.memory_space<vmem>>, vector<1x2x32xf32>
    %215 = vector.shape_cast %214 : vector<1x2x32xf32> to vector<2x32xf32>
    %216 = vector.shape_cast %213 : vector<2x32xf32> to vector<1x2x32xf32>
    tpu.vector_store %arg8[%c0_63, %c0_64, %c160], %216 {strides = array<i32>} : memref<1x2x256xf32, #tpu.memory_space<vmem>>, vector<1x2x32xf32>,
    %c3 = arith.constant 3 : index
    %c0_65 = arith.constant 0 : index
    %c0_66 = arith.constant 0 : index
    %217 = vector.load %arg1[%c3, %c0_65, %c0_66] : memref<8x2x128xbf16, #tpu.memory_space<vmem>>, vector<1x2x128xbf16>
    %218 = vector.shape_cast %217 : vector<1x2x128xbf16> to vector<2x128xbf16>
    %219 = arith.extf %218 : vector<2x128xbf16> to vector<2x128xf32>
    %220 = arith.truncf %179 : vector<2x32xf32> to vector<2x32xbf16>
    %cst_67 = arith.constant dense<0.000000e+00> : vector<2x128xf32>
    %221 = tpu.matmul %220, %11, %cst_67 {dimension_numbers = #tpu.dot_dimension_numbers<[1], [0], [0], [1], [0, 0, 1, 1], [], []>} : vector<2x32xbf16>, vector<32x128xbf16>, vector<2x128xf32> -> vector<2x128xf32>
    %222 = arith.addf %219, %221 : vector<2x128xf32>
    %223 = vector.extract_strided_slice %222 {offsets = [0, 0], sizes = [2, 32], strides = [1, 1]} : vector<2x128xf32> to vector<2x32xf32>
    %224 = arith.negf %223 : vector<2x32xf32>
    %225 = math.exp %224 : vector<2x32xf32>
    %cst_68 = arith.constant 1.000000e+00 : f32
    %226 = vector.broadcast %cst_68 : f32 to vector<2x32xf32>
    %227 = arith.addf %226, %225 : vector<2x32xf32>
    %228 = arith.divf %226, %227 : vector<2x32xf32>
    %229 = vector.extract_strided_slice %222 {offsets = [0, 32], sizes = [2, 32], strides = [1, 1]} : vector<2x128xf32> to vector<2x32xf32>
    %230 = arith.negf %229 : vector<2x32xf32>
    %231 = math.exp %230 : vector<2x32xf32>
    %cst_69 = arith.constant 1.000000e+00 : f32
    %232 = vector.broadcast %cst_69 : f32 to vector<2x32xf32>
    %233 = arith.addf %232, %231 : vector<2x32xf32>
    %234 = arith.divf %232, %233 : vector<2x32xf32>
    %235 = vector.extract_strided_slice %222 {offsets = [0, 64], sizes = [2, 32], strides = [1, 1]} : vector<2x128xf32> to vector<2x32xf32>
    %236 = math.tanh %235 : vector<2x32xf32>
    %237 = vector.extract_strided_slice %222 {offsets = [0, 96], sizes = [2, 32], strides = [1, 1]} : vector<2x128xf32> to vector<2x32xf32>
    %238 = arith.negf %237 : vector<2x32xf32>
    %239 = math.exp %238 : vector<2x32xf32>
    %cst_70 = arith.constant 1.000000e+00 : f32
    %240 = vector.broadcast %cst_70 : f32 to vector<2x32xf32>
    %241 = arith.addf %240, %239 : vector<2x32xf32>
    %242 = arith.divf %240, %241 : vector<2x32xf32>
    %243 = arith.mulf %234, %177 : vector<2x32xf32>
    %244 = arith.mulf %228, %236 : vector<2x32xf32>
    %245 = arith.addf %243, %244 : vector<2x32xf32>
    %246 = math.tanh %245 : vector<2x32xf32>
    %247 = arith.mulf %242, %246 : vector<2x32xf32>
    %c0_71 = arith.constant 0 : index
    %c0_72 = arith.constant 0 : index
    %c96 = arith.constant 96 : index
    %248 = vector.load %arg7[%c0_71, %c0_72, %c96] : memref<1x2x256xf32, #tpu.memory_space<vmem>>, vector<1x2x32xf32>
    %249 = vector.shape_cast %248 : vector<1x2x32xf32> to vector<2x32xf32>
    %250 = vector.shape_cast %247 : vector<2x32xf32> to vector<1x2x32xf32>
    tpu.vector_store %arg7[%c0_71, %c0_72, %c96], %250 {strides = array<i32>} : memref<1x2x256xf32, #tpu.memory_space<vmem>>, vector<1x2x32xf32>,
    %c4 = arith.constant 4 : index
    %c0_73 = arith.constant 0 : index
    %c0_74 = arith.constant 0 : index
    %251 = vector.load %arg2[%c4, %c0_73, %c0_74] : memref<8x2x128xbf16, #tpu.memory_space<vmem>>, vector<1x2x128xbf16>
    %252 = vector.shape_cast %251 : vector<1x2x128xbf16> to vector<2x128xbf16>
    %253 = arith.extf %252 : vector<2x128xbf16> to vector<2x128xf32>
    %254 = arith.truncf %213 : vector<2x32xf32> to vector<2x32xbf16>
    %cst_75 = arith.constant dense<0.000000e+00> : vector<2x128xf32>
    %255 = tpu.matmul %254, %12, %cst_75 {dimension_numbers = #tpu.dot_dimension_numbers<[1], [0], [0], [1], [0, 0, 1, 1], [], []>} : vector<2x32xbf16>, vector<32x128xbf16>, vector<2x128xf32> -> vector<2x128xf32>
    %256 = arith.addf %253, %255 : vector<2x128xf32>
    %257 = vector.extract_strided_slice %256 {offsets = [0, 0], sizes = [2, 32], strides = [1, 1]} : vector<2x128xf32> to vector<2x32xf32>
    %258 = arith.negf %257 : vector<2x32xf32>
    %259 = math.exp %258 : vector<2x32xf32>
    %cst_76 = arith.constant 1.000000e+00 : f32
    %260 = vector.broadcast %cst_76 : f32 to vector<2x32xf32>
    %261 = arith.addf %260, %259 : vector<2x32xf32>
    %262 = arith.divf %260, %261 : vector<2x32xf32>
    %263 = vector.extract_strided_slice %256 {offsets = [0, 32], sizes = [2, 32], strides = [1, 1]} : vector<2x128xf32> to vector<2x32xf32>
    %264 = arith.negf %263 : vector<2x32xf32>
    %265 = math.exp %264 : vector<2x32xf32>
    %cst_77 = arith.constant 1.000000e+00 : f32
    %266 = vector.broadcast %cst_77 : f32 to vector<2x32xf32>
    %267 = arith.addf %266, %265 : vector<2x32xf32>
    %268 = arith.divf %266, %267 : vector<2x32xf32>
    %269 = vector.extract_strided_slice %256 {offsets = [0, 64], sizes = [2, 32], strides = [1, 1]} : vector<2x128xf32> to vector<2x32xf32>
    %270 = math.tanh %269 : vector<2x32xf32>
    %271 = vector.extract_strided_slice %256 {offsets = [0, 96], sizes = [2, 32], strides = [1, 1]} : vector<2x128xf32> to vector<2x32xf32>
    %272 = arith.negf %271 : vector<2x32xf32>
    %273 = math.exp %272 : vector<2x32xf32>
    %cst_78 = arith.constant 1.000000e+00 : f32
    %274 = vector.broadcast %cst_78 : f32 to vector<2x32xf32>
    %275 = arith.addf %274, %273 : vector<2x32xf32>
    %276 = arith.divf %274, %275 : vector<2x32xf32>
    %277 = arith.mulf %268, %211 : vector<2x32xf32>
    %278 = arith.mulf %262, %270 : vector<2x32xf32>
    %279 = arith.addf %277, %278 : vector<2x32xf32>
    %280 = math.tanh %279 : vector<2x32xf32>
    %281 = arith.mulf %276, %280 : vector<2x32xf32>
    %c0_79 = arith.constant 0 : index
    %c0_80 = arith.constant 0 : index
    %c128 = arith.constant 128 : index
    %282 = vector.load %arg8[%c0_79, %c0_80, %c128] : memref<1x2x256xf32, #tpu.memory_space<vmem>>, vector<1x2x32xf32>
    %283 = vector.shape_cast %282 : vector<1x2x32xf32> to vector<2x32xf32>
    %284 = vector.shape_cast %281 : vector<2x32xf32> to vector<1x2x32xf32>
    tpu.vector_store %arg8[%c0_79, %c0_80, %c128], %284 {strides = array<i32>} : memref<1x2x256xf32, #tpu.memory_space<vmem>>, vector<1x2x32xf32>,
    %c4_81 = arith.constant 4 : index
    %c0_82 = arith.constant 0 : index
    %c0_83 = arith.constant 0 : index
    %285 = vector.load %arg1[%c4_81, %c0_82, %c0_83] : memref<8x2x128xbf16, #tpu.memory_space<vmem>>, vector<1x2x128xbf16>
    %286 = vector.shape_cast %285 : vector<1x2x128xbf16> to vector<2x128xbf16>
    %287 = arith.extf %286 : vector<2x128xbf16> to vector<2x128xf32>
    %288 = arith.truncf %247 : vector<2x32xf32> to vector<2x32xbf16>
    %cst_84 = arith.constant dense<0.000000e+00> : vector<2x128xf32>
    %289 = tpu.matmul %288, %11, %cst_84 {dimension_numbers = #tpu.dot_dimension_numbers<[1], [0], [0], [1], [0, 0, 1, 1], [], []>} : vector<2x32xbf16>, vector<32x128xbf16>, vector<2x128xf32> -> vector<2x128xf32>
    %290 = arith.addf %287, %289 : vector<2x128xf32>
    %291 = vector.extract_strided_slice %290 {offsets = [0, 0], sizes = [2, 32], strides = [1, 1]} : vector<2x128xf32> to vector<2x32xf32>
    %292 = arith.negf %291 : vector<2x32xf32>
    %293 = math.exp %292 : vector<2x32xf32>
    %cst_85 = arith.constant 1.000000e+00 : f32
    %294 = vector.broadcast %cst_85 : f32 to vector<2x32xf32>
    %295 = arith.addf %294, %293 : vector<2x32xf32>
    %296 = arith.divf %294, %295 : vector<2x32xf32>
    %297 = vector.extract_strided_slice %290 {offsets = [0, 32], sizes = [2, 32], strides = [1, 1]} : vector<2x128xf32> to vector<2x32xf32>
    %298 = arith.negf %297 : vector<2x32xf32>
    %299 = math.exp %298 : vector<2x32xf32>
    %cst_86 = arith.constant 1.000000e+00 : f32
    %300 = vector.broadcast %cst_86 : f32 to vector<2x32xf32>
    %301 = arith.addf %300, %299 : vector<2x32xf32>
    %302 = arith.divf %300, %301 : vector<2x32xf32>
    %303 = vector.extract_strided_slice %290 {offsets = [0, 64], sizes = [2, 32], strides = [1, 1]} : vector<2x128xf32> to vector<2x32xf32>
    %304 = math.tanh %303 : vector<2x32xf32>
    %305 = vector.extract_strided_slice %290 {offsets = [0, 96], sizes = [2, 32], strides = [1, 1]} : vector<2x128xf32> to vector<2x32xf32>
    %306 = arith.negf %305 : vector<2x32xf32>
    %307 = math.exp %306 : vector<2x32xf32>
    %cst_87 = arith.constant 1.000000e+00 : f32
    %308 = vector.broadcast %cst_87 : f32 to vector<2x32xf32>
    %309 = arith.addf %308, %307 : vector<2x32xf32>
    %310 = arith.divf %308, %309 : vector<2x32xf32>
    %311 = arith.mulf %302, %245 : vector<2x32xf32>
    %312 = arith.mulf %296, %304 : vector<2x32xf32>
    %313 = arith.addf %311, %312 : vector<2x32xf32>
    %314 = math.tanh %313 : vector<2x32xf32>
    %315 = arith.mulf %310, %314 : vector<2x32xf32>
    %c0_88 = arith.constant 0 : index
    %c0_89 = arith.constant 0 : index
    %c128_90 = arith.constant 128 : index
    %316 = vector.load %arg7[%c0_88, %c0_89, %c128_90] : memref<1x2x256xf32, #tpu.memory_space<vmem>>, vector<1x2x32xf32>
    %317 = vector.shape_cast %316 : vector<1x2x32xf32> to vector<2x32xf32>
    %318 = vector.shape_cast %315 : vector<2x32xf32> to vector<1x2x32xf32>
    tpu.vector_store %arg7[%c0_88, %c0_89, %c128_90], %318 {strides = array<i32>} : memref<1x2x256xf32, #tpu.memory_space<vmem>>, vector<1x2x32xf32>,
    %c3_91 = arith.constant 3 : index
    %c0_92 = arith.constant 0 : index
    %c0_93 = arith.constant 0 : index
    %319 = vector.load %arg2[%c3_91, %c0_92, %c0_93] : memref<8x2x128xbf16, #tpu.memory_space<vmem>>, vector<1x2x128xbf16>
    %320 = vector.shape_cast %319 : vector<1x2x128xbf16> to vector<2x128xbf16>
    %321 = arith.extf %320 : vector<2x128xbf16> to vector<2x128xf32>
    %322 = arith.truncf %281 : vector<2x32xf32> to vector<2x32xbf16>
    %cst_94 = arith.constant dense<0.000000e+00> : vector<2x128xf32>
    %323 = tpu.matmul %322, %12, %cst_94 {dimension_numbers = #tpu.dot_dimension_numbers<[1], [0], [0], [1], [0, 0, 1, 1], [], []>} : vector<2x32xbf16>, vector<32x128xbf16>, vector<2x128xf32> -> vector<2x128xf32>
    %324 = arith.addf %321, %323 : vector<2x128xf32>
    %325 = vector.extract_strided_slice %324 {offsets = [0, 0], sizes = [2, 32], strides = [1, 1]} : vector<2x128xf32> to vector<2x32xf32>
    %326 = arith.negf %325 : vector<2x32xf32>
    %327 = math.exp %326 : vector<2x32xf32>
    %cst_95 = arith.constant 1.000000e+00 : f32
    %328 = vector.broadcast %cst_95 : f32 to vector<2x32xf32>
    %329 = arith.addf %328, %327 : vector<2x32xf32>
    %330 = arith.divf %328, %329 : vector<2x32xf32>
    %331 = vector.extract_strided_slice %324 {offsets = [0, 32], sizes = [2, 32], strides = [1, 1]} : vector<2x128xf32> to vector<2x32xf32>
    %332 = arith.negf %331 : vector<2x32xf32>
    %333 = math.exp %332 : vector<2x32xf32>
    %cst_96 = arith.constant 1.000000e+00 : f32
    %334 = vector.broadcast %cst_96 : f32 to vector<2x32xf32>
    %335 = arith.addf %334, %333 : vector<2x32xf32>
    %336 = arith.divf %334, %335 : vector<2x32xf32>
    %337 = vector.extract_strided_slice %324 {offsets = [0, 64], sizes = [2, 32], strides = [1, 1]} : vector<2x128xf32> to vector<2x32xf32>
    %338 = math.tanh %337 : vector<2x32xf32>
    %339 = vector.extract_strided_slice %324 {offsets = [0, 96], sizes = [2, 32], strides = [1, 1]} : vector<2x128xf32> to vector<2x32xf32>
    %340 = arith.negf %339 : vector<2x32xf32>
    %341 = math.exp %340 : vector<2x32xf32>
    %cst_97 = arith.constant 1.000000e+00 : f32
    %342 = vector.broadcast %cst_97 : f32 to vector<2x32xf32>
    %343 = arith.addf %342, %341 : vector<2x32xf32>
    %344 = arith.divf %342, %343 : vector<2x32xf32>
    %345 = arith.mulf %336, %279 : vector<2x32xf32>
    %346 = arith.mulf %330, %338 : vector<2x32xf32>
    %347 = arith.addf %345, %346 : vector<2x32xf32>
    %348 = math.tanh %347 : vector<2x32xf32>
    %349 = arith.mulf %344, %348 : vector<2x32xf32>
    %c0_98 = arith.constant 0 : index
    %c0_99 = arith.constant 0 : index
    %c96_100 = arith.constant 96 : index
    %350 = vector.load %arg8[%c0_98, %c0_99, %c96_100] : memref<1x2x256xf32, #tpu.memory_space<vmem>>, vector<1x2x32xf32>
    %351 = vector.shape_cast %350 : vector<1x2x32xf32> to vector<2x32xf32>
    %352 = vector.shape_cast %349 : vector<2x32xf32> to vector<1x2x32xf32>
    tpu.vector_store %arg8[%c0_98, %c0_99, %c96_100], %352 {strides = array<i32>} : memref<1x2x256xf32, #tpu.memory_space<vmem>>, vector<1x2x32xf32>,
    %c5_101 = arith.constant 5 : index
    %c0_102 = arith.constant 0 : index
    %c0_103 = arith.constant 0 : index
    %353 = vector.load %arg1[%c5_101, %c0_102, %c0_103] : memref<8x2x128xbf16, #tpu.memory_space<vmem>>, vector<1x2x128xbf16>
    %354 = vector.shape_cast %353 : vector<1x2x128xbf16> to vector<2x128xbf16>
    %355 = arith.extf %354 : vector<2x128xbf16> to vector<2x128xf32>
    %356 = arith.truncf %315 : vector<2x32xf32> to vector<2x32xbf16>
    %cst_104 = arith.constant dense<0.000000e+00> : vector<2x128xf32>
    %357 = tpu.matmul %356, %11, %cst_104 {dimension_numbers = #tpu.dot_dimension_numbers<[1], [0], [0], [1], [0, 0, 1, 1], [], []>} : vector<2x32xbf16>, vector<32x128xbf16>, vector<2x128xf32> -> vector<2x128xf32>
    %358 = arith.addf %355, %357 : vector<2x128xf32>
    %359 = vector.extract_strided_slice %358 {offsets = [0, 0], sizes = [2, 32], strides = [1, 1]} : vector<2x128xf32> to vector<2x32xf32>
    %360 = arith.negf %359 : vector<2x32xf32>
    %361 = math.exp %360 : vector<2x32xf32>
    %cst_105 = arith.constant 1.000000e+00 : f32
    %362 = vector.broadcast %cst_105 : f32 to vector<2x32xf32>
    %363 = arith.addf %362, %361 : vector<2x32xf32>
    %364 = arith.divf %362, %363 : vector<2x32xf32>
    %365 = vector.extract_strided_slice %358 {offsets = [0, 32], sizes = [2, 32], strides = [1, 1]} : vector<2x128xf32> to vector<2x32xf32>
    %366 = arith.negf %365 : vector<2x32xf32>
    %367 = math.exp %366 : vector<2x32xf32>
    %cst_106 = arith.constant 1.000000e+00 : f32
    %368 = vector.broadcast %cst_106 : f32 to vector<2x32xf32>
    %369 = arith.addf %368, %367 : vector<2x32xf32>
    %370 = arith.divf %368, %369 : vector<2x32xf32>
    %371 = vector.extract_strided_slice %358 {offsets = [0, 64], sizes = [2, 32], strides = [1, 1]} : vector<2x128xf32> to vector<2x32xf32>
    %372 = math.tanh %371 : vector<2x32xf32>
    %373 = vector.extract_strided_slice %358 {offsets = [0, 96], sizes = [2, 32], strides = [1, 1]} : vector<2x128xf32> to vector<2x32xf32>
    %374 = arith.negf %373 : vector<2x32xf32>
    %375 = math.exp %374 : vector<2x32xf32>
    %cst_107 = arith.constant 1.000000e+00 : f32
    %376 = vector.broadcast %cst_107 : f32 to vector<2x32xf32>
    %377 = arith.addf %376, %375 : vector<2x32xf32>
    %378 = arith.divf %376, %377 : vector<2x32xf32>
    %379 = arith.mulf %370, %313 : vector<2x32xf32>
    %380 = arith.mulf %364, %372 : vector<2x32xf32>
    %381 = arith.addf %379, %380 : vector<2x32xf32>
    %382 = math.tanh %381 : vector<2x32xf32>
    %383 = arith.mulf %378, %382 : vector<2x32xf32>
    %c0_108 = arith.constant 0 : index
    %c0_109 = arith.constant 0 : index
    %c160_110 = arith.constant 160 : index
    %384 = vector.load %arg7[%c0_108, %c0_109, %c160_110] : memref<1x2x256xf32, #tpu.memory_space<vmem>>, vector<1x2x32xf32>
    %385 = vector.shape_cast %384 : vector<1x2x32xf32> to vector<2x32xf32>
    %386 = vector.shape_cast %383 : vector<2x32xf32> to vector<1x2x32xf32>
    tpu.vector_store %arg7[%c0_108, %c0_109, %c160_110], %386 {strides = array<i32>} : memref<1x2x256xf32, #tpu.memory_space<vmem>>, vector<1x2x32xf32>,
    %c2_111 = arith.constant 2 : index
    %c0_112 = arith.constant 0 : index
    %c0_113 = arith.constant 0 : index
    %387 = vector.load %arg2[%c2_111, %c0_112, %c0_113] : memref<8x2x128xbf16, #tpu.memory_space<vmem>>, vector<1x2x128xbf16>
    %388 = vector.shape_cast %387 : vector<1x2x128xbf16> to vector<2x128xbf16>
    %389 = arith.extf %388 : vector<2x128xbf16> to vector<2x128xf32>
    %390 = arith.truncf %349 : vector<2x32xf32> to vector<2x32xbf16>
    %cst_114 = arith.constant dense<0.000000e+00> : vector<2x128xf32>
    %391 = tpu.matmul %390, %12, %cst_114 {dimension_numbers = #tpu.dot_dimension_numbers<[1], [0], [0], [1], [0, 0, 1, 1], [], []>} : vector<2x32xbf16>, vector<32x128xbf16>, vector<2x128xf32> -> vector<2x128xf32>
    %392 = arith.addf %389, %391 : vector<2x128xf32>
    %393 = vector.extract_strided_slice %392 {offsets = [0, 0], sizes = [2, 32], strides = [1, 1]} : vector<2x128xf32> to vector<2x32xf32>
    %394 = arith.negf %393 : vector<2x32xf32>
    %395 = math.exp %394 : vector<2x32xf32>
    %cst_115 = arith.constant 1.000000e+00 : f32
    %396 = vector.broadcast %cst_115 : f32 to vector<2x32xf32>
    %397 = arith.addf %396, %395 : vector<2x32xf32>
    %398 = arith.divf %396, %397 : vector<2x32xf32>
    %399 = vector.extract_strided_slice %392 {offsets = [0, 32], sizes = [2, 32], strides = [1, 1]} : vector<2x128xf32> to vector<2x32xf32>
    %400 = arith.negf %399 : vector<2x32xf32>
    %401 = math.exp %400 : vector<2x32xf32>
    %cst_116 = arith.constant 1.000000e+00 : f32
    %402 = vector.broadcast %cst_116 : f32 to vector<2x32xf32>
    %403 = arith.addf %402, %401 : vector<2x32xf32>
    %404 = arith.divf %402, %403 : vector<2x32xf32>
    %405 = vector.extract_strided_slice %392 {offsets = [0, 64], sizes = [2, 32], strides = [1, 1]} : vector<2x128xf32> to vector<2x32xf32>
    %406 = math.tanh %405 : vector<2x32xf32>
    %407 = vector.extract_strided_slice %392 {offsets = [0, 96], sizes = [2, 32], strides = [1, 1]} : vector<2x128xf32> to vector<2x32xf32>
    %408 = arith.negf %407 : vector<2x32xf32>
    %409 = math.exp %408 : vector<2x32xf32>
    %cst_117 = arith.constant 1.000000e+00 : f32
    %410 = vector.broadcast %cst_117 : f32 to vector<2x32xf32>
    %411 = arith.addf %410, %409 : vector<2x32xf32>
    %412 = arith.divf %410, %411 : vector<2x32xf32>
    %413 = arith.mulf %404, %347 : vector<2x32xf32>
    %414 = arith.mulf %398, %406 : vector<2x32xf32>
    %415 = arith.addf %413, %414 : vector<2x32xf32>
    %416 = math.tanh %415 : vector<2x32xf32>
    %417 = arith.mulf %412, %416 : vector<2x32xf32>
    %c0_118 = arith.constant 0 : index
    %c0_119 = arith.constant 0 : index
    %c64_120 = arith.constant 64 : index
    %418 = vector.load %arg8[%c0_118, %c0_119, %c64_120] : memref<1x2x256xf32, #tpu.memory_space<vmem>>, vector<1x2x32xf32>
    %419 = vector.shape_cast %418 : vector<1x2x32xf32> to vector<2x32xf32>
    %420 = vector.shape_cast %417 : vector<2x32xf32> to vector<1x2x32xf32>
    tpu.vector_store %arg8[%c0_118, %c0_119, %c64_120], %420 {strides = array<i32>} : memref<1x2x256xf32, #tpu.memory_space<vmem>>, vector<1x2x32xf32>,
    %c6_121 = arith.constant 6 : index
    %c0_122 = arith.constant 0 : index
    %c0_123 = arith.constant 0 : index
    %421 = vector.load %arg1[%c6_121, %c0_122, %c0_123] : memref<8x2x128xbf16, #tpu.memory_space<vmem>>, vector<1x2x128xbf16>
    %422 = vector.shape_cast %421 : vector<1x2x128xbf16> to vector<2x128xbf16>
    %423 = arith.extf %422 : vector<2x128xbf16> to vector<2x128xf32>
    %424 = arith.truncf %383 : vector<2x32xf32> to vector<2x32xbf16>
    %cst_124 = arith.constant dense<0.000000e+00> : vector<2x128xf32>
    %425 = tpu.matmul %424, %11, %cst_124 {dimension_numbers = #tpu.dot_dimension_numbers<[1], [0], [0], [1], [0, 0, 1, 1], [], []>} : vector<2x32xbf16>, vector<32x128xbf16>, vector<2x128xf32> -> vector<2x128xf32>
    %426 = arith.addf %423, %425 : vector<2x128xf32>
    %427 = vector.extract_strided_slice %426 {offsets = [0, 0], sizes = [2, 32], strides = [1, 1]} : vector<2x128xf32> to vector<2x32xf32>
    %428 = arith.negf %427 : vector<2x32xf32>
    %429 = math.exp %428 : vector<2x32xf32>
    %cst_125 = arith.constant 1.000000e+00 : f32
    %430 = vector.broadcast %cst_125 : f32 to vector<2x32xf32>
    %431 = arith.addf %430, %429 : vector<2x32xf32>
    %432 = arith.divf %430, %431 : vector<2x32xf32>
    %433 = vector.extract_strided_slice %426 {offsets = [0, 32], sizes = [2, 32], strides = [1, 1]} : vector<2x128xf32> to vector<2x32xf32>
    %434 = arith.negf %433 : vector<2x32xf32>
    %435 = math.exp %434 : vector<2x32xf32>
    %cst_126 = arith.constant 1.000000e+00 : f32
    %436 = vector.broadcast %cst_126 : f32 to vector<2x32xf32>
    %437 = arith.addf %436, %435 : vector<2x32xf32>
    %438 = arith.divf %436, %437 : vector<2x32xf32>
    %439 = vector.extract_strided_slice %426 {offsets = [0, 64], sizes = [2, 32], strides = [1, 1]} : vector<2x128xf32> to vector<2x32xf32>
    %440 = math.tanh %439 : vector<2x32xf32>
    %441 = vector.extract_strided_slice %426 {offsets = [0, 96], sizes = [2, 32], strides = [1, 1]} : vector<2x128xf32> to vector<2x32xf32>
    %442 = arith.negf %441 : vector<2x32xf32>
    %443 = math.exp %442 : vector<2x32xf32>
    %cst_127 = arith.constant 1.000000e+00 : f32
    %444 = vector.broadcast %cst_127 : f32 to vector<2x32xf32>
    %445 = arith.addf %444, %443 : vector<2x32xf32>
    %446 = arith.divf %444, %445 : vector<2x32xf32>
    %447 = arith.mulf %438, %381 : vector<2x32xf32>
    %448 = arith.mulf %432, %440 : vector<2x32xf32>
    %449 = arith.addf %447, %448 : vector<2x32xf32>
    %450 = math.tanh %449 : vector<2x32xf32>
    %451 = arith.mulf %446, %450 : vector<2x32xf32>
    %c0_128 = arith.constant 0 : index
    %c0_129 = arith.constant 0 : index
    %c192_130 = arith.constant 192 : index
    %452 = vector.load %arg7[%c0_128, %c0_129, %c192_130] : memref<1x2x256xf32, #tpu.memory_space<vmem>>, vector<1x2x32xf32>
    %453 = vector.shape_cast %452 : vector<1x2x32xf32> to vector<2x32xf32>
    %454 = vector.shape_cast %451 : vector<2x32xf32> to vector<1x2x32xf32>
    tpu.vector_store %arg7[%c0_128, %c0_129, %c192_130], %454 {strides = array<i32>} : memref<1x2x256xf32, #tpu.memory_space<vmem>>, vector<1x2x32xf32>,
    %c1_131 = arith.constant 1 : index
    %c0_132 = arith.constant 0 : index
    %c0_133 = arith.constant 0 : index
    %455 = vector.load %arg2[%c1_131, %c0_132, %c0_133] : memref<8x2x128xbf16, #tpu.memory_space<vmem>>, vector<1x2x128xbf16>
    %456 = vector.shape_cast %455 : vector<1x2x128xbf16> to vector<2x128xbf16>
    %457 = arith.extf %456 : vector<2x128xbf16> to vector<2x128xf32>
    %458 = arith.truncf %417 : vector<2x32xf32> to vector<2x32xbf16>
    %cst_134 = arith.constant dense<0.000000e+00> : vector<2x128xf32>
    %459 = tpu.matmul %458, %12, %cst_134 {dimension_numbers = #tpu.dot_dimension_numbers<[1], [0], [0], [1], [0, 0, 1, 1], [], []>} : vector<2x32xbf16>, vector<32x128xbf16>, vector<2x128xf32> -> vector<2x128xf32>
    %460 = arith.addf %457, %459 : vector<2x128xf32>
    %461 = vector.extract_strided_slice %460 {offsets = [0, 0], sizes = [2, 32], strides = [1, 1]} : vector<2x128xf32> to vector<2x32xf32>
    %462 = arith.negf %461 : vector<2x32xf32>
    %463 = math.exp %462 : vector<2x32xf32>
    %cst_135 = arith.constant 1.000000e+00 : f32
    %464 = vector.broadcast %cst_135 : f32 to vector<2x32xf32>
    %465 = arith.addf %464, %463 : vector<2x32xf32>
    %466 = arith.divf %464, %465 : vector<2x32xf32>
    %467 = vector.extract_strided_slice %460 {offsets = [0, 32], sizes = [2, 32], strides = [1, 1]} : vector<2x128xf32> to vector<2x32xf32>
    %468 = arith.negf %467 : vector<2x32xf32>
    %469 = math.exp %468 : vector<2x32xf32>
    %cst_136 = arith.constant 1.000000e+00 : f32
    %470 = vector.broadcast %cst_136 : f32 to vector<2x32xf32>
    %471 = arith.addf %470, %469 : vector<2x32xf32>
    %472 = arith.divf %470, %471 : vector<2x32xf32>
    %473 = vector.extract_strided_slice %460 {offsets = [0, 64], sizes = [2, 32], strides = [1, 1]} : vector<2x128xf32> to vector<2x32xf32>
    %474 = math.tanh %473 : vector<2x32xf32>
    %475 = vector.extract_strided_slice %460 {offsets = [0, 96], sizes = [2, 32], strides = [1, 1]} : vector<2x128xf32> to vector<2x32xf32>
    %476 = arith.negf %475 : vector<2x32xf32>
    %477 = math.exp %476 : vector<2x32xf32>
    %cst_137 = arith.constant 1.000000e+00 : f32
    %478 = vector.broadcast %cst_137 : f32 to vector<2x32xf32>
    %479 = arith.addf %478, %477 : vector<2x32xf32>
    %480 = arith.divf %478, %479 : vector<2x32xf32>
    %481 = arith.mulf %472, %415 : vector<2x32xf32>
    %482 = arith.mulf %466, %474 : vector<2x32xf32>
    %483 = arith.addf %481, %482 : vector<2x32xf32>
    %484 = math.tanh %483 : vector<2x32xf32>
    %485 = arith.mulf %480, %484 : vector<2x32xf32>
    %c0_138 = arith.constant 0 : index
    %c0_139 = arith.constant 0 : index
    %c32_140 = arith.constant 32 : index
    %486 = vector.load %arg8[%c0_138, %c0_139, %c32_140] : memref<1x2x256xf32, #tpu.memory_space<vmem>>, vector<1x2x32xf32>
    %487 = vector.shape_cast %486 : vector<1x2x32xf32> to vector<2x32xf32>
    %488 = vector.shape_cast %485 : vector<2x32xf32> to vector<1x2x32xf32>
    tpu.vector_store %arg8[%c0_138, %c0_139, %c32_140], %488 {strides = array<i32>} : memref<1x2x256xf32, #tpu.memory_space<vmem>>, vector<1x2x32xf32>,
    %c7_141 = arith.constant 7 : index
    %c0_142 = arith.constant 0 : index
    %c0_143 = arith.constant 0 : index
    %489 = vector.load %arg1[%c7_141, %c0_142, %c0_143] : memref<8x2x128xbf16, #tpu.memory_space<vmem>>, vector<1x2x128xbf16>
    %490 = vector.shape_cast %489 : vector<1x2x128xbf16> to vector<2x128xbf16>
    %491 = arith.extf %490 : vector<2x128xbf16> to vector<2x128xf32>
    %492 = arith.truncf %451 : vector<2x32xf32> to vector<2x32xbf16>
    %cst_144 = arith.constant dense<0.000000e+00> : vector<2x128xf32>
    %493 = tpu.matmul %492, %11, %cst_144 {dimension_numbers = #tpu.dot_dimension_numbers<[1], [0], [0], [1], [0, 0, 1, 1], [], []>} : vector<2x32xbf16>, vector<32x128xbf16>, vector<2x128xf32> -> vector<2x128xf32>
    %494 = arith.addf %491, %493 : vector<2x128xf32>
    %495 = vector.extract_strided_slice %494 {offsets = [0, 0], sizes = [2, 32], strides = [1, 1]} : vector<2x128xf32> to vector<2x32xf32>
    %496 = arith.negf %495 : vector<2x32xf32>
    %497 = math.exp %496 : vector<2x32xf32>
    %cst_145 = arith.constant 1.000000e+00 : f32
    %498 = vector.broadcast %cst_145 : f32 to vector<2x32xf32>
    %499 = arith.addf %498, %497 : vector<2x32xf32>
    %500 = arith.divf %498, %499 : vector<2x32xf32>
    %501 = vector.extract_strided_slice %494 {offsets = [0, 32], sizes = [2, 32], strides = [1, 1]} : vector<2x128xf32> to vector<2x32xf32>
    %502 = arith.negf %501 : vector<2x32xf32>
    %503 = math.exp %502 : vector<2x32xf32>
    %cst_146 = arith.constant 1.000000e+00 : f32
    %504 = vector.broadcast %cst_146 : f32 to vector<2x32xf32>
    %505 = arith.addf %504, %503 : vector<2x32xf32>
    %506 = arith.divf %504, %505 : vector<2x32xf32>
    %507 = vector.extract_strided_slice %494 {offsets = [0, 64], sizes = [2, 32], strides = [1, 1]} : vector<2x128xf32> to vector<2x32xf32>
    %508 = math.tanh %507 : vector<2x32xf32>
    %509 = vector.extract_strided_slice %494 {offsets = [0, 96], sizes = [2, 32], strides = [1, 1]} : vector<2x128xf32> to vector<2x32xf32>
    %510 = arith.negf %509 : vector<2x32xf32>
    %511 = math.exp %510 : vector<2x32xf32>
    %cst_147 = arith.constant 1.000000e+00 : f32
    %512 = vector.broadcast %cst_147 : f32 to vector<2x32xf32>
    %513 = arith.addf %512, %511 : vector<2x32xf32>
    %514 = arith.divf %512, %513 : vector<2x32xf32>
    %515 = arith.mulf %506, %449 : vector<2x32xf32>
    %516 = arith.mulf %500, %508 : vector<2x32xf32>
    %517 = arith.addf %515, %516 : vector<2x32xf32>
    %518 = math.tanh %517 : vector<2x32xf32>
    %519 = arith.mulf %514, %518 : vector<2x32xf32>
    %c0_148 = arith.constant 0 : index
    %c0_149 = arith.constant 0 : index
    %c224_150 = arith.constant 224 : index
    %520 = vector.load %arg7[%c0_148, %c0_149, %c224_150] : memref<1x2x256xf32, #tpu.memory_space<vmem>>, vector<1x2x32xf32>
    %521 = vector.shape_cast %520 : vector<1x2x32xf32> to vector<2x32xf32>
    %522 = vector.shape_cast %519 : vector<2x32xf32> to vector<1x2x32xf32>
    tpu.vector_store %arg7[%c0_148, %c0_149, %c224_150], %522 {strides = array<i32>} : memref<1x2x256xf32, #tpu.memory_space<vmem>>, vector<1x2x32xf32>,
    %c0_151 = arith.constant 0 : index
    %c0_152 = arith.constant 0 : index
    %c0_153 = arith.constant 0 : index
    %523 = vector.load %arg2[%c0_151, %c0_152, %c0_153] : memref<8x2x128xbf16, #tpu.memory_space<vmem>>, vector<1x2x128xbf16>
    %524 = vector.shape_cast %523 : vector<1x2x128xbf16> to vector<2x128xbf16>
    %525 = arith.extf %524 : vector<2x128xbf16> to vector<2x128xf32>
    %526 = arith.truncf %485 : vector<2x32xf32> to vector<2x32xbf16>
    %cst_154 = arith.constant dense<0.000000e+00> : vector<2x128xf32>
    %527 = tpu.matmul %526, %12, %cst_154 {dimension_numbers = #tpu.dot_dimension_numbers<[1], [0], [0], [1], [0, 0, 1, 1], [], []>} : vector<2x32xbf16>, vector<32x128xbf16>, vector<2x128xf32> -> vector<2x128xf32>
    %528 = arith.addf %525, %527 : vector<2x128xf32>
    %529 = vector.extract_strided_slice %528 {offsets = [0, 0], sizes = [2, 32], strides = [1, 1]} : vector<2x128xf32> to vector<2x32xf32>
    %530 = arith.negf %529 : vector<2x32xf32>
    %531 = math.exp %530 : vector<2x32xf32>
    %cst_155 = arith.constant 1.000000e+00 : f32
    %532 = vector.broadcast %cst_155 : f32 to vector<2x32xf32>
    %533 = arith.addf %532, %531 : vector<2x32xf32>
    %534 = arith.divf %532, %533 : vector<2x32xf32>
    %535 = vector.extract_strided_slice %528 {offsets = [0, 32], sizes = [2, 32], strides = [1, 1]} : vector<2x128xf32> to vector<2x32xf32>
    %536 = arith.negf %535 : vector<2x32xf32>
    %537 = math.exp %536 : vector<2x32xf32>
    %cst_156 = arith.constant 1.000000e+00 : f32
    %538 = vector.broadcast %cst_156 : f32 to vector<2x32xf32>
    %539 = arith.addf %538, %537 : vector<2x32xf32>
    %540 = arith.divf %538, %539 : vector<2x32xf32>
    %541 = vector.extract_strided_slice %528 {offsets = [0, 64], sizes = [2, 32], strides = [1, 1]} : vector<2x128xf32> to vector<2x32xf32>
    %542 = math.tanh %541 : vector<2x32xf32>
    %543 = vector.extract_strided_slice %528 {offsets = [0, 96], sizes = [2, 32], strides = [1, 1]} : vector<2x128xf32> to vector<2x32xf32>
    %544 = arith.negf %543 : vector<2x32xf32>
    %545 = math.exp %544 : vector<2x32xf32>
    %cst_157 = arith.constant 1.000000e+00 : f32
    %546 = vector.broadcast %cst_157 : f32 to vector<2x32xf32>
    %547 = arith.addf %546, %545 : vector<2x32xf32>
    %548 = arith.divf %546, %547 : vector<2x32xf32>
    %549 = arith.mulf %540, %483 : vector<2x32xf32>
    %550 = arith.mulf %534, %542 : vector<2x32xf32>
    %551 = arith.addf %549, %550 : vector<2x32xf32>
    %552 = math.tanh %551 : vector<2x32xf32>
    %553 = arith.mulf %548, %552 : vector<2x32xf32>
    %c0_158 = arith.constant 0 : index
    %c0_159 = arith.constant 0 : index
    %c0_160 = arith.constant 0 : index
    %554 = vector.load %arg8[%c0_158, %c0_159, %c0_160] : memref<1x2x256xf32, #tpu.memory_space<vmem>>, vector<1x2x32xf32>
    %555 = vector.shape_cast %554 : vector<1x2x32xf32> to vector<2x32xf32>
    %556 = vector.shape_cast %553 : vector<2x32xf32> to vector<1x2x32xf32>
    tpu.vector_store %arg8[%c0_158, %c0_159, %c0_160], %556 {strides = array<i32>} : memref<1x2x256xf32, #tpu.memory_space<vmem>>, vector<1x2x32xf32>,
    %c0_161 = arith.constant 0 : index
    %c0_162 = arith.constant 0 : index
    %c0_163 = arith.constant 0 : index
    %557 = vector.load %arg11[%c0_161, %c0_162, %c0_163] : memref<2x2x32xf32, #tpu.memory_space<vmem>>, vector<1x2x32xf32>
    %558 = vector.shape_cast %557 : vector<1x2x32xf32> to vector<2x32xf32>
    %559 = vector.shape_cast %519 : vector<2x32xf32> to vector<1x2x32xf32>
    tpu.vector_store %arg11[%c0_161, %c0_162, %c0_163], %559 {strides = array<i32>} : memref<2x2x32xf32, #tpu.memory_space<vmem>>, vector<1x2x32xf32>,
    %c0_164 = arith.constant 0 : index
    %c0_165 = arith.constant 0 : index
    %c0_166 = arith.constant 0 : index
    %560 = vector.load %arg12[%c0_164, %c0_165, %c0_166] : memref<2x2x32xf32, #tpu.memory_space<vmem>>, vector<1x2x32xf32>
    %561 = vector.shape_cast %560 : vector<1x2x32xf32> to vector<2x32xf32>
    %562 = vector.shape_cast %517 : vector<2x32xf32> to vector<1x2x32xf32>
    tpu.vector_store %arg12[%c0_164, %c0_165, %c0_166], %562 {strides = array<i32>} : memref<2x2x32xf32, #tpu.memory_space<vmem>>, vector<1x2x32xf32>,
    %c1_167 = arith.constant 1 : index
    %c0_168 = arith.constant 0 : index
    %c0_169 = arith.constant 0 : index
    %563 = vector.load %arg11[%c1_167, %c0_168, %c0_169] : memref<2x2x32xf32, #tpu.memory_space<vmem>>, vector<1x2x32xf32>
    %564 = vector.shape_cast %563 : vector<1x2x32xf32> to vector<2x32xf32>
    %565 = vector.shape_cast %553 : vector<2x32xf32> to vector<1x2x32xf32>
    tpu.vector_store %arg11[%c1_167, %c0_168, %c0_169], %565 {strides = array<i32>} : memref<2x2x32xf32, #tpu.memory_space<vmem>>, vector<1x2x32xf32>,
    %c1_170 = arith.constant 1 : index
    %c0_171 = arith.constant 0 : index
    %c0_172 = arith.constant 0 : index
    %566 = vector.load %arg12[%c1_170, %c0_171, %c0_172] : memref<2x2x32xf32, #tpu.memory_space<vmem>>, vector<1x2x32xf32>
    %567 = vector.shape_cast %566 : vector<1x2x32xf32> to vector<2x32xf32>
    %568 = vector.shape_cast %551 : vector<2x32xf32> to vector<1x2x32xf32>
    tpu.vector_store %arg12[%c1_170, %c0_171, %c0_172], %568 {strides = array<i32>} : memref<2x2x32xf32, #tpu.memory_space<vmem>>, vector<1x2x32xf32>,
    %c0_i32_173 = arith.constant 0 : i32
    %569 = arith.cmpi eq, %arg0, %c0_i32_173 : i32
    %570 = arith.extui %569 : i1 to i32
    %c0_i32_174 = arith.constant 0 : i32
    %571 = arith.cmpi ne, %570, %c0_i32_174 : i32
    scf.if %571 {
      %c0_175 = arith.constant 0 : index
      %c0_176 = arith.constant 0 : index
      %c0_177 = arith.constant 0 : index
      %572 = vector.load %arg9[%c0_175, %c0_176, %c0_177] : memref<2x2x32xf32, #tpu.memory_space<vmem>>, vector<1x2x32xf32>
      %573 = vector.shape_cast %572 : vector<1x2x32xf32> to vector<2x32xf32>
      %574 = vector.shape_cast %519 : vector<2x32xf32> to vector<1x2x32xf32>
      tpu.vector_store %arg9[%c0_175, %c0_176, %c0_177], %574 {strides = array<i32>} : memref<2x2x32xf32, #tpu.memory_space<vmem>>, vector<1x2x32xf32>,
      %c0_178 = arith.constant 0 : index
      %c0_179 = arith.constant 0 : index
      %c0_180 = arith.constant 0 : index
      %575 = vector.load %arg10[%c0_178, %c0_179, %c0_180] : memref<2x2x32xf32, #tpu.memory_space<vmem>>, vector<1x2x32xf32>
      %576 = vector.shape_cast %575 : vector<1x2x32xf32> to vector<2x32xf32>
      %577 = vector.shape_cast %517 : vector<2x32xf32> to vector<1x2x32xf32>
      tpu.vector_store %arg10[%c0_178, %c0_179, %c0_180], %577 {strides = array<i32>} : memref<2x2x32xf32, #tpu.memory_space<vmem>>, vector<1x2x32xf32>,
      %c1_181 = arith.constant 1 : index
      %c0_182 = arith.constant 0 : index
      %c0_183 = arith.constant 0 : index
      %578 = vector.load %arg9[%c1_181, %c0_182, %c0_183] : memref<2x2x32xf32, #tpu.memory_space<vmem>>, vector<1x2x32xf32>
      %579 = vector.shape_cast %578 : vector<1x2x32xf32> to vector<2x32xf32>
      %580 = vector.shape_cast %553 : vector<2x32xf32> to vector<1x2x32xf32>
      tpu.vector_store %arg9[%c1_181, %c0_182, %c0_183], %580 {strides = array<i32>} : memref<2x2x32xf32, #tpu.memory_space<vmem>>, vector<1x2x32xf32>,
      %c1_184 = arith.constant 1 : index
      %c0_185 = arith.constant 0 : index
      %c0_186 = arith.constant 0 : index
      %581 = vector.load %arg10[%c1_184, %c0_185, %c0_186] : memref<2x2x32xf32, #tpu.memory_space<vmem>>, vector<1x2x32xf32>
      %582 = vector.shape_cast %581 : vector<1x2x32xf32> to vector<2x32xf32>
      %583 = vector.shape_cast %551 : vector<2x32xf32> to vector<1x2x32xf32>
      tpu.vector_store %arg10[%c1_184, %c0_185, %c0_186], %583 {strides = array<i32>} : memref<2x2x32xf32, #tpu.memory_space<vmem>>, vector<1x2x32xf32>,
    } else {
    }
    return
  }
  func.func @transform_0(%arg0: i32) -> (i32, i32, i32) {
    %c0_i32 = arith.constant 0 : i32
    %c0_i32_0 = arith.constant 0 : i32
    %c0_i32_1 = arith.constant 0 : i32
    return %arg0, %c0_i32, %c0_i32_0 : i32, i32, i32
  }
  func.func @transform_1(%arg0: i32) -> (i32, i32, i32) {
    %c0_i32 = arith.constant 0 : i32
    %0 = arith.subi %c0_i32, %arg0 : i32
    %c0_i32_0 = arith.constant 0 : i32
    %c0_i32_1 = arith.constant 0 : i32
    %c0_i32_2 = arith.constant 0 : i32
    return %0, %c0_i32_0, %c0_i32_1 : i32, i32, i32
  }
  func.func @transform_2(%arg0: i32) -> (i32, i32) {
    %c0_i32 = arith.constant 0 : i32
    %c0_i32_0 = arith.constant 0 : i32
    %c0_i32_1 = arith.constant 0 : i32
    return %c0_i32, %c0_i32_0 : i32, i32
  }
  func.func @transform_3(%arg0: i32) -> (i32, i32) {
    %c0_i32 = arith.constant 0 : i32
    %c0_i32_0 = arith.constant 0 : i32
    %c0_i32_1 = arith.constant 0 : i32
    return %c0_i32, %c0_i32_0 : i32, i32
  }
  func.func @transform_4(%arg0: i32) -> (i32, i32, i32) {
    %c0_i32 = arith.constant 0 : i32
    %c0_i32_0 = arith.constant 0 : i32
    %c0_i32_1 = arith.constant 0 : i32
    %c0_i32_2 = arith.constant 0 : i32
    return %c0_i32, %c0_i32_0, %c0_i32_1 : i32, i32, i32
  }
  func.func @transform_5(%arg0: i32) -> (i32, i32, i32) {
    %c0_i32 = arith.constant 0 : i32
    %c0_i32_0 = arith.constant 0 : i32
    %c0_i32_1 = arith.constant 0 : i32
    %c0_i32_2 = arith.constant 0 : i32
    return %c0_i32, %c0_i32_0, %c0_i32_1 : i32, i32, i32
  }
  func.func @transform_6(%arg0: i32) -> (i32, i32, i32) {
    %c0_i32 = arith.constant 0 : i32
    %c0_i32_0 = arith.constant 0 : i32
    %c0_i32_1 = arith.constant 0 : i32
    return %arg0, %c0_i32, %c0_i32_0 : i32, i32, i32
  }
  func.func @transform_7(%arg0: i32) -> (i32, i32, i32) {
    %c0_i32 = arith.constant 0 : i32
    %0 = arith.subi %c0_i32, %arg0 : i32
    %c0_i32_0 = arith.constant 0 : i32
    %c0_i32_1 = arith.constant 0 : i32
    %c0_i32_2 = arith.constant 0 : i32
    return %0, %c0_i32_0, %c0_i32_1 : i32, i32, i32
  }
  func.func @transform_8(%arg0: i32) -> (i32, i32, i32) {
    %c0_i32 = arith.constant 0 : i32
    %c0_i32_0 = arith.constant 0 : i32
    %c0_i32_1 = arith.constant 0 : i32
    %c0_i32_2 = arith.constant 0 : i32
    return %c0_i32, %c0_i32_0, %c0_i32_1 : i32, i32, i32
  }
  func.func @transform_9(%arg0: i32) -> (i32, i32, i32) {
    %c0_i32 = arith.constant 0 : i32
    %c0_i32_0 = arith.constant 0 : i32
    %c0_i32_1 = arith.constant 0 : i32
    %c0_i32_2 = arith.constant 0 : i32
    return %c0_i32, %c0_i32_0, %c0_i32_1 : i32, i32, i32
  }
}

</mosaic_0001>

<llo_original>
// kernel: encoder_forward.2
$region0: #{encoder_forward.2}
  #allocation0 [shape = 'u32[]', space=smem, size = 0x4, offset = 0x4, fixed_abs, tag = 'smem constant byte address 0x4 - core index']
  #allocation1 [shape = 'u32[144,128]{1,0:T(1,128)}', space=vmem, size = 0x12000, scoped, tag = 'internal scratch']
  #allocation2 [shape = 'f32[2,2,32]{2,1,0:T(2,128)}', space=vmem, size = 0x800, scoped, tag = 'scratch operand']
  #allocation3 [shape = 'f32[2,2,32]{2,1,0:T(2,128)}', space=vmem, size = 0x800, scoped, tag = 'scratch operand']
  %s0 = inlined_call_operand.vmem [shape: bf16[8,2,128], index: 0, kind: input, shape index: {}]
  %s1 = inlined_call_operand.vmem [shape: bf16[8,2,128], index: 1, kind: input, shape index: {}]
  %s2 = inlined_call_operand.vmem [shape: bf16[32,128], index: 2, kind: input, shape index: {}]
  %s3 = inlined_call_operand.vmem [shape: bf16[32,128], index: 3, kind: input, shape index: {}]
  %s4 = inlined_call_operand.vmem [shape: f32[2,2,32], index: 4, kind: input, shape index: {}]
  %s5 = inlined_call_operand.vmem [shape: f32[2,2,32], index: 5, kind: input, shape index: {}]
  %s6 = inlined_call_operand.vmem [shape: f32[1,2,256], index: 6, kind: output, shape index: {0}]
  %s7 = inlined_call_operand.vmem [shape: f32[1,2,256], index: 7, kind: output, shape index: {1}]
  %s8 = inlined_call_operand.vmem [shape: f32[2,2,32], index: 8, kind: output, shape index: {2}]
  %s9 = inlined_call_operand.vmem [shape: f32[2,2,32], index: 9, kind: output, shape index: {3}]
  %10 = xla_tuple %s6, %s7, %s8, %s9
  %s11 = sld [smem:[#allocation0]]
  $region66: #{encoder_forward.2} parent=0
    _
  %s13 = ssub.s32 1, %s11
  %s14 = scalar_select 0, %s13, %s11
  // Predicated region
  $region2: #{encoder_forward.2} parent=0 // pred_check
    _
  $region3: #{encoder_forward.2} parent=0 // pred_check_branch
    %16 = sbr.rel (0) target = $region5
  $region4: #{encoder_forward.2} parent=0 // pred_region
    _
  $region5: #{encoder_forward.2} parent=0 // pred_fallthru
    _
  // Predicated region
  $region6: #{encoder_forward.2} parent=0 // pred_check
    _
  $region7: #{encoder_forward.2} parent=0 // pred_check_branch
    %18 = sbr.rel (0) target = $region9
  $region8: #{encoder_forward.2} parent=0 // pred_region
    %s19 = ssub.s32 0, 0
    %s20 = smul.u32 8, %s19
    %p21 = scmp.lt.s32.totalorder %s20, 7
    %s22 = scalar_select %p21, %s20, 7
    %s23 = scalar_lea.vmem %s1, %s22
    %s24 = ssub.s32 0, 0
    %s25 = smul.u32 8, %s24
  $region9: #{encoder_forward.2} parent=0 // pred_fallthru
    _
  // Predicated region
  $region10: #{encoder_forward.2} parent=0 // pred_check
    _
  $region11: #{encoder_forward.2} parent=0 // pred_check_branch
    %27 = sbr.rel (0) target = $region13
  $region12: #{encoder_forward.2} parent=0 // pred_region
    _
  $region13: #{encoder_forward.2} parent=0 // pred_fallthru
    _
  // Predicated region
  $region14: #{encoder_forward.2} parent=0 // pred_check
    _
  $region15: #{encoder_forward.2} parent=0 // pred_check_branch
    %29 = sbr.rel (0) target = $region17
  $region16: #{encoder_forward.2} parent=0 // pred_region
    _
  $region17: #{encoder_forward.2} parent=0 // pred_fallthru
    _
  // Predicated region
  $region18: #{encoder_forward.2} parent=0 // pred_check
    _
  $region19: #{encoder_forward.2} parent=0 // pred_check_branch
    %31 = sbr.rel (0) target = $region21
  $region20: #{encoder_forward.2} parent=0 // pred_region
    _
  $region21: #{encoder_forward.2} parent=0 // pred_fallthru
    _
  // Predicated region
  $region22: #{encoder_forward.2} parent=0 // pred_check
    _
  $region23: #{encoder_forward.2} parent=0 // pred_check_branch
    %33 = sbr.rel (0) target = $region25
  $region24: #{encoder_forward.2} parent=0 // pred_region
    _
  $region25: #{encoder_forward.2} parent=0 // pred_fallthru
    _
  %s34 = ssub.s32 0, 0
  %s35 = smul.u32 8, %s34
  %p36 = scmp.lt.s32.totalorder %s35, 7
  %s37 = scalar_select %p36, %s35, 7
  %s38 = scalar_lea.vmem %s1, %s37
  %s39 = ssub.s32 0, 0
  %p40 = scmp.lt.s32.totalorder %s39, 0
  %s41 = scalar_select %p40, %s39, 0
  %s42 = smul.addr %s41, 2
  %s43 = smul.addr %s42, 2
  %s44 = scalar_lea.vmem %s7, %s43
  %s45 = ssub.s32 0, 0
  %s46 = smul.u32 8, %s45
  %p47 = scmp.lt.s32.totalorder %s46, 7
  %s48 = scalar_select %p47, %s46, 7
  %s49 = scalar_lea.vmem %s1, %s48
  %s50 = ssub.s32 0, 0
  %s51 = smul.u32 8, %s50
  %s52 = ssub.s32 0, 0
  %p53 = scmp.lt.s32.totalorder %s52, 0
  %s54 = scalar_select %p53, %s52, 0
  %s55 = smul.addr %s54, 2
  %s56 = smul.addr %s55, 2
  %s57 = scalar_lea.vmem %s7, %s56
  %s58 = ssub.s32 0, 0
  %p60 = scmp.eq.s32.totalorder 0, 0
  // Predicated region
  $region26: #{encoder_forward.2} parent=0 // pred_check
    %p61 = pneg %p60
  $region27: #{encoder_forward.2} parent=0 // pred_check_branch
    %63 = sbr.rel (%p61) target = $region29
  $region28: #{encoder_forward.2} parent=0 // pred_region
    %v64 = vld [vmem:[%s4] sm:$0x3]
    %v65 = vld [vmem:[%s4 + $0x2] sm:$0x3]
    %vm66 = vcmask 254976
    %67 = vst.msk [vmem:[#allocation2] sm:$0x3] %vm66, %v64
    %68 = vst.msk [vmem:[#allocation2 + $0x2] sm:$0x3] %vm66, %v65
    %v69 = vld [vmem:[%s5] sm:$0x3]
    %v70 = vld [vmem:[%s5 + $0x2] sm:$0x3]
    %71 = vst.msk [vmem:[#allocation3] sm:$0x3] %vm66, %v69
    %72 = vst.msk [vmem:[#allocation3 + $0x2] sm:$0x3] %vm66, %v70
  $region29: #{encoder_forward.2} parent=0 // pred_fallthru
    _
  %v73 = vld [vmem:[#allocation2] sm:$0x3]
  %s74 = scalar_lea.vmem [#allocation2], 2
  %v75 = vld [vmem:[%s74] sm:$0x3]
  %v76 = vld [vmem:[#allocation3] sm:$0x3]
  %s77 = scalar_lea.vmem [#allocation3], 2
  %v78 = vld [vmem:[%s77] sm:$0x3]
  %v79 = vld [vmem:[%s2] sm:$0xf]
  %v80 = vld [vmem:[%s2 + $0x4] sm:$0xf]
  %v81 = vld [vmem:[%s2 + $0x8] sm:$0xf]
  %v82 = vld [vmem:[%s2 + $0xc] sm:$0xf]
  %v83 = vld [vmem:[%s3] sm:$0xf]
  %v84 = vld [vmem:[%s3 + $0x4] sm:$0xf]
  %v85 = vld [vmem:[%s3 + $0x8] sm:$0xf]
  %v86 = vld [vmem:[%s3 + $0xc] sm:$0xf]
  %v87 = vld [vmem:[%s0] sm:$0x1]
  %v88 = vunpack.c.l.bf16 %v87
  %v89 = vpack.c.bf16 %v73, %v73
  %v94 = vunpack.c.l.b16 %v79
  %v95 = vunpack.c.l.b16 %v80
  %v96 = vunpack.c.l.b16 %v81
  %v97 = vunpack.c.l.b16 %v82
  %v98 = vpack.c.b16 %v95, %v94
  %v99 = vpack.c.b16 %v97, %v96
  %vm102 = vcmask 261120
  %v104 = vsel %vm102, %v89, 0
  %106 = vmatprep.subr.bf16.mxu0 0
  %107 = vmatpush1.bf16.msra.mxu0 %v98
  %108 = vmatprep.subr.bf16.mxu0 0
  %109 = vmatpush1.bf16.msra.mxu0 %v99
  %110 = vmatprep.subr.bf16.mxu0 0
  %111 = vmatpush1.bf16.msra.mxu0 0
  %112 = vmatprep.subr.bf16.mxu0 0
  %113 = vmatpush1.bf16.msra.mxu0 0
  %114 = vmatprep.subr.bf16.mxu0 0
  %115 = vmatpush1.bf16.msra.mxu0 0
  %116 = vmatprep.subr.bf16.mxu0 0
  %117 = vmatpush1.bf16.msra.mxu0 0
  %118 = vmatprep.subr.bf16.mxu0 0
  %119 = vmatpush1.bf16.msra.mxu0 0
  %120 = vmatprep.subr.bf16.mxu0 0
  %121 = vmatpush1.bf16.msra.mxu0 0
  %122 = vmatprep.subr.bf16.mxu0 0
  %123 = vmatpush1.bf16.msra.mxu0 0
  %124 = vmatprep.subr.bf16.mxu0 0
  %125 = vmatpush1.bf16.msra.mxu0 0
  %126 = vmatprep.subr.bf16.mxu0 0
  %127 = vmatpush1.bf16.msra.mxu0 0
  %128 = vmatprep.subr.bf16.mxu0 0
  %129 = vmatpush1.bf16.msra.mxu0 0
  %130 = vmatprep.subr.bf16.mxu0 0
  %131 = vmatpush1.bf16.msra.mxu0 0
  %132 = vmatprep.subr.bf16.mxu0 0
  %133 = vmatpush1.bf16.msra.mxu0 0
  %134 = vmatprep.subr.bf16.mxu0 0
  %135 = vmatpush1.bf16.msra.mxu0 0
  %136 = vmatprep.subr.bf16.mxu0 0
  %137 = vmatpush1.bf16.msra.mxu0 0
  %138 = vmatprep.mubr.bf16.mxu0 0
  %139 = vmatmul.mubr.bf16.gmra.mrb[0].mxu0 %v104
  %v140 = vpop.f32.mrb[0].mxu0
  %v141 = vadd.f32 0.0, %v140
  %v142 = vpop.f32.mrb[0].mxu0
  %v143 = vpop.f32.mrb[0].mxu0
  %v144 = vpop.f32.mrb[0].mxu0
  %145 = vdwg.mxu0
  %v146 = vadd.f32 %v88, %v141
  %v147 = vxor.u32 %v146, 2147483648
  %v148 = vmul.f32 %v147, 1.442695
  %v149 = vpow.pop %v148
  %v150 = vadd.f32 %v149, 1.0
  %v151 = vrcp.pop %v150
  %v152 = vmul.f32 1.0, %v151
  %v153 = vtanh.pop %v146
  %v156 = vunpack.c.l.s4 1983009808
  %v157 = vunpack.c.0.s8 %v156
  %v158 = vlaneseq
  %v159 = vshrl.u32 %v158, 7
  %v160 = vsub.s32 %v157, %v159
  %v161 = vrot.slane %v76, %v160
  %162 = vrot.lane.b32.xlu0 %v161, 32
  %v163 = vpop.permute.xlu0 %162
  %v165 = vmul.f32 %v152, %v163
  %167 = vrot.lane.b32.xlu0 %v153, 64
  %v168 = vpop.permute.xlu0 %167
  %v170 = vmul.f32 %v152, %v168
  %172 = vrot.lane.b32.xlu0 %v170, 32
  %v173 = vpop.permute.xlu0 %172
  %v175 = vadd.f32 %v165, %v173
  %v176 = vtanh.pop %v175
  %178 = vrot.lane.b32.xlu0 %v176, 64
  %v179 = vpop.permute.xlu0 %178
  %v181 = vmul.f32 %v152, %v179
  %183 = vrot.lane.b32.xlu0 %v181, 32
  %v184 = vpop.permute.xlu0 %183
  %vm186 = vcmask 254976
  %187 = vst.msk [vmem:[%s6] sm:$0x3] %vm186, %v184
  %s188 = scalar_lea.vmem %s49, 7
  %v189 = vld [vmem:[%s188] sm:$0x1]
  %v190 = vunpack.c.l.bf16 %v189
  %v191 = vpack.c.bf16 %v75, %v75
  %v196 = vunpack.c.l.b16 %v83
  %v197 = vunpack.c.l.b16 %v84
  %v198 = vunpack.c.l.b16 %v85
  %v199 = vunpack.c.l.b16 %v86
  %v200 = vpack.c.b16 %v197, %v196
  %v201 = vpack.c.b16 %v199, %v198
  %v205 = vsel %vm102, %v191, 0
  %207 = vmatprep.subr.bf16.mxu0 0
  %208 = vmatpush1.bf16.msra.mxu0 %v200
  %209 = vmatprep.subr.bf16.mxu0 0
  %210 = vmatpush1.bf16.msra.mxu0 %v201
  %211 = vmatprep.subr.bf16.mxu0 0
  %212 = vmatpush1.bf16.msra.mxu0 0
  %213 = vmatprep.subr.bf16.mxu0 0
  %214 = vmatpush1.bf16.msra.mxu0 0
  %215 = vmatprep.subr.bf16.mxu0 0
  %216 = vmatpush1.bf16.msra.mxu0 0
  %217 = vmatprep.subr.bf16.mxu0 0
  %218 = vmatpush1.bf16.msra.mxu0 0
  %219 = vmatprep.subr.bf16.mxu0 0
  %220 = vmatpush1.bf16.msra.mxu0 0
  %221 = vmatprep.subr.bf16.mxu0 0
  %222 = vmatpush1.bf16.msra.mxu0 0
  %223 = vmatprep.subr.bf16.mxu0 0
  %224 = vmatpush1.bf16.msra.mxu0 0
  %225 = vmatprep.subr.bf16.mxu0 0
  %226 = vmatpush1.bf16.msra.mxu0 0
  %227 = vmatprep.subr.bf16.mxu0 0
  %228 = vmatpush1.bf16.msra.mxu0 0
  %229 = vmatprep.subr.bf16.mxu0 0
  %230 = vmatpush1.bf16.msra.mxu0 0
  %231 = vmatprep.subr.bf16.mxu0 0
  %232 = vmatpush1.bf16.msra.mxu0 0
  %233 = vmatprep.subr.bf16.mxu0 0
  %234 = vmatpush1.bf16.msra.mxu0 0
  %235 = vmatprep.subr.bf16.mxu0 0
  %236 = vmatpush1.bf16.msra.mxu0 0
  %237 = vmatprep.subr.bf16.mxu0 0
  %238 = vmatpush1.bf16.msra.mxu0 0
  %239 = vmatprep.mubr.bf16.mxu0 0
  %240 = vmatmul.mubr.bf16.gmra.mrb[0].mxu0 %v205
  %v241 = vpop.f32.mrb[0].mxu0
  %v242 = vadd.f32 0.0, %v241
  %v243 = vpop.f32.mrb[0].mxu0
  %v244 = vpop.f32.mrb[0].mxu0
  %v245 = vpop.f32.mrb[0].mxu0
  %246 = vdwg.mxu0
  %v247 = vadd.f32 %v190, %v242
  %v248 = vxor.u32 %v247, 2147483648
  %v249 = vmul.f32 %v248, 1.442695
  %v250 = vpow.pop %v249
  %v251 = vadd.f32 %v250, 1.0
  %v252 = vrcp.pop %v251
  %v253 = vmul.f32 1.0, %v252
  %v254 = vtanh.pop %v247
  %v257 = vunpack.c.l.s4 1983009808
  %v258 = vunpack.c.0.s8 %v257
  %v259 = vlaneseq
  %v260 = vshrl.u32 %v259, 7
  %v261 = vsub.s32 %v258, %v260
  %v262 = vrot.slane %v78, %v261
  %263 = vrot.lane.b32.xlu0 %v262, 32
  %v264 = vpop.permute.xlu0 %263
  %v266 = vmul.f32 %v253, %v264
  %268 = vrot.lane.b32.xlu0 %v254, 64
  %v269 = vpop.permute.xlu0 %268
  %v271 = vmul.f32 %v253, %v269
  %273 = vrot.lane.b32.xlu0 %v271, 32
  %v274 = vpop.permute.xlu0 %273
  %v276 = vadd.f32 %v266, %v274
  %v277 = vtanh.pop %v276
  %279 = vrot.lane.b32.xlu0 %v277, 64
  %v280 = vpop.permute.xlu0 %279
  %v282 = vmul.f32 %v253, %v280
  %vm283 = vcmask 1042176
  %284 = vst.msk [vmem:[%s57 + $0x2] sm:$0x3] %vm283, %v282
  %s285 = scalar_lea.vmem %s0, 1
  %v286 = vld [vmem:[%s285] sm:$0x1]
  %v287 = vunpack.c.l.bf16 %v286
  %v288 = vpack.c.bf16 %v181, %v181
  %290 = vrot.lane.b32.xlu0 %v288, 32
  %v291 = vpop.permute.xlu0 %290
  %v293 = vsel %vm102, %v291, 0
  %295 = vmatprep.subr.bf16.mxu0 0
  %296 = vmatpush1.bf16.msra.mxu0 %v98
  %297 = vmatprep.subr.bf16.mxu0 0
  %298 = vmatpush1.bf16.msra.mxu0 %v99
  %299 = vmatprep.subr.bf16.mxu0 0
  %300 = vmatpush1.bf16.msra.mxu0 0
  %301 = vmatprep.subr.bf16.mxu0 0
  %302 = vmatpush1.bf16.msra.mxu0 0
  %303 = vmatprep.subr.bf16.mxu0 0
  %304 = vmatpush1.bf16.msra.mxu0 0
  %305 = vmatprep.subr.bf16.mxu0 0
  %306 = vmatpush1.bf16.msra.mxu0 0
  %307 = vmatprep.subr.bf16.mxu0 0
  %308 = vmatpush1.bf16.msra.mxu0 0
  %309 = vmatprep.subr.bf16.mxu0 0
  %310 = vmatpush1.bf16.msra.mxu0 0
  %311 = vmatprep.subr.bf16.mxu0 0
  %312 = vmatpush1.bf16.msra.mxu0 0
  %313 = vmatprep.subr.bf16.mxu0 0
  %314 = vmatpush1.bf16.msra.mxu0 0
  %315 = vmatprep.subr.bf16.mxu0 0
  %316 = vmatpush1.bf16.msra.mxu0 0
  %317 = vmatprep.subr.bf16.mxu0 0
  %318 = vmatpush1.bf16.msra.mxu0 0
  %319 = vmatprep.subr.bf16.mxu0 0
  %320 = vmatpush1.bf16.msra.mxu0 0
  %321 = vmatprep.subr.bf16.mxu0 0
  %322 = vmatpush1.bf16.msra.mxu0 0
  %323 = vmatprep.subr.bf16.mxu0 0
  %324 = vmatpush1.bf16.msra.mxu0 0
  %325 = vmatprep.subr.bf16.mxu0 0
  %326 = vmatpush1.bf16.msra.mxu0 0
  %327 = vmatprep.mubr.bf16.mxu0 0
  %328 = vmatmul.mubr.bf16.gmra.mrb[0].mxu0 %v293
  %v329 = vpop.f32.mrb[0].mxu0
  %v330 = vadd.f32 0.0, %v329
  %v331 = vpop.f32.mrb[0].mxu0
  %v332 = vpop.f32.mrb[0].mxu0
  %v333 = vpop.f32.mrb[0].mxu0
  %334 = vdwg.mxu0
  %v335 = vadd.f32 %v287, %v330
  %v336 = vxor.u32 %v335, 2147483648
  %v337 = vmul.f32 %v336, 1.442695
  %v338 = vpow.pop %v337
  %v339 = vadd.f32 %v338, 1.0
  %v340 = vrcp.pop %v339
  %v341 = vmul.f32 1.0, %v340
  %v342 = vtanh.pop %v335
  %v343 = vmul.f32 %v341, %v175
  %345 = vrot.lane.b32.xlu0 %v342, 64
  %v346 = vpop.permute.xlu0 %345
  %v348 = vmul.f32 %v341, %v346
  %350 = vrot.lane.b32.xlu0 %v348, 32
  %v351 = vpop.permute.xlu0 %350
  %v353 = vadd.f32 %v343, %v351
  %v354 = vtanh.pop %v353
  %356 = vrot.lane.b32.xlu0 %v354, 64
  %v357 = vpop.permute.xlu0 %356
  %v359 = vmul.f32 %v341, %v357
  %361 = vrot.lane.b32.xlu0 %v359, 64
  %v362 = vpop.permute.xlu0 %361
  %vm364 = vcmask 517376
  %365 = vst.msk [vmem:[%s6] sm:$0x3] %vm364, %v362
  %s366 = scalar_lea.vmem %s49, 6
  %v367 = vld [vmem:[%s366] sm:$0x1]
  %v368 = vunpack.c.l.bf16 %v367
  %v369 = vpack.c.bf16 %v282, %v282
  %371 = vrot.lane.b32.xlu0 %v369, 32
  %v372 = vpop.permute.xlu0 %371
  %v374 = vsel %vm102, %v372, 0
  %376 = vmatprep.subr.bf16.mxu0 0
  %377 = vmatpush1.bf16.msra.mxu0 %v200
  %378 = vmatprep.subr.bf16.mxu0 0
  %379 = vmatpush1.bf16.msra.mxu0 %v201
  %380 = vmatprep.subr.bf16.mxu0 0
  %381 = vmatpush1.bf16.msra.mxu0 0
  %382 = vmatprep.subr.bf16.mxu0 0
  %383 = vmatpush1.bf16.msra.mxu0 0
  %384 = vmatprep.subr.bf16.mxu0 0
  %385 = vmatpush1.bf16.msra.mxu0 0
  %386 = vmatprep.subr.bf16.mxu0 0
  %387 = vmatpush1.bf16.msra.mxu0 0
  %388 = vmatprep.subr.bf16.mxu0 0
  %389 = vmatpush1.bf16.msra.mxu0 0
  %390 = vmatprep.subr.bf16.mxu0 0
  %391 = vmatpush1.bf16.msra.mxu0 0
  %392 = vmatprep.subr.bf16.mxu0 0
  %393 = vmatpush1.bf16.msra.mxu0 0
  %394 = vmatprep.subr.bf16.mxu0 0
  %395 = vmatpush1.bf16.msra.mxu0 0
  %396 = vmatprep.subr.bf16.mxu0 0
  %397 = vmatpush1.bf16.msra.mxu0 0
  %398 = vmatprep.subr.bf16.mxu0 0
  %399 = vmatpush1.bf16.msra.mxu0 0
  %400 = vmatprep.subr.bf16.mxu0 0
  %401 = vmatpush1.bf16.msra.mxu0 0
  %402 = vmatprep.subr.bf16.mxu0 0
  %403 = vmatpush1.bf16.msra.mxu0 0
  %404 = vmatprep.subr.bf16.mxu0 0
  %405 = vmatpush1.bf16.msra.mxu0 0
  %406 = vmatprep.subr.bf16.mxu0 0
  %407 = vmatpush1.bf16.msra.mxu0 0
  %408 = vmatprep.mubr.bf16.mxu0 0
  %409 = vmatmul.mubr.bf16.gmra.mrb[0].mxu0 %v374
  %v410 = vpop.f32.mrb[0].mxu0
  %v411 = vadd.f32 0.0, %v410
  %v412 = vpop.f32.mrb[0].mxu0
  %v413 = vpop.f32.mrb[0].mxu0
  %v414 = vpop.f32.mrb[0].mxu0
  %415 = vdwg.mxu0
  %v416 = vadd.f32 %v368, %v411
  %v417 = vxor.u32 %v416, 2147483648
  %v418 = vmul.f32 %v417, 1.442695
  %v419 = vpow.pop %v418
  %v420 = vadd.f32 %v419, 1.0
  %v421 = vrcp.pop %v420
  %v422 = vmul.f32 1.0, %v421
  %v423 = vtanh.pop %v416
  %v424 = vmul.f32 %v422, %v276
  %426 = vrot.lane.b32.xlu0 %v423, 64
  %v427 = vpop.permute.xlu0 %426
  %v429 = vmul.f32 %v422, %v427
  %431 = vrot.lane.b32.xlu0 %v429, 32
  %v432 = vpop.permute.xlu0 %431
  %v434 = vadd.f32 %v424, %v432
  %v435 = vtanh.pop %v434
  %437 = vrot.lane.b32.xlu0 %v435, 64
  %v438 = vpop.permute.xlu0 %437
  %v440 = vmul.f32 %v422, %v438
  %442 = vrot.lane.b32.xlu0 %v440, 96
  %v443 = vpop.permute.xlu0 %442
  %vm445 = vcmask 779776
  %446 = vst.msk [vmem:[%s57 + $0x2] sm:$0x3] %vm445, %v443
  %s447 = scalar_lea.vmem %s0, 2
  %v448 = vld [vmem:[%s447] sm:$0x1]
  %v449 = vunpack.c.l.bf16 %v448
  %v450 = vpack.c.bf16 %v359, %v359
  %452 = vrot.lane.b32.xlu0 %v450, 32
  %v453 = vpop.permute.xlu0 %452
  %v455 = vsel %vm102, %v453, 0
  %457 = vmatprep.subr.bf16.mxu0 0
  %458 = vmatpush1.bf16.msra.mxu0 %v98
  %459 = vmatprep.subr.bf16.mxu0 0
  %460 = vmatpush1.bf16.msra.mxu0 %v99
  %461 = vmatprep.subr.bf16.mxu0 0
  %462 = vmatpush1.bf16.msra.mxu0 0
  %463 = vmatprep.subr.bf16.mxu0 0
  %464 = vmatpush1.bf16.msra.mxu0 0
  %465 = vmatprep.subr.bf16.mxu0 0
  %466 = vmatpush1.bf16.msra.mxu0 0
  %467 = vmatprep.subr.bf16.mxu0 0
  %468 = vmatpush1.bf16.msra.mxu0 0
  %469 = vmatprep.subr.bf16.mxu0 0
  %470 = vmatpush1.bf16.msra.mxu0 0
  %471 = vmatprep.subr.bf16.mxu0 0
  %472 = vmatpush1.bf16.msra.mxu0 0
  %473 = vmatprep.subr.bf16.mxu0 0
  %474 = vmatpush1.bf16.msra.mxu0 0
  %475 = vmatprep.subr.bf16.mxu0 0
  %476 = vmatpush1.bf16.msra.mxu0 0
  %477 = vmatprep.subr.bf16.mxu0 0
  %478 = vmatpush1.bf16.msra.mxu0 0
  %479 = vmatprep.subr.bf16.mxu0 0
  %480 = vmatpush1.bf16.msra.mxu0 0
  %481 = vmatprep.subr.bf16.mxu0 0
  %482 = vmatpush1.bf16.msra.mxu0 0
  %483 = vmatprep.subr.bf16.mxu0 0
  %484 = vmatpush1.bf16.msra.mxu0 0
  %485 = vmatprep.subr.bf16.mxu0 0
  %486 = vmatpush1.bf16.msra.mxu0 0
  %487 = vmatprep.subr.bf16.mxu0 0
  %488 = vmatpush1.bf16.msra.mxu0 0
  %489 = vmatprep.mubr.bf16.mxu0 0
  %490 = vmatmul.mubr.bf16.gmra.mrb[0].mxu0 %v455
  %v491 = vpop.f32.mrb[0].mxu0
  %v492 = vadd.f32 0.0, %v491
  %v493 = vpop.f32.mrb[0].mxu0
  %v494 = vpop.f32.mrb[0].mxu0
  %v495 = vpop.f32.mrb[0].mxu0
  %496 = vdwg.mxu0
  %v497 = vadd.f32 %v449, %v492
  %v498 = vxor.u32 %v497, 2147483648
  %v499 = vmul.f32 %v498, 1.442695
  %v500 = vpow.pop %v499
  %v501 = vadd.f32 %v500, 1.0
  %v502 = vrcp.pop %v501
  %v503 = vmul.f32 1.0, %v502
  %v504 = vtanh.pop %v497
  %v505 = vmul.f32 %v503, %v353
  %507 = vrot.lane.b32.xlu0 %v504, 64
  %v508 = vpop.permute.xlu0 %507
  %v510 = vmul.f32 %v503, %v508
  %512 = vrot.lane.b32.xlu0 %v510, 32
  %v513 = vpop.permute.xlu0 %512
  %v515 = vadd.f32 %v505, %v513
  %v516 = vtanh.pop %v515
  %518 = vrot.lane.b32.xlu0 %v516, 64
  %v519 = vpop.permute.xlu0 %518
  %v521 = vmul.f32 %v503, %v519
  %523 = vrot.lane.b32.xlu0 %v521, 96
  %v524 = vpop.permute.xlu0 %523
  %526 = vst.msk [vmem:[%s6] sm:$0x3] %vm445, %v524
  %s527 = scalar_lea.vmem %s49, 5
  %v528 = vld [vmem:[%s527] sm:$0x1]
  %v529 = vunpack.c.l.bf16 %v528
  %v530 = vpack.c.bf16 %v440, %v440
  %532 = vrot.lane.b32.xlu0 %v530, 32
  %v533 = vpop.permute.xlu0 %532
  %v535 = vsel %vm102, %v533, 0
  %537 = vmatprep.subr.bf16.mxu0 0
  %538 = vmatpush1.bf16.msra.mxu0 %v200
  %539 = vmatprep.subr.bf16.mxu0 0
  %540 = vmatpush1.bf16.msra.mxu0 %v201
  %541 = vmatprep.subr.bf16.mxu0 0
  %542 = vmatpush1.bf16.msra.mxu0 0
  %543 = vmatprep.subr.bf16.mxu0 0
  %544 = vmatpush1.bf16.msra.mxu0 0
  %545 = vmatprep.subr.bf16.mxu0 0
  %546 = vmatpush1.bf16.msra.mxu0 0
  %547 = vmatprep.subr.bf16.mxu0 0
  %548 = vmatpush1.bf16.msra.mxu0 0
  %549 = vmatprep.subr.bf16.mxu0 0
  %550 = vmatpush1.bf16.msra.mxu0 0
  %551 = vmatprep.subr.bf16.mxu0 0
  %552 = vmatpush1.bf16.msra.mxu0 0
  %553 = vmatprep.subr.bf16.mxu0 0
  %554 = vmatpush1.bf16.msra.mxu0 0
  %555 = vmatprep.subr.bf16.mxu0 0
  %556 = vmatpush1.bf16.msra.mxu0 0
  %557 = vmatprep.subr.bf16.mxu0 0
  %558 = vmatpush1.bf16.msra.mxu0 0
  %559 = vmatprep.subr.bf16.mxu0 0
  %560 = vmatpush1.bf16.msra.mxu0 0
  %561 = vmatprep.subr.bf16.mxu0 0
  %562 = vmatpush1.bf16.msra.mxu0 0
  %563 = vmatprep.subr.bf16.mxu0 0
  %564 = vmatpush1.bf16.msra.mxu0 0
  %565 = vmatprep.subr.bf16.mxu0 0
  %566 = vmatpush1.bf16.msra.mxu0 0
  %567 = vmatprep.subr.bf16.mxu0 0
  %568 = vmatpush1.bf16.msra.mxu0 0
  %569 = vmatprep.mubr.bf16.mxu0 0
  %570 = vmatmul.mubr.bf16.gmra.mrb[0].mxu0 %v535
  %v571 = vpop.f32.mrb[0].mxu0
  %v572 = vadd.f32 0.0, %v571
  %v573 = vpop.f32.mrb[0].mxu0
  %v574 = vpop.f32.mrb[0].mxu0
  %v575 = vpop.f32.mrb[0].mxu0
  %576 = vdwg.mxu0
  %v577 = vadd.f32 %v529, %v572
  %v578 = vxor.u32 %v577, 2147483648
  %v579 = vmul.f32 %v578, 1.442695
  %v580 = vpow.pop %v579
  %v581 = vadd.f32 %v580, 1.0
  %v582 = vrcp.pop %v581
  %v583 = vmul.f32 1.0, %v582
  %v584 = vtanh.pop %v577
  %v585 = vmul.f32 %v583, %v434
  %587 = vrot.lane.b32.xlu0 %v584, 64
  %v588 = vpop.permute.xlu0 %587
  %v590 = vmul.f32 %v583, %v588
  %592 = vrot.lane.b32.xlu0 %v590, 32
  %v593 = vpop.permute.xlu0 %592
  %v595 = vadd.f32 %v585, %v593
  %v596 = vtanh.pop %v595
  %598 = vrot.lane.b32.xlu0 %v596, 64
  %v599 = vpop.permute.xlu0 %598
  %v601 = vmul.f32 %v583, %v599
  %603 = vrot.lane.b32.xlu0 %v601, 64
  %v604 = vpop.permute.xlu0 %603
  %606 = vst.msk [vmem:[%s57 + $0x2] sm:$0x3] %vm364, %v604
  %s607 = scalar_lea.vmem %s0, 3
  %v608 = vld [vmem:[%s607] sm:$0x1]
  %v609 = vunpack.c.l.bf16 %v608
  %v610 = vpack.c.bf16 %v521, %v521
  %612 = vrot.lane.b32.xlu0 %v610, 32
  %v613 = vpop.permute.xlu0 %612
  %v615 = vsel %vm102, %v613, 0
  %617 = vmatprep.subr.bf16.mxu0 0
  %618 = vmatpush1.bf16.msra.mxu0 %v98
  %619 = vmatprep.subr.bf16.mxu0 0
  %620 = vmatpush1.bf16.msra.mxu0 %v99
  %621 = vmatprep.subr.bf16.mxu0 0
  %622 = vmatpush1.bf16.msra.mxu0 0
  %623 = vmatprep.subr.bf16.mxu0 0
  %624 = vmatpush1.bf16.msra.mxu0 0
  %625 = vmatprep.subr.bf16.mxu0 0
  %626 = vmatpush1.bf16.msra.mxu0 0
  %627 = vmatprep.subr.bf16.mxu0 0
  %628 = vmatpush1.bf16.msra.mxu0 0
  %629 = vmatprep.subr.bf16.mxu0 0
  %630 = vmatpush1.bf16.msra.mxu0 0
  %631 = vmatprep.subr.bf16.mxu0 0
  %632 = vmatpush1.bf16.msra.mxu0 0
  %633 = vmatprep.subr.bf16.mxu0 0
  %634 = vmatpush1.bf16.msra.mxu0 0
  %635 = vmatprep.subr.bf16.mxu0 0
  %636 = vmatpush1.bf16.msra.mxu0 0
  %637 = vmatprep.subr.bf16.mxu0 0
  %638 = vmatpush1.bf16.msra.mxu0 0
  %639 = vmatprep.subr.bf16.mxu0 0
  %640 = vmatpush1.bf16.msra.mxu0 0
  %641 = vmatprep.subr.bf16.mxu0 0
  %642 = vmatpush1.bf16.msra.mxu0 0
  %643 = vmatprep.subr.bf16.mxu0 0
  %644 = vmatpush1.bf16.msra.mxu0 0
  %645 = vmatprep.subr.bf16.mxu0 0
  %646 = vmatpush1.bf16.msra.mxu0 0
  %647 = vmatprep.subr.bf16.mxu0 0
  %648 = vmatpush1.bf16.msra.mxu0 0
  %649 = vmatprep.mubr.bf16.mxu0 0
  %650 = vmatmul.mubr.bf16.gmra.mrb[0].mxu0 %v615
  %v651 = vpop.f32.mrb[0].mxu0
  %v652 = vadd.f32 0.0, %v651
  %v653 = vpop.f32.mrb[0].mxu0
  %v654 = vpop.f32.mrb[0].mxu0
  %v655 = vpop.f32.mrb[0].mxu0
  %656 = vdwg.mxu0
  %v657 = vadd.f32 %v609, %v652
  %v658 = vxor.u32 %v657, 2147483648
  %v659 = vmul.f32 %v658, 1.442695
  %v660 = vpow.pop %v659
  %v661 = vadd.f32 %v660, 1.0
  %v662 = vrcp.pop %v661
  %v663 = vmul.f32 1.0, %v662
  %v664 = vtanh.pop %v657
  %v665 = vmul.f32 %v663, %v515
  %667 = vrot.lane.b32.xlu0 %v664, 64
  %v668 = vpop.permute.xlu0 %667
  %v670 = vmul.f32 %v663, %v668
  %672 = vrot.lane.b32.xlu0 %v670, 32
  %v673 = vpop.permute.xlu0 %672
  %v675 = vadd.f32 %v665, %v673
  %v676 = vtanh.pop %v675
  %678 = vrot.lane.b32.xlu0 %v676, 64
  %v679 = vpop.permute.xlu0 %678
  %v681 = vmul.f32 %v663, %v679
  %682 = vst.msk [vmem:[%s6] sm:$0x3] %vm283, %v681
  %s683 = scalar_lea.vmem %s49, 4
  %v684 = vld [vmem:[%s683] sm:$0x1]
  %v685 = vunpack.c.l.bf16 %v684
  %v686 = vpack.c.bf16 %v601, %v601
  %688 = vrot.lane.b32.xlu0 %v686, 32
  %v689 = vpop.permute.xlu0 %688
  %v691 = vsel %vm102, %v689, 0
  %693 = vmatprep.subr.bf16.mxu0 0
  %694 = vmatpush1.bf16.msra.mxu0 %v200
  %695 = vmatprep.subr.bf16.mxu0 0
  %696 = vmatpush1.bf16.msra.mxu0 %v201
  %697 = vmatprep.subr.bf16.mxu0 0
  %698 = vmatpush1.bf16.msra.mxu0 0
  %699 = vmatprep.subr.bf16.mxu0 0
  %700 = vmatpush1.bf16.msra.mxu0 0
  %701 = vmatprep.subr.bf16.mxu0 0
  %702 = vmatpush1.bf16.msra.mxu0 0
  %703 = vmatprep.subr.bf16.mxu0 0
  %704 = vmatpush1.bf16.msra.mxu0 0
  %705 = vmatprep.subr.bf16.mxu0 0
  %706 = vmatpush1.bf16.msra.mxu0 0
  %707 = vmatprep.subr.bf16.mxu0 0
  %708 = vmatpush1.bf16.msra.mxu0 0
  %709 = vmatprep.subr.bf16.mxu0 0
  %710 = vmatpush1.bf16.msra.mxu0 0
  %711 = vmatprep.subr.bf16.mxu0 0
  %712 = vmatpush1.bf16.msra.mxu0 0
  %713 = vmatprep.subr.bf16.mxu0 0
  %714 = vmatpush1.bf16.msra.mxu0 0
  %715 = vmatprep.subr.bf16.mxu0 0
  %716 = vmatpush1.bf16.msra.mxu0 0
  %717 = vmatprep.subr.bf16.mxu0 0
  %718 = vmatpush1.bf16.msra.mxu0 0
  %719 = vmatprep.subr.bf16.mxu0 0
  %720 = vmatpush1.bf16.msra.mxu0 0
  %721 = vmatprep.subr.bf16.mxu0 0
  %722 = vmatpush1.bf16.msra.mxu0 0
  %723 = vmatprep.subr.bf16.mxu0 0
  %724 = vmatpush1.bf16.msra.mxu0 0
  %725 = vmatprep.mubr.bf16.mxu0 0
  %726 = vmatmul.mubr.bf16.gmra.mrb[0].mxu0 %v691
  %v727 = vpop.f32.mrb[0].mxu0
  %v728 = vadd.f32 0.0, %v727
  %v729 = vpop.f32.mrb[0].mxu0
  %v730 = vpop.f32.mrb[0].mxu0
  %v731 = vpop.f32.mrb[0].mxu0
  %732 = vdwg.mxu0
  %v733 = vadd.f32 %v685, %v728
  %v734 = vxor.u32 %v733, 2147483648
  %v735 = vmul.f32 %v734, 1.442695
  %v736 = vpow.pop %v735
  %v737 = vadd.f32 %v736, 1.0
  %v738 = vrcp.pop %v737
  %v739 = vmul.f32 1.0, %v738
  %v740 = vtanh.pop %v733
  %v741 = vmul.f32 %v739, %v595
  %743 = vrot.lane.b32.xlu0 %v740, 64
  %v744 = vpop.permute.xlu0 %743
  %v746 = vmul.f32 %v739, %v744
  %748 = vrot.lane.b32.xlu0 %v746, 32
  %v749 = vpop.permute.xlu0 %748
  %v751 = vadd.f32 %v741, %v749
  %v752 = vtanh.pop %v751
  %754 = vrot.lane.b32.xlu0 %v752, 64
  %v755 = vpop.permute.xlu0 %754
  %v757 = vmul.f32 %v739, %v755
  %759 = vrot.lane.b32.xlu0 %v757, 32
  %v760 = vpop.permute.xlu0 %759
  %762 = vst.msk [vmem:[%s57 + $0x2] sm:$0x3] %vm186, %v760
  %s763 = scalar_lea.vmem %s0, 4
  %v764 = vld [vmem:[%s763] sm:$0x1]
  %v765 = vunpack.c.l.bf16 %v764
  %v766 = vpack.c.bf16 %v681, %v681
  %768 = vrot.lane.b32.xlu0 %v766, 32
  %v769 = vpop.permute.xlu0 %768
  %v771 = vsel %vm102, %v769, 0
  %773 = vmatprep.subr.bf16.mxu0 0
  %774 = vmatpush1.bf16.msra.mxu0 %v98
  %775 = vmatprep.subr.bf16.mxu0 0
  %776 = vmatpush1.bf16.msra.mxu0 %v99
  %777 = vmatprep.subr.bf16.mxu0 0
  %778 = vmatpush1.bf16.msra.mxu0 0
  %779 = vmatprep.subr.bf16.mxu0 0
  %780 = vmatpush1.bf16.msra.mxu0 0
  %781 = vmatprep.subr.bf16.mxu0 0
  %782 = vmatpush1.bf16.msra.mxu0 0
  %783 = vmatprep.subr.bf16.mxu0 0
  %784 = vmatpush1.bf16.msra.mxu0 0
  %785 = vmatprep.subr.bf16.mxu0 0
  %786 = vmatpush1.bf16.msra.mxu0 0
  %787 = vmatprep.subr.bf16.mxu0 0
  %788 = vmatpush1.bf16.msra.mxu0 0
  %789 = vmatprep.subr.bf16.mxu0 0
  %790 = vmatpush1.bf16.msra.mxu0 0
  %791 = vmatprep.subr.bf16.mxu0 0
  %792 = vmatpush1.bf16.msra.mxu0 0
  %793 = vmatprep.subr.bf16.mxu0 0
  %794 = vmatpush1.bf16.msra.mxu0 0
  %795 = vmatprep.subr.bf16.mxu0 0
  %796 = vmatpush1.bf16.msra.mxu0 0
  %797 = vmatprep.subr.bf16.mxu0 0
  %798 = vmatpush1.bf16.msra.mxu0 0
  %799 = vmatprep.subr.bf16.mxu0 0
  %800 = vmatpush1.bf16.msra.mxu0 0
  %801 = vmatprep.subr.bf16.mxu0 0
  %802 = vmatpush1.bf16.msra.mxu0 0
  %803 = vmatprep.subr.bf16.mxu0 0
  %804 = vmatpush1.bf16.msra.mxu0 0
  %805 = vmatprep.mubr.bf16.mxu0 0
  %806 = vmatmul.mubr.bf16.gmra.mrb[0].mxu0 %v771
  %v807 = vpop.f32.mrb[0].mxu0
  %v808 = vadd.f32 0.0, %v807
  %v809 = vpop.f32.mrb[0].mxu0
  %v810 = vpop.f32.mrb[0].mxu0
  %v811 = vpop.f32.mrb[0].mxu0
  %812 = vdwg.mxu0
  %v813 = vadd.f32 %v765, %v808
  %v814 = vxor.u32 %v813, 2147483648
  %v815 = vmul.f32 %v814, 1.442695
  %v816 = vpow.pop %v815
  %v817 = vadd.f32 %v816, 1.0
  %v818 = vrcp.pop %v817
  %v819 = vmul.f32 1.0, %v818
  %v820 = vtanh.pop %v813
  %v821 = vmul.f32 %v819, %v675
  %823 = vrot.lane.b32.xlu0 %v820, 64
  %v824 = vpop.permute.xlu0 %823
  %v826 = vmul.f32 %v819, %v824
  %828 = vrot.lane.b32.xlu0 %v826, 32
  %v829 = vpop.permute.xlu0 %828
  %v831 = vadd.f32 %v821, %v829
  %v832 = vtanh.pop %v831
  %834 = vrot.lane.b32.xlu0 %v832, 64
  %v835 = vpop.permute.xlu0 %834
  %v837 = vmul.f32 %v819, %v835
  %839 = vrot.lane.b32.xlu0 %v837, 32
  %v840 = vpop.permute.xlu0 %839
  %842 = vst.msk [vmem:[%s6 + $0x2] sm:$0x3] %vm186, %v840
  %s843 = scalar_lea.vmem %s49, 3
  %v844 = vld [vmem:[%s843] sm:$0x1]
  %v845 = vunpack.c.l.bf16 %v844
  %v846 = vpack.c.bf16 %v757, %v757
  %848 = vrot.lane.b32.xlu0 %v846, 32
  %v849 = vpop.permute.xlu0 %848
  %v851 = vsel %vm102, %v849, 0
  %853 = vmatprep.subr.bf16.mxu0 0
  %854 = vmatpush1.bf16.msra.mxu0 %v200
  %855 = vmatprep.subr.bf16.mxu0 0
  %856 = vmatpush1.bf16.msra.mxu0 %v201
  %857 = vmatprep.subr.bf16.mxu0 0
  %858 = vmatpush1.bf16.msra.mxu0 0
  %859 = vmatprep.subr.bf16.mxu0 0
  %860 = vmatpush1.bf16.msra.mxu0 0
  %861 = vmatprep.subr.bf16.mxu0 0
  %862 = vmatpush1.bf16.msra.mxu0 0
  %863 = vmatprep.subr.bf16.mxu0 0
  %864 = vmatpush1.bf16.msra.mxu0 0
  %865 = vmatprep.subr.bf16.mxu0 0
  %866 = vmatpush1.bf16.msra.mxu0 0
  %867 = vmatprep.subr.bf16.mxu0 0
  %868 = vmatpush1.bf16.msra.mxu0 0
  %869 = vmatprep.subr.bf16.mxu0 0
  %870 = vmatpush1.bf16.msra.mxu0 0
  %871 = vmatprep.subr.bf16.mxu0 0
  %872 = vmatpush1.bf16.msra.mxu0 0
  %873 = vmatprep.subr.bf16.mxu0 0
  %874 = vmatpush1.bf16.msra.mxu0 0
  %875 = vmatprep.subr.bf16.mxu0 0
  %876 = vmatpush1.bf16.msra.mxu0 0
  %877 = vmatprep.subr.bf16.mxu0 0
  %878 = vmatpush1.bf16.msra.mxu0 0
  %879 = vmatprep.subr.bf16.mxu0 0
  %880 = vmatpush1.bf16.msra.mxu0 0
  %881 = vmatprep.subr.bf16.mxu0 0
  %882 = vmatpush1.bf16.msra.mxu0 0
  %883 = vmatprep.subr.bf16.mxu0 0
  %884 = vmatpush1.bf16.msra.mxu0 0
  %885 = vmatprep.mubr.bf16.mxu0 0
  %886 = vmatmul.mubr.bf16.gmra.mrb[0].mxu0 %v851
  %v887 = vpop.f32.mrb[0].mxu0
  %v888 = vadd.f32 0.0, %v887
  %v889 = vpop.f32.mrb[0].mxu0
  %v890 = vpop.f32.mrb[0].mxu0
  %v891 = vpop.f32.mrb[0].mxu0
  %892 = vdwg.mxu0
  %v893 = vadd.f32 %v845, %v888
  %v894 = vxor.u32 %v893, 2147483648
  %v895 = vmul.f32 %v894, 1.442695
  %v896 = vpow.pop %v895
  %v897 = vadd.f32 %v896, 1.0
  %v898 = vrcp.pop %v897
  %v899 = vmul.f32 1.0, %v898
  %v900 = vtanh.pop %v893
  %v901 = vmul.f32 %v899, %v751
  %903 = vrot.lane.b32.xlu0 %v900, 64
  %v904 = vpop.permute.xlu0 %903
  %v906 = vmul.f32 %v899, %v904
  %908 = vrot.lane.b32.xlu0 %v906, 32
  %v909 = vpop.permute.xlu0 %908
  %v911 = vadd.f32 %v901, %v909
  %v912 = vtanh.pop %v911
  %914 = vrot.lane.b32.xlu0 %v912, 64
  %v915 = vpop.permute.xlu0 %914
  %v917 = vmul.f32 %v899, %v915
  %918 = vst.msk [vmem:[%s57] sm:$0x3] %vm283, %v917
  %s919 = scalar_lea.vmem %s0, 5
  %v920 = vld [vmem:[%s919] sm:$0x1]
  %v921 = vunpack.c.l.bf16 %v920
  %v922 = vpack.c.bf16 %v837, %v837
  %924 = vrot.lane.b32.xlu0 %v922, 32
  %v925 = vpop.permute.xlu0 %924
  %v927 = vsel %vm102, %v925, 0
  %929 = vmatprep.subr.bf16.mxu0 0
  %930 = vmatpush1.bf16.msra.mxu0 %v98
  %931 = vmatprep.subr.bf16.mxu0 0
  %932 = vmatpush1.bf16.msra.mxu0 %v99
  %933 = vmatprep.subr.bf16.mxu0 0
  %934 = vmatpush1.bf16.msra.mxu0 0
  %935 = vmatprep.subr.bf16.mxu0 0
  %936 = vmatpush1.bf16.msra.mxu0 0
  %937 = vmatprep.subr.bf16.mxu0 0
  %938 = vmatpush1.bf16.msra.mxu0 0
  %939 = vmatprep.subr.bf16.mxu0 0
  %940 = vmatpush1.bf16.msra.mxu0 0
  %941 = vmatprep.subr.bf16.mxu0 0
  %942 = vmatpush1.bf16.msra.mxu0 0
  %943 = vmatprep.subr.bf16.mxu0 0
  %944 = vmatpush1.bf16.msra.mxu0 0
  %945 = vmatprep.subr.bf16.mxu0 0
  %946 = vmatpush1.bf16.msra.mxu0 0
  %947 = vmatprep.subr.bf16.mxu0 0
  %948 = vmatpush1.bf16.msra.mxu0 0
  %949 = vmatprep.subr.bf16.mxu0 0
  %950 = vmatpush1.bf16.msra.mxu0 0
  %951 = vmatprep.subr.bf16.mxu0 0
  %952 = vmatpush1.bf16.msra.mxu0 0
  %953 = vmatprep.subr.bf16.mxu0 0
  %954 = vmatpush1.bf16.msra.mxu0 0
  %955 = vmatprep.subr.bf16.mxu0 0
  %956 = vmatpush1.bf16.msra.mxu0 0
  %957 = vmatprep.subr.bf16.mxu0 0
  %958 = vmatpush1.bf16.msra.mxu0 0
  %959 = vmatprep.subr.bf16.mxu0 0
  %960 = vmatpush1.bf16.msra.mxu0 0
  %961 = vmatprep.mubr.bf16.mxu0 0
  %962 = vmatmul.mubr.bf16.gmra.mrb[0].mxu0 %v927
  %v963 = vpop.f32.mrb[0].mxu0
  %v964 = vadd.f32 0.0, %v963
  %v965 = vpop.f32.mrb[0].mxu0
  %v966 = vpop.f32.mrb[0].mxu0
  %v967 = vpop.f32.mrb[0].mxu0
  %968 = vdwg.mxu0
  %v969 = vadd.f32 %v921, %v964
  %v970 = vxor.u32 %v969, 2147483648
  %v971 = vmul.f32 %v970, 1.442695
  %v972 = vpow.pop %v971
  %v973 = vadd.f32 %v972, 1.0
  %v974 = vrcp.pop %v973
  %v975 = vmul.f32 1.0, %v974
  %v976 = vtanh.pop %v969
  %v977 = vmul.f32 %v975, %v831
  %979 = vrot.lane.b32.xlu0 %v976, 64
  %v980 = vpop.permute.xlu0 %979
  %v982 = vmul.f32 %v975, %v980
  %984 = vrot.lane.b32.xlu0 %v982, 32
  %v985 = vpop.permute.xlu0 %984
  %v987 = vadd.f32 %v977, %v985
  %v988 = vtanh.pop %v987
  %990 = vrot.lane.b32.xlu0 %v988, 64
  %v991 = vpop.permute.xlu0 %990
  %v993 = vmul.f32 %v975, %v991
  %995 = vrot.lane.b32.xlu0 %v993, 64
  %v996 = vpop.permute.xlu0 %995
  %998 = vst.msk [vmem:[%s6 + $0x2] sm:$0x3] %vm364, %v996
  %s999 = scalar_lea.vmem %s49, 2
  %v1000 = vld [vmem:[%s999] sm:$0x1]
  %v1001 = vunpack.c.l.bf16 %v1000
  %v1002 = vpack.c.bf16 %v917, %v917
  %1004 = vrot.lane.b32.xlu0 %v1002, 32
  %v1005 = vpop.permute.xlu0 %1004
  %v1007 = vsel %vm102, %v1005, 0
  %1009 = vmatprep.subr.bf16.mxu0 0
  %1010 = vmatpush1.bf16.msra.mxu0 %v200
  %1011 = vmatprep.subr.bf16.mxu0 0
  %1012 = vmatpush1.bf16.msra.mxu0 %v201
  %1013 = vmatprep.subr.bf16.mxu0 0
  %1014 = vmatpush1.bf16.msra.mxu0 0
  %1015 = vmatprep.subr.bf16.mxu0 0
  %1016 = vmatpush1.bf16.msra.mxu0 0
  %1017 = vmatprep.subr.bf16.mxu0 0
  %1018 = vmatpush1.bf16.msra.mxu0 0
  %1019 = vmatprep.subr.bf16.mxu0 0
  %1020 = vmatpush1.bf16.msra.mxu0 0
  %1021 = vmatprep.subr.bf16.mxu0 0
  %1022 = vmatpush1.bf16.msra.mxu0 0
  %1023 = vmatprep.subr.bf16.mxu0 0
  %1024 = vmatpush1.bf16.msra.mxu0 0
  %1025 = vmatprep.subr.bf16.mxu0 0
  %1026 = vmatpush1.bf16.msra.mxu0 0
  %1027 = vmatprep.subr.bf16.mxu0 0
  %1028 = vmatpush1.bf16.msra.mxu0 0
  %1029 = vmatprep.subr.bf16.mxu0 0
  %1030 = vmatpush1.bf16.msra.mxu0 0
  %1031 = vmatprep.subr.bf16.mxu0 0
  %1032 = vmatpush1.bf16.msra.mxu0 0
  %1033 = vmatprep.subr.bf16.mxu0 0
  %1034 = vmatpush1.bf16.msra.mxu0 0
  %1035 = vmatprep.subr.bf16.mxu0 0
  %1036 = vmatpush1.bf16.msra.mxu0 0
  %1037 = vmatprep.subr.bf16.mxu0 0
  %1038 = vmatpush1.bf16.msra.mxu0 0
  %1039 = vmatprep.subr.bf16.mxu0 0
  %1040 = vmatpush1.bf16.msra.mxu0 0
  %1041 = vmatprep.mubr.bf16.mxu0 0
  %1042 = vmatmul.mubr.bf16.gmra.mrb[0].mxu0 %v1007
  %v1043 = vpop.f32.mrb[0].mxu0
  %v1044 = vadd.f32 0.0, %v1043
  %v1045 = vpop.f32.mrb[0].mxu0
  %v1046 = vpop.f32.mrb[0].mxu0
  %v1047 = vpop.f32.mrb[0].mxu0
  %1048 = vdwg.mxu0
  %v1049 = vadd.f32 %v1001, %v1044
  %v1050 = vxor.u32 %v1049, 2147483648
  %v1051 = vmul.f32 %v1050, 1.442695
  %v1052 = vpow.pop %v1051
  %v1053 = vadd.f32 %v1052, 1.0
  %v1054 = vrcp.pop %v1053
  %v1055 = vmul.f32 1.0, %v1054
  %v1056 = vtanh.pop %v1049
  %v1057 = vmul.f32 %v1055, %v911
  %1059 = vrot.lane.b32.xlu0 %v1056, 64
  %v1060 = vpop.permute.xlu0 %1059
  %v1062 = vmul.f32 %v1055, %v1060
  %1064 = vrot.lane.b32.xlu0 %v1062, 32
  %v1065 = vpop.permute.xlu0 %1064
  %v1067 = vadd.f32 %v1057, %v1065
  %v1068 = vtanh.pop %v1067
  %1070 = vrot.lane.b32.xlu0 %v1068, 64
  %v1071 = vpop.permute.xlu0 %1070
  %v1073 = vmul.f32 %v1055, %v1071
  %1075 = vrot.lane.b32.xlu0 %v1073, 96
  %v1076 = vpop.permute.xlu0 %1075
  %1078 = vst.msk [vmem:[%s57] sm:$0x3] %vm445, %v1076
  %s1079 = scalar_lea.vmem %s0, 6
  %v1080 = vld [vmem:[%s1079] sm:$0x1]
  %v1081 = vunpack.c.l.bf16 %v1080
  %v1082 = vpack.c.bf16 %v993, %v993
  %1084 = vrot.lane.b32.xlu0 %v1082, 32
  %v1085 = vpop.permute.xlu0 %1084
  %v1087 = vsel %vm102, %v1085, 0
  %1089 = vmatprep.subr.bf16.mxu0 0
  %1090 = vmatpush1.bf16.msra.mxu0 %v98
  %1091 = vmatprep.subr.bf16.mxu0 0
  %1092 = vmatpush1.bf16.msra.mxu0 %v99
  %1093 = vmatprep.subr.bf16.mxu0 0
  %1094 = vmatpush1.bf16.msra.mxu0 0
  %1095 = vmatprep.subr.bf16.mxu0 0
  %1096 = vmatpush1.bf16.msra.mxu0 0
  %1097 = vmatprep.subr.bf16.mxu0 0
  %1098 = vmatpush1.bf16.msra.mxu0 0
  %1099 = vmatprep.subr.bf16.mxu0 0
  %1100 = vmatpush1.bf16.msra.mxu0 0
  %1101 = vmatprep.subr.bf16.mxu0 0
  %1102 = vmatpush1.bf16.msra.mxu0 0
  %1103 = vmatprep.subr.bf16.mxu0 0
  %1104 = vmatpush1.bf16.msra.mxu0 0
  %1105 = vmatprep.subr.bf16.mxu0 0
  %1106 = vmatpush1.bf16.msra.mxu0 0
  %1107 = vmatprep.subr.bf16.mxu0 0
  %1108 = vmatpush1.bf16.msra.mxu0 0
  %1109 = vmatprep.subr.bf16.mxu0 0
  %1110 = vmatpush1.bf16.msra.mxu0 0
  %1111 = vmatprep.subr.bf16.mxu0 0
  %1112 = vmatpush1.bf16.msra.mxu0 0
  %1113 = vmatprep.subr.bf16.mxu0 0
  %1114 = vmatpush1.bf16.msra.mxu0 0
  %1115 = vmatprep.subr.bf16.mxu0 0
  %1116 = vmatpush1.bf16.msra.mxu0 0
  %1117 = vmatprep.subr.bf16.mxu0 0
  %1118 = vmatpush1.bf16.msra.mxu0 0
  %1119 = vmatprep.subr.bf16.mxu0 0
  %1120 = vmatpush1.bf16.msra.mxu0 0
  %1121 = vmatprep.mubr.bf16.mxu0 0
  %1122 = vmatmul.mubr.bf16.gmra.mrb[0].mxu0 %v1087
  %v1123 = vpop.f32.mrb[0].mxu0
  %v1124 = vadd.f32 0.0, %v1123
  %v1125 = vpop.f32.mrb[0].mxu0
  %v1126 = vpop.f32.mrb[0].mxu0
  %v1127 = vpop.f32.mrb[0].mxu0
  %1128 = vdwg.mxu0
  %v1129 = vadd.f32 %v1081, %v1124
  %v1130 = vxor.u32 %v1129, 2147483648
  %v1131 = vmul.f32 %v1130, 1.442695
  %v1132 = vpow.pop %v1131
  %v1133 = vadd.f32 %v1132, 1.0
  %v1134 = vrcp.pop %v1133
  %v1135 = vmul.f32 1.0, %v1134
  %v1136 = vtanh.pop %v1129
  %v1137 = vmul.f32 %v1135, %v987
  %1139 = vrot.lane.b32.xlu0 %v1136, 64
  %v1140 = vpop.permute.xlu0 %1139
  %v1142 = vmul.f32 %v1135, %v1140
  %1144 = vrot.lane.b32.xlu0 %v1142, 32
  %v1145 = vpop.permute.xlu0 %1144
  %v1147 = vadd.f32 %v1137, %v1145
  %v1148 = vtanh.pop %v1147
  %1150 = vrot.lane.b32.xlu0 %v1148, 64
  %v1151 = vpop.permute.xlu0 %1150
  %v1153 = vmul.f32 %v1135, %v1151
  %1155 = vrot.lane.b32.xlu0 %v1153, 96
  %v1156 = vpop.permute.xlu0 %1155
  %1158 = vst.msk [vmem:[%s6 + $0x2] sm:$0x3] %vm445, %v1156
  %s1159 = scalar_lea.vmem %s49, 1
  %v1160 = vld [vmem:[%s1159] sm:$0x1]
  %v1161 = vunpack.c.l.bf16 %v1160
  %v1162 = vpack.c.bf16 %v1073, %v1073
  %1164 = vrot.lane.b32.xlu0 %v1162, 32
  %v1165 = vpop.permute.xlu0 %1164
  %v1167 = vsel %vm102, %v1165, 0
  %1169 = vmatprep.subr.bf16.mxu0 0
  %1170 = vmatpush1.bf16.msra.mxu0 %v200
  %1171 = vmatprep.subr.bf16.mxu0 0
  %1172 = vmatpush1.bf16.msra.mxu0 %v201
  %1173 = vmatprep.subr.bf16.mxu0 0
  %1174 = vmatpush1.bf16.msra.mxu0 0
  %1175 = vmatprep.subr.bf16.mxu0 0
  %1176 = vmatpush1.bf16.msra.mxu0 0
  %1177 = vmatprep.subr.bf16.mxu0 0
  %1178 = vmatpush1.bf16.msra.mxu0 0
  %1179 = vmatprep.subr.bf16.mxu0 0
  %1180 = vmatpush1.bf16.msra.mxu0 0
  %1181 = vmatprep.subr.bf16.mxu0 0
  %1182 = vmatpush1.bf16.msra.mxu0 0
  %1183 = vmatprep.subr.bf16.mxu0 0
  %1184 = vmatpush1.bf16.msra.mxu0 0
  %1185 = vmatprep.subr.bf16.mxu0 0
  %1186 = vmatpush1.bf16.msra.mxu0 0
  %1187 = vmatprep.subr.bf16.mxu0 0
  %1188 = vmatpush1.bf16.msra.mxu0 0
  %1189 = vmatprep.subr.bf16.mxu0 0
  %1190 = vmatpush1.bf16.msra.mxu0 0
  %1191 = vmatprep.subr.bf16.mxu0 0
  %1192 = vmatpush1.bf16.msra.mxu0 0
  %1193 = vmatprep.subr.bf16.mxu0 0
  %1194 = vmatpush1.bf16.msra.mxu0 0
  %1195 = vmatprep.subr.bf16.mxu0 0
  %1196 = vmatpush1.bf16.msra.mxu0 0
  %1197 = vmatprep.subr.bf16.mxu0 0
  %1198 = vmatpush1.bf16.msra.mxu0 0
  %1199 = vmatprep.subr.bf16.mxu0 0
  %1200 = vmatpush1.bf16.msra.mxu0 0
  %1201 = vmatprep.mubr.bf16.mxu0 0
  %1202 = vmatmul.mubr.bf16.gmra.mrb[0].mxu0 %v1167
  %v1203 = vpop.f32.mrb[0].mxu0
  %v1204 = vadd.f32 0.0, %v1203
  %v1205 = vpop.f32.mrb[0].mxu0
  %v1206 = vpop.f32.mrb[0].mxu0
  %v1207 = vpop.f32.mrb[0].mxu0
  %1208 = vdwg.mxu0
  %v1209 = vadd.f32 %v1161, %v1204
  %v1210 = vxor.u32 %v1209, 2147483648
  %v1211 = vmul.f32 %v1210, 1.442695
  %v1212 = vpow.pop %v1211
  %v1213 = vadd.f32 %v1212, 1.0
  %v1214 = vrcp.pop %v1213
  %v1215 = vmul.f32 1.0, %v1214
  %v1216 = vtanh.pop %v1209
  %v1217 = vmul.f32 %v1215, %v1067
  %1219 = vrot.lane.b32.xlu0 %v1216, 64
  %v1220 = vpop.permute.xlu0 %1219
  %v1222 = vmul.f32 %v1215, %v1220
  %1224 = vrot.lane.b32.xlu0 %v1222, 32
  %v1225 = vpop.permute.xlu0 %1224
  %v1227 = vadd.f32 %v1217, %v1225
  %v1228 = vtanh.pop %v1227
  %1230 = vrot.lane.b32.xlu0 %v1228, 64
  %v1231 = vpop.permute.xlu0 %1230
  %v1233 = vmul.f32 %v1215, %v1231
  %1235 = vrot.lane.b32.xlu0 %v1233, 64
  %v1236 = vpop.permute.xlu0 %1235
  %1238 = vst.msk [vmem:[%s57] sm:$0x3] %vm364, %v1236
  %s1239 = scalar_lea.vmem %s0, 7
  %v1240 = vld [vmem:[%s1239] sm:$0x1]
  %v1241 = vunpack.c.l.bf16 %v1240
  %v1242 = vpack.c.bf16 %v1153, %v1153
  %1244 = vrot.lane.b32.xlu0 %v1242, 32
  %v1245 = vpop.permute.xlu0 %1244
  %v1247 = vsel %vm102, %v1245, 0
  %1249 = vmatprep.subr.bf16.mxu0 0
  %1250 = vmatpush1.bf16.msra.mxu0 %v98
  %1251 = vmatprep.subr.bf16.mxu0 0
  %1252 = vmatpush1.bf16.msra.mxu0 %v99
  %1253 = vmatprep.subr.bf16.mxu0 0
  %1254 = vmatpush1.bf16.msra.mxu0 0
  %1255 = vmatprep.subr.bf16.mxu0 0
  %1256 = vmatpush1.bf16.msra.mxu0 0
  %1257 = vmatprep.subr.bf16.mxu0 0
  %1258 = vmatpush1.bf16.msra.mxu0 0
  %1259 = vmatprep.subr.bf16.mxu0 0
  %1260 = vmatpush1.bf16.msra.mxu0 0
  %1261 = vmatprep.subr.bf16.mxu0 0
  %1262 = vmatpush1.bf16.msra.mxu0 0
  %1263 = vmatprep.subr.bf16.mxu0 0
  %1264 = vmatpush1.bf16.msra.mxu0 0
  %1265 = vmatprep.subr.bf16.mxu0 0
  %1266 = vmatpush1.bf16.msra.mxu0 0
  %1267 = vmatprep.subr.bf16.mxu0 0
  %1268 = vmatpush1.bf16.msra.mxu0 0
  %1269 = vmatprep.subr.bf16.mxu0 0
  %1270 = vmatpush1.bf16.msra.mxu0 0
  %1271 = vmatprep.subr.bf16.mxu0 0
  %1272 = vmatpush1.bf16.msra.mxu0 0
  %1273 = vmatprep.subr.bf16.mxu0 0
  %1274 = vmatpush1.bf16.msra.mxu0 0
  %1275 = vmatprep.subr.bf16.mxu0 0
  %1276 = vmatpush1.bf16.msra.mxu0 0
  %1277 = vmatprep.subr.bf16.mxu0 0
  %1278 = vmatpush1.bf16.msra.mxu0 0
  %1279 = vmatprep.subr.bf16.mxu0 0
  %1280 = vmatpush1.bf16.msra.mxu0 0
  %1281 = vmatprep.mubr.bf16.mxu0 0
  %1282 = vmatmul.mubr.bf16.gmra.mrb[0].mxu0 %v1247
  %v1283 = vpop.f32.mrb[0].mxu0
  %v1284 = vadd.f32 0.0, %v1283
  %v1285 = vpop.f32.mrb[0].mxu0
  %v1286 = vpop.f32.mrb[0].mxu0
  %v1287 = vpop.f32.mrb[0].mxu0
  %1288 = vdwg.mxu0
  %v1289 = vadd.f32 %v1241, %v1284
  %v1290 = vxor.u32 %v1289, 2147483648
  %v1291 = vmul.f32 %v1290, 1.442695
  %v1292 = vpow.pop %v1291
  %v1293 = vadd.f32 %v1292, 1.0
  %v1294 = vrcp.pop %v1293
  %v1295 = vmul.f32 1.0, %v1294
  %v1296 = vtanh.pop %v1289
  %v1297 = vmul.f32 %v1295, %v1147
  %1299 = vrot.lane.b32.xlu0 %v1296, 64
  %v1300 = vpop.permute.xlu0 %1299
  %v1302 = vmul.f32 %v1295, %v1300
  %1304 = vrot.lane.b32.xlu0 %v1302, 32
  %v1305 = vpop.permute.xlu0 %1304
  %v1307 = vadd.f32 %v1297, %v1305
  %v1308 = vtanh.pop %v1307
  %1310 = vrot.lane.b32.xlu0 %v1308, 64
  %v1311 = vpop.permute.xlu0 %1310
  %v1313 = vmul.f32 %v1295, %v1311
  %1314 = vst.msk [vmem:[%s6 + $0x2] sm:$0x3] %vm283, %v1313
  %v1315 = vld [vmem:[%s49] sm:$0x1]
  %v1316 = vunpack.c.l.bf16 %v1315
  %v1317 = vpack.c.bf16 %v1233, %v1233
  %1319 = vrot.lane.b32.xlu0 %v1317, 32
  %v1320 = vpop.permute.xlu0 %1319
  %v1322 = vsel %vm102, %v1320, 0
  %1324 = vmatprep.subr.bf16.mxu0 0
  %1325 = vmatpush1.bf16.msra.mxu0 %v200
  %1326 = vmatprep.subr.bf16.mxu0 0
  %1327 = vmatpush1.bf16.msra.mxu0 %v201
  %1328 = vmatprep.subr.bf16.mxu0 0
  %1329 = vmatpush1.bf16.msra.mxu0 0
  %1330 = vmatprep.subr.bf16.mxu0 0
  %1331 = vmatpush1.bf16.msra.mxu0 0
  %1332 = vmatprep.subr.bf16.mxu0 0
  %1333 = vmatpush1.bf16.msra.mxu0 0
  %1334 = vmatprep.subr.bf16.mxu0 0
  %1335 = vmatpush1.bf16.msra.mxu0 0
  %1336 = vmatprep.subr.bf16.mxu0 0
  %1337 = vmatpush1.bf16.msra.mxu0 0
  %1338 = vmatprep.subr.bf16.mxu0 0
  %1339 = vmatpush1.bf16.msra.mxu0 0
  %1340 = vmatprep.subr.bf16.mxu0 0
  %1341 = vmatpush1.bf16.msra.mxu0 0
  %1342 = vmatprep.subr.bf16.mxu0 0
  %1343 = vmatpush1.bf16.msra.mxu0 0
  %1344 = vmatprep.subr.bf16.mxu0 0
  %1345 = vmatpush1.bf16.msra.mxu0 0
  %1346 = vmatprep.subr.bf16.mxu0 0
  %1347 = vmatpush1.bf16.msra.mxu0 0
  %1348 = vmatprep.subr.bf16.mxu0 0
  %1349 = vmatpush1.bf16.msra.mxu0 0
  %1350 = vmatprep.subr.bf16.mxu0 0
  %1351 = vmatpush1.bf16.msra.mxu0 0
  %1352 = vmatprep.subr.bf16.mxu0 0
  %1353 = vmatpush1.bf16.msra.mxu0 0
  %1354 = vmatprep.subr.bf16.mxu0 0
  %1355 = vmatpush1.bf16.msra.mxu0 0
  %1356 = vmatprep.mubr.bf16.mxu0 0
  %1357 = vmatmul.mubr.bf16.gmra.mrb[0].mxu0 %v1322
  %v1358 = vpop.f32.mrb[0].mxu0
  %v1359 = vadd.f32 0.0, %v1358
  %v1360 = vpop.f32.mrb[0].mxu0
  %v1361 = vpop.f32.mrb[0].mxu0
  %v1362 = vpop.f32.mrb[0].mxu0
  %1363 = vdwg.mxu0
  %v1364 = vadd.f32 %v1316, %v1359
  %v1365 = vxor.u32 %v1364, 2147483648
  %v1366 = vmul.f32 %v1365, 1.442695
  %v1367 = vpow.pop %v1366
  %v1368 = vadd.f32 %v1367, 1.0
  %v1369 = vrcp.pop %v1368
  %v1370 = vmul.f32 1.0, %v1369
  %v1371 = vtanh.pop %v1364
  %v1372 = vmul.f32 %v1370, %v1227
  %1374 = vrot.lane.b32.xlu0 %v1371, 64
  %v1375 = vpop.permute.xlu0 %1374
  %v1377 = vmul.f32 %v1370, %v1375
  %1379 = vrot.lane.b32.xlu0 %v1377, 32
  %v1380 = vpop.permute.xlu0 %1379
  %v1382 = vadd.f32 %v1372, %v1380
  %v1383 = vtanh.pop %v1382
  %1385 = vrot.lane.b32.xlu0 %v1383, 64
  %v1386 = vpop.permute.xlu0 %1385
  %v1388 = vmul.f32 %v1370, %v1386
  %1390 = vrot.lane.b32.xlu0 %v1388, 32
  %v1391 = vpop.permute.xlu0 %1390
  %1393 = vst.msk [vmem:[%s57] sm:$0x3] %vm186, %v1391
  %v1396 = vunpack.c.l.s4 1983009808
  %v1397 = vunpack.c.0.s8 %v1396
  %v1398 = vlaneseq
  %v1399 = vshrl.u32 %v1398, 7
  %v1400 = vsub.s32 %v1397, %v1399
  %v1401 = vrot.slane %v1313, %v1400
  %1402 = vrot.lane.b32.xlu0 %v1401, 32
  %v1403 = vpop.permute.xlu0 %1402
  %1405 = vst.msk [vmem:[#allocation2] sm:$0x3] %vm186, %v1403
  %v1408 = vunpack.c.l.s4 1983009808
  %v1409 = vunpack.c.0.s8 %v1408
  %v1410 = vlaneseq
  %v1411 = vshrl.u32 %v1410, 7
  %v1412 = vsub.s32 %v1409, %v1411
  %v1413 = vrot.slane %v1307, %v1412
  %1414 = vrot.lane.b32.xlu0 %v1413, 96
  %v1415 = vpop.permute.xlu0 %1414
  %1417 = vst.msk [vmem:[#allocation3] sm:$0x3] %vm186, %v1415
  %v1419 = vunpack.c.l.s4 1983009808
  %v1420 = vunpack.c.0.s8 %v1419
  %v1421 = vlaneseq
  %v1422 = vshrl.u32 %v1421, 7
  %v1423 = vsub.s32 %v1420, %v1422
  %v1424 = vrot.slane %v1388, %v1423
  %1425 = vrot.lane.b32.xlu0 %v1424, 32
  %v1426 = vpop.permute.xlu0 %1425
  %1428 = vst.msk [vmem:[%s74] sm:$0x3] %vm186, %v1426
  %v1431 = vunpack.c.l.s4 1983009808
  %v1432 = vunpack.c.0.s8 %v1431
  %v1433 = vlaneseq
  %v1434 = vshrl.u32 %v1433, 7
  %v1435 = vsub.s32 %v1432, %v1434
  %v1436 = vrot.slane %v1382, %v1435
  %1437 = vrot.lane.b32.xlu0 %v1436, 96
  %v1438 = vpop.permute.xlu0 %1437
  %1440 = vst.msk [vmem:[%s77] sm:$0x3] %vm186, %v1438
  // Predicated region
  $region30: #{encoder_forward.2} parent=0 // pred_check
    %p1441 = pneg %p60
  $region31: #{encoder_forward.2} parent=0 // pred_check_branch
    %1443 = sbr.rel (%p1441) target = $region33
  $region32: #{encoder_forward.2} parent=0 // pred_region
    %1444 = vst.msk [vmem:[%s8] sm:$0x3] %vm186, %v1403
    %1445 = vst.msk [vmem:[%s9] sm:$0x3] %vm186, %v1415
    %s1446 = scalar_lea.vmem %s8, 2
    %1447 = vst.msk [vmem:[%s1446] sm:$0x3] %vm186, %v1426
    %s1448 = scalar_lea.vmem %s9, 2
    %1449 = vst.msk [vmem:[%s1448] sm:$0x3] %vm186, %v1438
  $region33: #{encoder_forward.2} parent=0 // pred_fallthru
    _
  %s1450 = ssub.s32 0, 0
  %p1451 = scmp.lt.s32.totalorder %s1450, 0
  %s1452 = scalar_select %p1451, %s1450, 0
  %s1453 = smul.addr %s1452, 2
  %s1454 = smul.addr %s1453, 2
  %s1455 = scalar_lea.vmem %s7, %s1454
  // Predicated region
  $region34: #{encoder_forward.2} parent=0 // pred_check
    _
  $region35: #{encoder_forward.2} parent=0 // pred_check_branch
    %1457 = sbr.rel (0) target = $region37
  $region36: #{encoder_forward.2} parent=0 // pred_region
    _
  $region37: #{encoder_forward.2} parent=0 // pred_fallthru
    _
  // Predicated region
  $region38: #{encoder_forward.2} parent=0 // pred_check
    _
  $region39: #{encoder_forward.2} parent=0 // pred_check_branch
    %1459 = sbr.rel (0) target = $region41
  $region40: #{encoder_forward.2} parent=0 // pred_region
    %s1460 = ssub.s32 0, 0
  $region41: #{encoder_forward.2} parent=0 // pred_fallthru
    _
  // Predicated region
  $region42: #{encoder_forward.2} parent=0 // pred_check
    _
  $region43: #{encoder_forward.2} parent=0 // pred_check_branch
    %1462 = sbr.rel (0) target = $region45
  $region44: #{encoder_forward.2} parent=0 // pred_region
    _
  $region45: #{encoder_forward.2} parent=0 // pred_fallthru
    _
  // Predicated region
  $region46: #{encoder_forward.2} parent=0 // pred_check
    _
  $region47: #{encoder_forward.2} parent=0 // pred_check_branch
    %1464 = sbr.rel (0) target = $region49
  $region48: #{encoder_forward.2} parent=0 // pred_region
    _
  $region49: #{encoder_forward.2} parent=0 // pred_fallthru
    _
  // Predicated region
  $region50: #{encoder_forward.2} parent=0 // pred_check
    _
  $region51: #{encoder_forward.2} parent=0 // pred_check_branch
    %1466 = sbr.rel (0) target = $region53
  $region52: #{encoder_forward.2} parent=0 // pred_region
    _
  $region53: #{encoder_forward.2} parent=0 // pred_fallthru
    _
  // Predicated region
  $region54: #{encoder_forward.2} parent=0 // pred_check
    _
  $region55: #{encoder_forward.2} parent=0 // pred_check_branch
    %1468 = sbr.rel (0) target = $region57
  $region56: #{encoder_forward.2} parent=0 // pred_region
    %s1469 = ssub.s32 0, 0
    %p1470 = scmp.lt.s32.totalorder %s1469, 0
    %s1471 = scalar_select %p1470, %s1469, 0
    %s1472 = smul.addr %s1471, 2
    %s1473 = smul.addr %s1472, 2
    %s1474 = scalar_lea.vmem %s7, %s1473
  $region57: #{encoder_forward.2} parent=0 // pred_fallthru
    _
  // Predicated region
  $region58: #{encoder_forward.2} parent=0 // pred_check
    _
  $region59: #{encoder_forward.2} parent=0 // pred_check_branch
    %1476 = sbr.rel (0) target = $region61
  $region60: #{encoder_forward.2} parent=0 // pred_region
    _
  $region61: #{encoder_forward.2} parent=0 // pred_fallthru
    _
  // Predicated region
  $region62: #{encoder_forward.2} parent=0 // pred_check
    _
  $region63: #{encoder_forward.2} parent=0 // pred_check_branch
    %1478 = sbr.rel (0) target = $region65
  $region64: #{encoder_forward.2} parent=0 // pred_region
    _
  $region65: #{encoder_forward.2} parent=0 // pred_fallthru
    _

// kernel: encoder_forward.3
$region0: #{encoder_forward.3}
  #allocation0 [shape = 'u32[]', space=smem, size = 0x4, offset = 0x4, fixed_abs, tag = 'smem constant byte address 0x4 - core index']
  #allocation1 [shape = 'u32[144,128]{1,0:T(1,128)}', space=vmem, size = 0x12000, scoped, tag = 'internal scratch']
  #allocation2 [shape = 'f32[2,2,32]{2,1,0:T(2,128)}', space=vmem, size = 0x800, scoped, tag = 'scratch operand']
  #allocation3 [shape = 'f32[2,2,32]{2,1,0:T(2,128)}', space=vmem, size = 0x800, scoped, tag = 'scratch operand']
  %s0 = inlined_call_operand.vmem [shape: bf16[8,2,128], index: 0, kind: input, shape index: {}]
  %s1 = inlined_call_operand.vmem [shape: bf16[8,2,128], index: 1, kind: input, shape index: {}]
  %s2 = inlined_call_operand.vmem [shape: bf16[32,128], index: 2, kind: input, shape index: {}]
  %s3 = inlined_call_operand.vmem [shape: bf16[32,128], index: 3, kind: input, shape index: {}]
  %s4 = inlined_call_operand.vmem [shape: f32[2,2,32], index: 4, kind: input, shape index: {}]
  %s5 = inlined_call_operand.vmem [shape: f32[2,2,32], index: 5, kind: input, shape index: {}]
  %s6 = inlined_call_operand.hbm [shape: f32[1,2,256], index: 6, kind: output, shape index: {0}]
  %s7 = inlined_call_operand.hbm [shape: f32[1,2,256], index: 7, kind: output, shape index: {1}]
  %s8 = inlined_call_operand.vmem [shape: f32[2,2,32], index: 8, kind: output, shape index: {2}]
  %s9 = inlined_call_operand.vmem [shape: f32[2,2,32], index: 9, kind: output, shape index: {3}]
  %10 = xla_tuple %s6, %s7, %s8, %s9
  %s11 = sld [smem:[#allocation0]]
  $region66: #{encoder_forward.3} parent=0
    _
  %s13 = ssub.s32 1, %s11
  %s14 = scalar_select 0, %s13, %s11
  $region1: #{encoder_forward.3} parent=0
    #allocation4 [shape = 'u8[2048]{0}', space=vmem, size = 0x800, scoped, tag = 'output window, operand 0, single buffered']
    #allocation5 [shape = 's32[1]{0}', space=sflag, size = 0x4, scoped, tag = 'scoped memory for encoder_forward.3']
    #allocation6 [shape = 'u8[2048]{0}', space=vmem, size = 0x800, scoped, tag = 'output window, operand 1, single buffered']
    #allocation7 [shape = 's32[1]{0}', space=sflag, size = 0x4, scoped, tag = 'scoped memory for encoder_forward.3']
    %15 = vsyncpa [#allocation5], 0
    %16 = vsyncpa [#allocation7], 0
    // Predicated region
    $region2: #{encoder_forward.3} parent=1 // pred_check
      _
    $region3: #{encoder_forward.3} parent=1 // pred_check_branch
      %18 = sbr.rel (0) target = $region5
    $region4: #{encoder_forward.3} parent=1 // pred_region
      _
    $region5: #{encoder_forward.3} parent=1 // pred_fallthru
      _
    // Predicated region
    $region6: #{encoder_forward.3} parent=1 // pred_check
      _
    $region7: #{encoder_forward.3} parent=1 // pred_check_branch
      %20 = sbr.rel (0) target = $region9
    $region8: #{encoder_forward.3} parent=1 // pred_region
      %s21 = ssub.s32 0, 0
      %s22 = smul.u32 8, %s21
      %p23 = scmp.lt.s32.totalorder %s22, 7
      %s24 = scalar_select %p23, %s22, 7
      %s25 = scalar_lea.vmem %s1, %s24
      %s26 = ssub.s32 0, 0
      %s27 = smul.u32 8, %s26
    $region9: #{encoder_forward.3} parent=1 // pred_fallthru
      _
    // Predicated region
    $region10: #{encoder_forward.3} parent=1 // pred_check
      _
    $region11: #{encoder_forward.3} parent=1 // pred_check_branch
      %29 = sbr.rel (0) target = $region13
    $region12: #{encoder_forward.3} parent=1 // pred_region
      _
    $region13: #{encoder_forward.3} parent=1 // pred_fallthru
      _
    // Predicated region
    $region14: #{encoder_forward.3} parent=1 // pred_check
      _
    $region15: #{encoder_forward.3} parent=1 // pred_check_branch
      %31 = sbr.rel (0) target = $region17
    $region16: #{encoder_forward.3} parent=1 // pred_region
      _
    $region17: #{encoder_forward.3} parent=1 // pred_fallthru
      _
    // Predicated region
    $region18: #{encoder_forward.3} parent=1 // pred_check
      _
    $region19: #{encoder_forward.3} parent=1 // pred_check_branch
      %33 = sbr.rel (0) target = $region21
    $region20: #{encoder_forward.3} parent=1 // pred_region
      _
    $region21: #{encoder_forward.3} parent=1 // pred_fallthru
      _
    // Predicated region
    $region22: #{encoder_forward.3} parent=1 // pred_check
      _
    $region23: #{encoder_forward.3} parent=1 // pred_check_branch
      %35 = sbr.rel (0) target = $region25
    $region24: #{encoder_forward.3} parent=1 // pred_region
      _
    $region25: #{encoder_forward.3} parent=1 // pred_fallthru
      _
    %s36 = ssub.s32 0, 0
    %s37 = smul.u32 8, %s36
    %p38 = scmp.lt.s32.totalorder %s37, 7
    %s39 = scalar_select %p38, %s37, 7
    %s40 = scalar_lea.vmem %s1, %s39
    %s41 = ssub.s32 0, 0
    %s42 = smul.u32 8, %s41
    %p43 = scmp.lt.s32.totalorder %s42, 7
    %s44 = scalar_select %p43, %s42, 7
    %s45 = scalar_lea.vmem %s1, %s44
    %s46 = ssub.s32 0, 0
    %s47 = smul.u32 8, %s46
    %s48 = ssub.s32 0, 0
    %p50 = scmp.eq.s32.totalorder 0, 0
    // Predicated region
    $region26: #{encoder_forward.3} parent=1 // pred_check
      %p51 = pneg %p50
    $region27: #{encoder_forward.3} parent=1 // pred_check_branch
      %53 = sbr.rel (%p51) target = $region29
    $region28: #{encoder_forward.3} parent=1 // pred_region
      %v54 = vld [vmem:[%s4] sm:$0x3]
      %v55 = vld [vmem:[%s4 + $0x2] sm:$0x3]
      %vm56 = vcmask 254976
      %57 = vst.msk [vmem:[#allocation2] sm:$0x3] %vm56, %v54
      %58 = vst.msk [vmem:[#allocation2 + $0x2] sm:$0x3] %vm56, %v55
      %v59 = vld [vmem:[%s5] sm:$0x3]
      %v60 = vld [vmem:[%s5 + $0x2] sm:$0x3]
      %61 = vst.msk [vmem:[#allocation3] sm:$0x3] %vm56, %v59
      %62 = vst.msk [vmem:[#allocation3 + $0x2] sm:$0x3] %vm56, %v60
    $region29: #{encoder_forward.3} parent=1 // pred_fallthru
      _
    %v63 = vld [vmem:[#allocation2] sm:$0x3]
    %s64 = scalar_lea.vmem [#allocation2], 2
    %v65 = vld [vmem:[%s64] sm:$0x3]
    %v66 = vld [vmem:[#allocation3] sm:$0x3]
    %s67 = scalar_lea.vmem [#allocation3], 2
    %v68 = vld [vmem:[%s67] sm:$0x3]
    %v69 = vld [vmem:[%s2] sm:$0xf]
    %v70 = vld [vmem:[%s2 + $0x4] sm:$0xf]
    %v71 = vld [vmem:[%s2 + $0x8] sm:$0xf]
    %v72 = vld [vmem:[%s2 + $0xc] sm:$0xf]
    %v73 = vld [vmem:[%s3] sm:$0xf]
    %v74 = vld [vmem:[%s3 + $0x4] sm:$0xf]
    %v75 = vld [vmem:[%s3 + $0x8] sm:$0xf]
    %v76 = vld [vmem:[%s3 + $0xc] sm:$0xf]
    %v77 = vld [vmem:[%s0] sm:$0x1]
    %v78 = vunpack.c.l.bf16 %v77
    %v79 = vpack.c.bf16 %v63, %v63
    %v84 = vunpack.c.l.b16 %v69
    %v85 = vunpack.c.l.b16 %v70
    %v86 = vunpack.c.l.b16 %v71
    %v87 = vunpack.c.l.b16 %v72
    %v88 = vpack.c.b16 %v85, %v84
    %v89 = vpack.c.b16 %v87, %v86
    %vm92 = vcmask 261120
    %v94 = vsel %vm92, %v79, 0
    %96 = vmatprep.subr.bf16.mxu0 0
    %97 = vmatpush1.bf16.msra.mxu0 %v88
    %98 = vmatprep.subr.bf16.mxu0 0
    %99 = vmatpush1.bf16.msra.mxu0 %v89
    %100 = vmatprep.subr.bf16.mxu0 0
    %101 = vmatpush1.bf16.msra.mxu0 0
    %102 = vmatprep.subr.bf16.mxu0 0
    %103 = vmatpush1.bf16.msra.mxu0 0
    %104 = vmatprep.subr.bf16.mxu0 0
    %105 = vmatpush1.bf16.msra.mxu0 0
    %106 = vmatprep.subr.bf16.mxu0 0
    %107 = vmatpush1.bf16.msra.mxu0 0
    %108 = vmatprep.subr.bf16.mxu0 0
    %109 = vmatpush1.bf16.msra.mxu0 0
    %110 = vmatprep.subr.bf16.mxu0 0
    %111 = vmatpush1.bf16.msra.mxu0 0
    %112 = vmatprep.subr.bf16.mxu0 0
    %113 = vmatpush1.bf16.msra.mxu0 0
    %114 = vmatprep.subr.bf16.mxu0 0
    %115 = vmatpush1.bf16.msra.mxu0 0
    %116 = vmatprep.subr.bf16.mxu0 0
    %117 = vmatpush1.bf16.msra.mxu0 0
    %118 = vmatprep.subr.bf16.mxu0 0
    %119 = vmatpush1.bf16.msra.mxu0 0
    %120 = vmatprep.subr.bf16.mxu0 0
    %121 = vmatpush1.bf16.msra.mxu0 0
    %122 = vmatprep.subr.bf16.mxu0 0
    %123 = vmatpush1.bf16.msra.mxu0 0
    %124 = vmatprep.subr.bf16.mxu0 0
    %125 = vmatpush1.bf16.msra.mxu0 0
    %126 = vmatprep.subr.bf16.mxu0 0
    %127 = vmatpush1.bf16.msra.mxu0 0
    %128 = vmatprep.mubr.bf16.mxu0 0
    %129 = vmatmul.mubr.bf16.gmra.mrb[0].mxu0 %v94
    %v130 = vpop.f32.mrb[0].mxu0
    %v131 = vadd.f32 0.0, %v130
    %v132 = vpop.f32.mrb[0].mxu0
    %v133 = vpop.f32.mrb[0].mxu0
    %v134 = vpop.f32.mrb[0].mxu0
    %135 = vdwg.mxu0
    %v136 = vadd.f32 %v78, %v131
    %v137 = vxor.u32 %v136, 2147483648
    %v138 = vmul.f32 %v137, 1.442695
    %v139 = vpow.pop %v138
    %v140 = vadd.f32 %v139, 1.0
    %v141 = vrcp.pop %v140
    %v142 = vmul.f32 1.0, %v141
    %v143 = vtanh.pop %v136
    %v146 = vunpack.c.l.s4 1983009808
    %v147 = vunpack.c.0.s8 %v146
    %v148 = vlaneseq
    %v149 = vshrl.u32 %v148, 7
    %v150 = vsub.s32 %v147, %v149
    %v151 = vrot.slane %v66, %v150
    %152 = vrot.lane.b32.xlu0 %v151, 32
    %v153 = vpop.permute.xlu0 %152
    %v155 = vmul.f32 %v142, %v153
    %157 = vrot.lane.b32.xlu0 %v143, 64
    %v158 = vpop.permute.xlu0 %157
    %v160 = vmul.f32 %v142, %v158
    %162 = vrot.lane.b32.xlu0 %v160, 32
    %v163 = vpop.permute.xlu0 %162
    %v165 = vadd.f32 %v155, %v163
    %v166 = vtanh.pop %v165
    %168 = vrot.lane.b32.xlu0 %v166, 64
    %v169 = vpop.permute.xlu0 %168
    %v171 = vmul.f32 %v142, %v169
    %173 = vrot.lane.b32.xlu0 %v171, 32
    %v174 = vpop.permute.xlu0 %173
    %vm176 = vcmask 254976
    %177 = vst.msk [vmem:[#allocation4] sm:$0x3] %vm176, %v174
    %s178 = scalar_lea.vmem %s45, 7
    %v179 = vld [vmem:[%s178] sm:$0x1]
    %v180 = vunpack.c.l.bf16 %v179
    %v181 = vpack.c.bf16 %v65, %v65
    %v186 = vunpack.c.l.b16 %v73
    %v187 = vunpack.c.l.b16 %v74
    %v188 = vunpack.c.l.b16 %v75
    %v189 = vunpack.c.l.b16 %v76
    %v190 = vpack.c.b16 %v187, %v186
    %v191 = vpack.c.b16 %v189, %v188
    %v195 = vsel %vm92, %v181, 0
    %197 = vmatprep.subr.bf16.mxu0 0
    %198 = vmatpush1.bf16.msra.mxu0 %v190
    %199 = vmatprep.subr.bf16.mxu0 0
    %200 = vmatpush1.bf16.msra.mxu0 %v191
    %201 = vmatprep.subr.bf16.mxu0 0
    %202 = vmatpush1.bf16.msra.mxu0 0
    %203 = vmatprep.subr.bf16.mxu0 0
    %204 = vmatpush1.bf16.msra.mxu0 0
    %205 = vmatprep.subr.bf16.mxu0 0
    %206 = vmatpush1.bf16.msra.mxu0 0
    %207 = vmatprep.subr.bf16.mxu0 0
    %208 = vmatpush1.bf16.msra.mxu0 0
    %209 = vmatprep.subr.bf16.mxu0 0
    %210 = vmatpush1.bf16.msra.mxu0 0
    %211 = vmatprep.subr.bf16.mxu0 0
    %212 = vmatpush1.bf16.msra.mxu0 0
    %213 = vmatprep.subr.bf16.mxu0 0
    %214 = vmatpush1.bf16.msra.mxu0 0
    %215 = vmatprep.subr.bf16.mxu0 0
    %216 = vmatpush1.bf16.msra.mxu0 0
    %217 = vmatprep.subr.bf16.mxu0 0
    %218 = vmatpush1.bf16.msra.mxu0 0
    %219 = vmatprep.subr.bf16.mxu0 0
    %220 = vmatpush1.bf16.msra.mxu0 0
    %221 = vmatprep.subr.bf16.mxu0 0
    %222 = vmatpush1.bf16.msra.mxu0 0
    %223 = vmatprep.subr.bf16.mxu0 0
    %224 = vmatpush1.bf16.msra.mxu0 0
    %225 = vmatprep.subr.bf16.mxu0 0
    %226 = vmatpush1.bf16.msra.mxu0 0
    %227 = vmatprep.subr.bf16.mxu0 0
    %228 = vmatpush1.bf16.msra.mxu0 0
    %229 = vmatprep.mubr.bf16.mxu0 0
    %230 = vmatmul.mubr.bf16.gmra.mrb[0].mxu0 %v195
    %v231 = vpop.f32.mrb[0].mxu0
    %v232 = vadd.f32 0.0, %v231
    %v233 = vpop.f32.mrb[0].mxu0
    %v234 = vpop.f32.mrb[0].mxu0
    %v235 = vpop.f32.mrb[0].mxu0
    %236 = vdwg.mxu0
    %v237 = vadd.f32 %v180, %v232
    %v238 = vxor.u32 %v237, 2147483648
    %v239 = vmul.f32 %v238, 1.442695
    %v240 = vpow.pop %v239
    %v241 = vadd.f32 %v240, 1.0
    %v242 = vrcp.pop %v241
    %v243 = vmul.f32 1.0, %v242
    %v244 = vtanh.pop %v237
    %v247 = vunpack.c.l.s4 1983009808
    %v248 = vunpack.c.0.s8 %v247
    %v249 = vlaneseq
    %v250 = vshrl.u32 %v249, 7
    %v251 = vsub.s32 %v248, %v250
    %v252 = vrot.slane %v68, %v251
    %253 = vrot.lane.b32.xlu0 %v252, 32
    %v254 = vpop.permute.xlu0 %253
    %v256 = vmul.f32 %v243, %v254
    %258 = vrot.lane.b32.xlu0 %v244, 64
    %v259 = vpop.permute.xlu0 %258
    %v261 = vmul.f32 %v243, %v259
    %263 = vrot.lane.b32.xlu0 %v261, 32
    %v264 = vpop.permute.xlu0 %263
    %v266 = vadd.f32 %v256, %v264
    %v267 = vtanh.pop %v266
    %269 = vrot.lane.b32.xlu0 %v267, 64
    %v270 = vpop.permute.xlu0 %269
    %v272 = vmul.f32 %v243, %v270
    %vm273 = vcmask 1042176
    %274 = vst.msk [vmem:[#allocation6 + $0x2] sm:$0x3] %vm273, %v272
    %s275 = scalar_lea.vmem %s0, 1
    %v276 = vld [vmem:[%s275] sm:$0x1]
    %v277 = vunpack.c.l.bf16 %v276
    %v278 = vpack.c.bf16 %v171, %v171
    %280 = vrot.lane.b32.xlu0 %v278, 32
    %v281 = vpop.permute.xlu0 %280
    %v283 = vsel %vm92, %v281, 0
    %285 = vmatprep.subr.bf16.mxu0 0
    %286 = vmatpush1.bf16.msra.mxu0 %v88
    %287 = vmatprep.subr.bf16.mxu0 0
    %288 = vmatpush1.bf16.msra.mxu0 %v89
    %289 = vmatprep.subr.bf16.mxu0 0
    %290 = vmatpush1.bf16.msra.mxu0 0
    %291 = vmatprep.subr.bf16.mxu0 0
    %292 = vmatpush1.bf16.msra.mxu0 0
    %293 = vmatprep.subr.bf16.mxu0 0
    %294 = vmatpush1.bf16.msra.mxu0 0
    %295 = vmatprep.subr.bf16.mxu0 0
    %296 = vmatpush1.bf16.msra.mxu0 0
    %297 = vmatprep.subr.bf16.mxu0 0
    %298 = vmatpush1.bf16.msra.mxu0 0
    %299 = vmatprep.subr.bf16.mxu0 0
    %300 = vmatpush1.bf16.msra.mxu0 0
    %301 = vmatprep.subr.bf16.mxu0 0
    %302 = vmatpush1.bf16.msra.mxu0 0
    %303 = vmatprep.subr.bf16.mxu0 0
    %304 = vmatpush1.bf16.msra.mxu0 0
    %305 = vmatprep.subr.bf16.mxu0 0
    %306 = vmatpush1.bf16.msra.mxu0 0
    %307 = vmatprep.subr.bf16.mxu0 0
    %308 = vmatpush1.bf16.msra.mxu0 0
    %309 = vmatprep.subr.bf16.mxu0 0
    %310 = vmatpush1.bf16.msra.mxu0 0
    %311 = vmatprep.subr.bf16.mxu0 0
    %312 = vmatpush1.bf16.msra.mxu0 0
    %313 = vmatprep.subr.bf16.mxu0 0
    %314 = vmatpush1.bf16.msra.mxu0 0
    %315 = vmatprep.subr.bf16.mxu0 0
    %316 = vmatpush1.bf16.msra.mxu0 0
    %317 = vmatprep.mubr.bf16.mxu0 0
    %318 = vmatmul.mubr.bf16.gmra.mrb[0].mxu0 %v283
    %v319 = vpop.f32.mrb[0].mxu0
    %v320 = vadd.f32 0.0, %v319
    %v321 = vpop.f32.mrb[0].mxu0
    %v322 = vpop.f32.mrb[0].mxu0
    %v323 = vpop.f32.mrb[0].mxu0
    %324 = vdwg.mxu0
    %v325 = vadd.f32 %v277, %v320
    %v326 = vxor.u32 %v325, 2147483648
    %v327 = vmul.f32 %v326, 1.442695
    %v328 = vpow.pop %v327
    %v329 = vadd.f32 %v328, 1.0
    %v330 = vrcp.pop %v329
    %v331 = vmul.f32 1.0, %v330
    %v332 = vtanh.pop %v325
    %v333 = vmul.f32 %v331, %v165
    %335 = vrot.lane.b32.xlu0 %v332, 64
    %v336 = vpop.permute.xlu0 %335
    %v338 = vmul.f32 %v331, %v336
    %340 = vrot.lane.b32.xlu0 %v338, 32
    %v341 = vpop.permute.xlu0 %340
    %v343 = vadd.f32 %v333, %v341
    %v344 = vtanh.pop %v343
    %346 = vrot.lane.b32.xlu0 %v344, 64
    %v347 = vpop.permute.xlu0 %346
    %v349 = vmul.f32 %v331, %v347
    %351 = vrot.lane.b32.xlu0 %v349, 64
    %v352 = vpop.permute.xlu0 %351
    %vm354 = vcmask 517376
    %355 = vst.msk [vmem:[#allocation4] sm:$0x3] %vm354, %v352
    %s356 = scalar_lea.vmem %s45, 6
    %v357 = vld [vmem:[%s356] sm:$0x1]
    %v358 = vunpack.c.l.bf16 %v357
    %v359 = vpack.c.bf16 %v272, %v272
    %361 = vrot.lane.b32.xlu0 %v359, 32
    %v362 = vpop.permute.xlu0 %361
    %v364 = vsel %vm92, %v362, 0
    %366 = vmatprep.subr.bf16.mxu0 0
    %367 = vmatpush1.bf16.msra.mxu0 %v190
    %368 = vmatprep.subr.bf16.mxu0 0
    %369 = vmatpush1.bf16.msra.mxu0 %v191
    %370 = vmatprep.subr.bf16.mxu0 0
    %371 = vmatpush1.bf16.msra.mxu0 0
    %372 = vmatprep.subr.bf16.mxu0 0
    %373 = vmatpush1.bf16.msra.mxu0 0
    %374 = vmatprep.subr.bf16.mxu0 0
    %375 = vmatpush1.bf16.msra.mxu0 0
    %376 = vmatprep.subr.bf16.mxu0 0
    %377 = vmatpush1.bf16.msra.mxu0 0
    %378 = vmatprep.subr.bf16.mxu0 0
    %379 = vmatpush1.bf16.msra.mxu0 0
    %380 = vmatprep.subr.bf16.mxu0 0
    %381 = vmatpush1.bf16.msra.mxu0 0
    %382 = vmatprep.subr.bf16.mxu0 0
    %383 = vmatpush1.bf16.msra.mxu0 0
    %384 = vmatprep.subr.bf16.mxu0 0
    %385 = vmatpush1.bf16.msra.mxu0 0
    %386 = vmatprep.subr.bf16.mxu0 0
    %387 = vmatpush1.bf16.msra.mxu0 0
    %388 = vmatprep.subr.bf16.mxu0 0
    %389 = vmatpush1.bf16.msra.mxu0 0
    %390 = vmatprep.subr.bf16.mxu0 0
    %391 = vmatpush1.bf16.msra.mxu0 0
    %392 = vmatprep.subr.bf16.mxu0 0
    %393 = vmatpush1.bf16.msra.mxu0 0
    %394 = vmatprep.subr.bf16.mxu0 0
    %395 = vmatpush1.bf16.msra.mxu0 0
    %396 = vmatprep.subr.bf16.mxu0 0
    %397 = vmatpush1.bf16.msra.mxu0 0
    %398 = vmatprep.mubr.bf16.mxu0 0
    %399 = vmatmul.mubr.bf16.gmra.mrb[0].mxu0 %v364
    %v400 = vpop.f32.mrb[0].mxu0
    %v401 = vadd.f32 0.0, %v400
    %v402 = vpop.f32.mrb[0].mxu0
    %v403 = vpop.f32.mrb[0].mxu0
    %v404 = vpop.f32.mrb[0].mxu0
    %405 = vdwg.mxu0
    %v406 = vadd.f32 %v358, %v401
    %v407 = vxor.u32 %v406, 2147483648
    %v408 = vmul.f32 %v407, 1.442695
    %v409 = vpow.pop %v408
    %v410 = vadd.f32 %v409, 1.0
    %v411 = vrcp.pop %v410
    %v412 = vmul.f32 1.0, %v411
    %v413 = vtanh.pop %v406
    %v414 = vmul.f32 %v412, %v266
    %416 = vrot.lane.b32.xlu0 %v413, 64
    %v417 = vpop.permute.xlu0 %416
    %v419 = vmul.f32 %v412, %v417
    %421 = vrot.lane.b32.xlu0 %v419, 32
    %v422 = vpop.permute.xlu0 %421
    %v424 = vadd.f32 %v414, %v422
    %v425 = vtanh.pop %v424
    %427 = vrot.lane.b32.xlu0 %v425, 64
    %v428 = vpop.permute.xlu0 %427
    %v430 = vmul.f32 %v412, %v428
    %432 = vrot.lane.b32.xlu0 %v430, 96
    %v433 = vpop.permute.xlu0 %432
    %vm435 = vcmask 779776
    %436 = vst.msk [vmem:[#allocation6 + $0x2] sm:$0x3] %vm435, %v433
    %s437 = scalar_lea.vmem %s0, 2
    %v438 = vld [vmem:[%s437] sm:$0x1]
    %v439 = vunpack.c.l.bf16 %v438
    %v440 = vpack.c.bf16 %v349, %v349
    %442 = vrot.lane.b32.xlu0 %v440, 32
    %v443 = vpop.permute.xlu0 %442
    %v445 = vsel %vm92, %v443, 0
    %447 = vmatprep.subr.bf16.mxu0 0
    %448 = vmatpush1.bf16.msra.mxu0 %v88
    %449 = vmatprep.subr.bf16.mxu0 0
    %450 = vmatpush1.bf16.msra.mxu0 %v89
    %451 = vmatprep.subr.bf16.mxu0 0
    %452 = vmatpush1.bf16.msra.mxu0 0
    %453 = vmatprep.subr.bf16.mxu0 0
    %454 = vmatpush1.bf16.msra.mxu0 0
    %455 = vmatprep.subr.bf16.mxu0 0
    %456 = vmatpush1.bf16.msra.mxu0 0
    %457 = vmatprep.subr.bf16.mxu0 0
    %458 = vmatpush1.bf16.msra.mxu0 0
    %459 = vmatprep.subr.bf16.mxu0 0
    %460 = vmatpush1.bf16.msra.mxu0 0
    %461 = vmatprep.subr.bf16.mxu0 0
    %462 = vmatpush1.bf16.msra.mxu0 0
    %463 = vmatprep.subr.bf16.mxu0 0
    %464 = vmatpush1.bf16.msra.mxu0 0
    %465 = vmatprep.subr.bf16.mxu0 0
    %466 = vmatpush1.bf16.msra.mxu0 0
    %467 = vmatprep.subr.bf16.mxu0 0
    %468 = vmatpush1.bf16.msra.mxu0 0
    %469 = vmatprep.subr.bf16.mxu0 0
    %470 = vmatpush1.bf16.msra.mxu0 0
    %471 = vmatprep.subr.bf16.mxu0 0
    %472 = vmatpush1.bf16.msra.mxu0 0
    %473 = vmatprep.subr.bf16.mxu0 0
    %474 = vmatpush1.bf16.msra.mxu0 0
    %475 = vmatprep.subr.bf16.mxu0 0
    %476 = vmatpush1.bf16.msra.mxu0 0
    %477 = vmatprep.subr.bf16.mxu0 0
    %478 = vmatpush1.bf16.msra.mxu0 0
    %479 = vmatprep.mubr.bf16.mxu0 0
    %480 = vmatmul.mubr.bf16.gmra.mrb[0].mxu0 %v445
    %v481 = vpop.f32.mrb[0].mxu0
    %v482 = vadd.f32 0.0, %v481
    %v483 = vpop.f32.mrb[0].mxu0
    %v484 = vpop.f32.mrb[0].mxu0
    %v485 = vpop.f32.mrb[0].mxu0
    %486 = vdwg.mxu0
    %v487 = vadd.f32 %v439, %v482
    %v488 = vxor.u32 %v487, 2147483648
    %v489 = vmul.f32 %v488, 1.442695
    %v490 = vpow.pop %v489
    %v491 = vadd.f32 %v490, 1.0
    %v492 = vrcp.pop %v491
    %v493 = vmul.f32 1.0, %v492
    %v494 = vtanh.pop %v487
    %v495 = vmul.f32 %v493, %v343
    %497 = vrot.lane.b32.xlu0 %v494, 64
    %v498 = vpop.permute.xlu0 %497
    %v500 = vmul.f32 %v493, %v498
    %502 = vrot.lane.b32.xlu0 %v500, 32
    %v503 = vpop.permute.xlu0 %502
    %v505 = vadd.f32 %v495, %v503
    %v506 = vtanh.pop %v505
    %508 = vrot.lane.b32.xlu0 %v506, 64
    %v509 = vpop.permute.xlu0 %508
    %v511 = vmul.f32 %v493, %v509
    %513 = vrot.lane.b32.xlu0 %v511, 96
    %v514 = vpop.permute.xlu0 %513
    %516 = vst.msk [vmem:[#allocation4] sm:$0x3] %vm435, %v514
    %s517 = scalar_lea.vmem %s45, 5
    %v518 = vld [vmem:[%s517] sm:$0x1]
    %v519 = vunpack.c.l.bf16 %v518
    %v520 = vpack.c.bf16 %v430, %v430
    %522 = vrot.lane.b32.xlu0 %v520, 32
    %v523 = vpop.permute.xlu0 %522
    %v525 = vsel %vm92, %v523, 0
    %527 = vmatprep.subr.bf16.mxu0 0
    %528 = vmatpush1.bf16.msra.mxu0 %v190
    %529 = vmatprep.subr.bf16.mxu0 0
    %530 = vmatpush1.bf16.msra.mxu0 %v191
    %531 = vmatprep.subr.bf16.mxu0 0
    %532 = vmatpush1.bf16.msra.mxu0 0
    %533 = vmatprep.subr.bf16.mxu0 0
    %534 = vmatpush1.bf16.msra.mxu0 0
    %535 = vmatprep.subr.bf16.mxu0 0
    %536 = vmatpush1.bf16.msra.mxu0 0
    %537 = vmatprep.subr.bf16.mxu0 0
    %538 = vmatpush1.bf16.msra.mxu0 0
    %539 = vmatprep.subr.bf16.mxu0 0
    %540 = vmatpush1.bf16.msra.mxu0 0
    %541 = vmatprep.subr.bf16.mxu0 0
    %542 = vmatpush1.bf16.msra.mxu0 0
    %543 = vmatprep.subr.bf16.mxu0 0
    %544 = vmatpush1.bf16.msra.mxu0 0
    %545 = vmatprep.subr.bf16.mxu0 0
    %546 = vmatpush1.bf16.msra.mxu0 0
    %547 = vmatprep.subr.bf16.mxu0 0
    %548 = vmatpush1.bf16.msra.mxu0 0
    %549 = vmatprep.subr.bf16.mxu0 0
    %550 = vmatpush1.bf16.msra.mxu0 0
    %551 = vmatprep.subr.bf16.mxu0 0
    %552 = vmatpush1.bf16.msra.mxu0 0
    %553 = vmatprep.subr.bf16.mxu0 0
    %554 = vmatpush1.bf16.msra.mxu0 0
    %555 = vmatprep.subr.bf16.mxu0 0
    %556 = vmatpush1.bf16.msra.mxu0 0
    %557 = vmatprep.subr.bf16.mxu0 0
    %558 = vmatpush1.bf16.msra.mxu0 0
    %559 = vmatprep.mubr.bf16.mxu0 0
    %560 = vmatmul.mubr.bf16.gmra.mrb[0].mxu0 %v525
    %v561 = vpop.f32.mrb[0].mxu0
    %v562 = vadd.f32 0.0, %v561
    %v563 = vpop.f32.mrb[0].mxu0
    %v564 = vpop.f32.mrb[0].mxu0
    %v565 = vpop.f32.mrb[0].mxu0
    %566 = vdwg.mxu0
    %v567 = vadd.f32 %v519, %v562
    %v568 = vxor.u32 %v567, 2147483648
    %v569 = vmul.f32 %v568, 1.442695
    %v570 = vpow.pop %v569
    %v571 = vadd.f32 %v570, 1.0
    %v572 = vrcp.pop %v571
    %v573 = vmul.f32 1.0, %v572
    %v574 = vtanh.pop %v567
    %v575 = vmul.f32 %v573, %v424
    %577 = vrot.lane.b32.xlu0 %v574, 64
    %v578 = vpop.permute.xlu0 %577
    %v580 = vmul.f32 %v573, %v578
    %582 = vrot.lane.b32.xlu0 %v580, 32
    %v583 = vpop.permute.xlu0 %582
    %v585 = vadd.f32 %v575, %v583
    %v586 = vtanh.pop %v585
    %588 = vrot.lane.b32.xlu0 %v586, 64
    %v589 = vpop.permute.xlu0 %588
    %v591 = vmul.f32 %v573, %v589
    %593 = vrot.lane.b32.xlu0 %v591, 64
    %v594 = vpop.permute.xlu0 %593
    %596 = vst.msk [vmem:[#allocation6 + $0x2] sm:$0x3] %vm354, %v594
    %s597 = scalar_lea.vmem %s0, 3
    %v598 = vld [vmem:[%s597] sm:$0x1]
    %v599 = vunpack.c.l.bf16 %v598
    %v600 = vpack.c.bf16 %v511, %v511
    %602 = vrot.lane.b32.xlu0 %v600, 32
    %v603 = vpop.permute.xlu0 %602
    %v605 = vsel %vm92, %v603, 0
    %607 = vmatprep.subr.bf16.mxu0 0
    %608 = vmatpush1.bf16.msra.mxu0 %v88
    %609 = vmatprep.subr.bf16.mxu0 0
    %610 = vmatpush1.bf16.msra.mxu0 %v89
    %611 = vmatprep.subr.bf16.mxu0 0
    %612 = vmatpush1.bf16.msra.mxu0 0
    %613 = vmatprep.subr.bf16.mxu0 0
    %614 = vmatpush1.bf16.msra.mxu0 0
    %615 = vmatprep.subr.bf16.mxu0 0
    %616 = vmatpush1.bf16.msra.mxu0 0
    %617 = vmatprep.subr.bf16.mxu0 0
    %618 = vmatpush1.bf16.msra.mxu0 0
    %619 = vmatprep.subr.bf16.mxu0 0
    %620 = vmatpush1.bf16.msra.mxu0 0
    %621 = vmatprep.subr.bf16.mxu0 0
    %622 = vmatpush1.bf16.msra.mxu0 0
    %623 = vmatprep.subr.bf16.mxu0 0
    %624 = vmatpush1.bf16.msra.mxu0 0
    %625 = vmatprep.subr.bf16.mxu0 0
    %626 = vmatpush1.bf16.msra.mxu0 0
    %627 = vmatprep.subr.bf16.mxu0 0
    %628 = vmatpush1.bf16.msra.mxu0 0
    %629 = vmatprep.subr.bf16.mxu0 0
    %630 = vmatpush1.bf16.msra.mxu0 0
    %631 = vmatprep.subr.bf16.mxu0 0
    %632 = vmatpush1.bf16.msra.mxu0 0
    %633 = vmatprep.subr.bf16.mxu0 0
    %634 = vmatpush1.bf16.msra.mxu0 0
    %635 = vmatprep.subr.bf16.mxu0 0
    %636 = vmatpush1.bf16.msra.mxu0 0
    %637 = vmatprep.subr.bf16.mxu0 0
    %638 = vmatpush1.bf16.msra.mxu0 0
    %639 = vmatprep.mubr.bf16.mxu0 0
    %640 = vmatmul.mubr.bf16.gmra.mrb[0].mxu0 %v605
    %v641 = vpop.f32.mrb[0].mxu0
    %v642 = vadd.f32 0.0, %v641
    %v643 = vpop.f32.mrb[0].mxu0
    %v644 = vpop.f32.mrb[0].mxu0
    %v645 = vpop.f32.mrb[0].mxu0
    %646 = vdwg.mxu0
    %v647 = vadd.f32 %v599, %v642
    %v648 = vxor.u32 %v647, 2147483648
    %v649 = vmul.f32 %v648, 1.442695
    %v650 = vpow.pop %v649
    %v651 = vadd.f32 %v650, 1.0
    %v652 = vrcp.pop %v651
    %v653 = vmul.f32 1.0, %v652
    %v654 = vtanh.pop %v647
    %v655 = vmul.f32 %v653, %v505
    %657 = vrot.lane.b32.xlu0 %v654, 64
    %v658 = vpop.permute.xlu0 %657
    %v660 = vmul.f32 %v653, %v658
    %662 = vrot.lane.b32.xlu0 %v660, 32
    %v663 = vpop.permute.xlu0 %662
    %v665 = vadd.f32 %v655, %v663
    %v666 = vtanh.pop %v665
    %668 = vrot.lane.b32.xlu0 %v666, 64
    %v669 = vpop.permute.xlu0 %668
    %v671 = vmul.f32 %v653, %v669
    %672 = vst.msk [vmem:[#allocation4] sm:$0x3] %vm273, %v671
    %s673 = scalar_lea.vmem %s45, 4
    %v674 = vld [vmem:[%s673] sm:$0x1]
    %v675 = vunpack.c.l.bf16 %v674
    %v676 = vpack.c.bf16 %v591, %v591
    %678 = vrot.lane.b32.xlu0 %v676, 32
    %v679 = vpop.permute.xlu0 %678
    %v681 = vsel %vm92, %v679, 0
    %683 = vmatprep.subr.bf16.mxu0 0
    %684 = vmatpush1.bf16.msra.mxu0 %v190
    %685 = vmatprep.subr.bf16.mxu0 0
    %686 = vmatpush1.bf16.msra.mxu0 %v191
    %687 = vmatprep.subr.bf16.mxu0 0
    %688 = vmatpush1.bf16.msra.mxu0 0
    %689 = vmatprep.subr.bf16.mxu0 0
    %690 = vmatpush1.bf16.msra.mxu0 0
    %691 = vmatprep.subr.bf16.mxu0 0
    %692 = vmatpush1.bf16.msra.mxu0 0
    %693 = vmatprep.subr.bf16.mxu0 0
    %694 = vmatpush1.bf16.msra.mxu0 0
    %695 = vmatprep.subr.bf16.mxu0 0
    %696 = vmatpush1.bf16.msra.mxu0 0
    %697 = vmatprep.subr.bf16.mxu0 0
    %698 = vmatpush1.bf16.msra.mxu0 0
    %699 = vmatprep.subr.bf16.mxu0 0
    %700 = vmatpush1.bf16.msra.mxu0 0
    %701 = vmatprep.subr.bf16.mxu0 0
    %702 = vmatpush1.bf16.msra.mxu0 0
    %703 = vmatprep.subr.bf16.mxu0 0
    %704 = vmatpush1.bf16.msra.mxu0 0
    %705 = vmatprep.subr.bf16.mxu0 0
    %706 = vmatpush1.bf16.msra.mxu0 0
    %707 = vmatprep.subr.bf16.mxu0 0
    %708 = vmatpush1.bf16.msra.mxu0 0
    %709 = vmatprep.subr.bf16.mxu0 0
    %710 = vmatpush1.bf16.msra.mxu0 0
    %711 = vmatprep.subr.bf16.mxu0 0
    %712 = vmatpush1.bf16.msra.mxu0 0
    %713 = vmatprep.subr.bf16.mxu0 0
    %714 = vmatpush1.bf16.msra.mxu0 0
    %715 = vmatprep.mubr.bf16.mxu0 0
    %716 = vmatmul.mubr.bf16.gmra.mrb[0].mxu0 %v681
    %v717 = vpop.f32.mrb[0].mxu0
    %v718 = vadd.f32 0.0, %v717
    %v719 = vpop.f32.mrb[0].mxu0
    %v720 = vpop.f32.mrb[0].mxu0
    %v721 = vpop.f32.mrb[0].mxu0
    %722 = vdwg.mxu0
    %v723 = vadd.f32 %v675, %v718
    %v724 = vxor.u32 %v723, 2147483648
    %v725 = vmul.f32 %v724, 1.442695
    %v726 = vpow.pop %v725
    %v727 = vadd.f32 %v726, 1.0
    %v728 = vrcp.pop %v727
    %v729 = vmul.f32 1.0, %v728
    %v730 = vtanh.pop %v723
    %v731 = vmul.f32 %v729, %v585
    %733 = vrot.lane.b32.xlu0 %v730, 64
    %v734 = vpop.permute.xlu0 %733
    %v736 = vmul.f32 %v729, %v734
    %738 = vrot.lane.b32.xlu0 %v736, 32
    %v739 = vpop.permute.xlu0 %738
    %v741 = vadd.f32 %v731, %v739
    %v742 = vtanh.pop %v741
    %744 = vrot.lane.b32.xlu0 %v742, 64
    %v745 = vpop.permute.xlu0 %744
    %v747 = vmul.f32 %v729, %v745
    %749 = vrot.lane.b32.xlu0 %v747, 32
    %v750 = vpop.permute.xlu0 %749
    %752 = vst.msk [vmem:[#allocation6 + $0x2] sm:$0x3] %vm176, %v750
    %s753 = scalar_lea.vmem %s0, 4
    %v754 = vld [vmem:[%s753] sm:$0x1]
    %v755 = vunpack.c.l.bf16 %v754
    %v756 = vpack.c.bf16 %v671, %v671
    %758 = vrot.lane.b32.xlu0 %v756, 32
    %v759 = vpop.permute.xlu0 %758
    %v761 = vsel %vm92, %v759, 0
    %763 = vmatprep.subr.bf16.mxu0 0
    %764 = vmatpush1.bf16.msra.mxu0 %v88
    %765 = vmatprep.subr.bf16.mxu0 0
    %766 = vmatpush1.bf16.msra.mxu0 %v89
    %767 = vmatprep.subr.bf16.mxu0 0
    %768 = vmatpush1.bf16.msra.mxu0 0
    %769 = vmatprep.subr.bf16.mxu0 0
    %770 = vmatpush1.bf16.msra.mxu0 0
    %771 = vmatprep.subr.bf16.mxu0 0
    %772 = vmatpush1.bf16.msra.mxu0 0
    %773 = vmatprep.subr.bf16.mxu0 0
    %774 = vmatpush1.bf16.msra.mxu0 0
    %775 = vmatprep.subr.bf16.mxu0 0
    %776 = vmatpush1.bf16.msra.mxu0 0
    %777 = vmatprep.subr.bf16.mxu0 0
    %778 = vmatpush1.bf16.msra.mxu0 0
    %779 = vmatprep.subr.bf16.mxu0 0
    %780 = vmatpush1.bf16.msra.mxu0 0
    %781 = vmatprep.subr.bf16.mxu0 0
    %782 = vmatpush1.bf16.msra.mxu0 0
    %783 = vmatprep.subr.bf16.mxu0 0
    %784 = vmatpush1.bf16.msra.mxu0 0
    %785 = vmatprep.subr.bf16.mxu0 0
    %786 = vmatpush1.bf16.msra.mxu0 0
    %787 = vmatprep.subr.bf16.mxu0 0
    %788 = vmatpush1.bf16.msra.mxu0 0
    %789 = vmatprep.subr.bf16.mxu0 0
    %790 = vmatpush1.bf16.msra.mxu0 0
    %791 = vmatprep.subr.bf16.mxu0 0
    %792 = vmatpush1.bf16.msra.mxu0 0
    %793 = vmatprep.subr.bf16.mxu0 0
    %794 = vmatpush1.bf16.msra.mxu0 0
    %795 = vmatprep.mubr.bf16.mxu0 0
    %796 = vmatmul.mubr.bf16.gmra.mrb[0].mxu0 %v761
    %v797 = vpop.f32.mrb[0].mxu0
    %v798 = vadd.f32 0.0, %v797
    %v799 = vpop.f32.mrb[0].mxu0
    %v800 = vpop.f32.mrb[0].mxu0
    %v801 = vpop.f32.mrb[0].mxu0
    %802 = vdwg.mxu0
    %v803 = vadd.f32 %v755, %v798
    %v804 = vxor.u32 %v803, 2147483648
    %v805 = vmul.f32 %v804, 1.442695
    %v806 = vpow.pop %v805
    %v807 = vadd.f32 %v806, 1.0
    %v808 = vrcp.pop %v807
    %v809 = vmul.f32 1.0, %v808
    %v810 = vtanh.pop %v803
    %v811 = vmul.f32 %v809, %v665
    %813 = vrot.lane.b32.xlu0 %v810, 64
    %v814 = vpop.permute.xlu0 %813
    %v816 = vmul.f32 %v809, %v814
    %818 = vrot.lane.b32.xlu0 %v816, 32
    %v819 = vpop.permute.xlu0 %818
    %v821 = vadd.f32 %v811, %v819
    %v822 = vtanh.pop %v821
    %824 = vrot.lane.b32.xlu0 %v822, 64
    %v825 = vpop.permute.xlu0 %824
    %v827 = vmul.f32 %v809, %v825
    %829 = vrot.lane.b32.xlu0 %v827, 32
    %v830 = vpop.permute.xlu0 %829
    %832 = vst.msk [vmem:[#allocation4 + $0x2] sm:$0x3] %vm176, %v830
    %s833 = scalar_lea.vmem %s45, 3
    %v834 = vld [vmem:[%s833] sm:$0x1]
    %v835 = vunpack.c.l.bf16 %v834
    %v836 = vpack.c.bf16 %v747, %v747
    %838 = vrot.lane.b32.xlu0 %v836, 32
    %v839 = vpop.permute.xlu0 %838
    %v841 = vsel %vm92, %v839, 0
    %843 = vmatprep.subr.bf16.mxu0 0
    %844 = vmatpush1.bf16.msra.mxu0 %v190
    %845 = vmatprep.subr.bf16.mxu0 0
    %846 = vmatpush1.bf16.msra.mxu0 %v191
    %847 = vmatprep.subr.bf16.mxu0 0
    %848 = vmatpush1.bf16.msra.mxu0 0
    %849 = vmatprep.subr.bf16.mxu0 0
    %850 = vmatpush1.bf16.msra.mxu0 0
    %851 = vmatprep.subr.bf16.mxu0 0
    %852 = vmatpush1.bf16.msra.mxu0 0
    %853 = vmatprep.subr.bf16.mxu0 0
    %854 = vmatpush1.bf16.msra.mxu0 0
    %855 = vmatprep.subr.bf16.mxu0 0
    %856 = vmatpush1.bf16.msra.mxu0 0
    %857 = vmatprep.subr.bf16.mxu0 0
    %858 = vmatpush1.bf16.msra.mxu0 0
    %859 = vmatprep.subr.bf16.mxu0 0
    %860 = vmatpush1.bf16.msra.mxu0 0
    %861 = vmatprep.subr.bf16.mxu0 0
    %862 = vmatpush1.bf16.msra.mxu0 0
    %863 = vmatprep.subr.bf16.mxu0 0
    %864 = vmatpush1.bf16.msra.mxu0 0
    %865 = vmatprep.subr.bf16.mxu0 0
    %866 = vmatpush1.bf16.msra.mxu0 0
    %867 = vmatprep.subr.bf16.mxu0 0
    %868 = vmatpush1.bf16.msra.mxu0 0
    %869 = vmatprep.subr.bf16.mxu0 0
    %870 = vmatpush1.bf16.msra.mxu0 0
    %871 = vmatprep.subr.bf16.mxu0 0
    %872 = vmatpush1.bf16.msra.mxu0 0
    %873 = vmatprep.subr.bf16.mxu0 0
    %874 = vmatpush1.bf16.msra.mxu0 0
    %875 = vmatprep.mubr.bf16.mxu0 0
    %876 = vmatmul.mubr.bf16.gmra.mrb[0].mxu0 %v841
    %v877 = vpop.f32.mrb[0].mxu0
    %v878 = vadd.f32 0.0, %v877
    %v879 = vpop.f32.mrb[0].mxu0
    %v880 = vpop.f32.mrb[0].mxu0
    %v881 = vpop.f32.mrb[0].mxu0
    %882 = vdwg.mxu0
    %v883 = vadd.f32 %v835, %v878
    %v884 = vxor.u32 %v883, 2147483648
    %v885 = vmul.f32 %v884, 1.442695
    %v886 = vpow.pop %v885
    %v887 = vadd.f32 %v886, 1.0
    %v888 = vrcp.pop %v887
    %v889 = vmul.f32 1.0, %v888
    %v890 = vtanh.pop %v883
    %v891 = vmul.f32 %v889, %v741
    %893 = vrot.lane.b32.xlu0 %v890, 64
    %v894 = vpop.permute.xlu0 %893
    %v896 = vmul.f32 %v889, %v894
    %898 = vrot.lane.b32.xlu0 %v896, 32
    %v899 = vpop.permute.xlu0 %898
    %v901 = vadd.f32 %v891, %v899
    %v902 = vtanh.pop %v901
    %904 = vrot.lane.b32.xlu0 %v902, 64
    %v905 = vpop.permute.xlu0 %904
    %v907 = vmul.f32 %v889, %v905
    %908 = vst.msk [vmem:[#allocation6] sm:$0x3] %vm273, %v907
    %s909 = scalar_lea.vmem %s0, 5
    %v910 = vld [vmem:[%s909] sm:$0x1]
    %v911 = vunpack.c.l.bf16 %v910
    %v912 = vpack.c.bf16 %v827, %v827
    %914 = vrot.lane.b32.xlu0 %v912, 32
    %v915 = vpop.permute.xlu0 %914
    %v917 = vsel %vm92, %v915, 0
    %919 = vmatprep.subr.bf16.mxu0 0
    %920 = vmatpush1.bf16.msra.mxu0 %v88
    %921 = vmatprep.subr.bf16.mxu0 0
    %922 = vmatpush1.bf16.msra.mxu0 %v89
    %923 = vmatprep.subr.bf16.mxu0 0
    %924 = vmatpush1.bf16.msra.mxu0 0
    %925 = vmatprep.subr.bf16.mxu0 0
    %926 = vmatpush1.bf16.msra.mxu0 0
    %927 = vmatprep.subr.bf16.mxu0 0
    %928 = vmatpush1.bf16.msra.mxu0 0
    %929 = vmatprep.subr.bf16.mxu0 0
    %930 = vmatpush1.bf16.msra.mxu0 0
    %931 = vmatprep.subr.bf16.mxu0 0
    %932 = vmatpush1.bf16.msra.mxu0 0
    %933 = vmatprep.subr.bf16.mxu0 0
    %934 = vmatpush1.bf16.msra.mxu0 0
    %935 = vmatprep.subr.bf16.mxu0 0
    %936 = vmatpush1.bf16.msra.mxu0 0
    %937 = vmatprep.subr.bf16.mxu0 0
    %938 = vmatpush1.bf16.msra.mxu0 0
    %939 = vmatprep.subr.bf16.mxu0 0
    %940 = vmatpush1.bf16.msra.mxu0 0
    %941 = vmatprep.subr.bf16.mxu0 0
    %942 = vmatpush1.bf16.msra.mxu0 0
    %943 = vmatprep.subr.bf16.mxu0 0
    %944 = vmatpush1.bf16.msra.mxu0 0
    %945 = vmatprep.subr.bf16.mxu0 0
    %946 = vmatpush1.bf16.msra.mxu0 0
    %947 = vmatprep.subr.bf16.mxu0 0
    %948 = vmatpush1.bf16.msra.mxu0 0
    %949 = vmatprep.subr.bf16.mxu0 0
    %950 = vmatpush1.bf16.msra.mxu0 0
    %951 = vmatprep.mubr.bf16.mxu0 0
    %952 = vmatmul.mubr.bf16.gmra.mrb[0].mxu0 %v917
    %v953 = vpop.f32.mrb[0].mxu0
    %v954 = vadd.f32 0.0, %v953
    %v955 = vpop.f32.mrb[0].mxu0
    %v956 = vpop.f32.mrb[0].mxu0
    %v957 = vpop.f32.mrb[0].mxu0
    %958 = vdwg.mxu0
    %v959 = vadd.f32 %v911, %v954
    %v960 = vxor.u32 %v959, 2147483648
    %v961 = vmul.f32 %v960, 1.442695
    %v962 = vpow.pop %v961
    %v963 = vadd.f32 %v962, 1.0
    %v964 = vrcp.pop %v963
    %v965 = vmul.f32 1.0, %v964
    %v966 = vtanh.pop %v959
    %v967 = vmul.f32 %v965, %v821
    %969 = vrot.lane.b32.xlu0 %v966, 64
    %v970 = vpop.permute.xlu0 %969
    %v972 = vmul.f32 %v965, %v970
    %974 = vrot.lane.b32.xlu0 %v972, 32
    %v975 = vpop.permute.xlu0 %974
    %v977 = vadd.f32 %v967, %v975
    %v978 = vtanh.pop %v977
    %980 = vrot.lane.b32.xlu0 %v978, 64
    %v981 = vpop.permute.xlu0 %980
    %v983 = vmul.f32 %v965, %v981
    %985 = vrot.lane.b32.xlu0 %v983, 64
    %v986 = vpop.permute.xlu0 %985
    %988 = vst.msk [vmem:[#allocation4 + $0x2] sm:$0x3] %vm354, %v986
    %s989 = scalar_lea.vmem %s45, 2
    %v990 = vld [vmem:[%s989] sm:$0x1]
    %v991 = vunpack.c.l.bf16 %v990
    %v992 = vpack.c.bf16 %v907, %v907
    %994 = vrot.lane.b32.xlu0 %v992, 32
    %v995 = vpop.permute.xlu0 %994
    %v997 = vsel %vm92, %v995, 0
    %999 = vmatprep.subr.bf16.mxu0 0
    %1000 = vmatpush1.bf16.msra.mxu0 %v190
    %1001 = vmatprep.subr.bf16.mxu0 0
    %1002 = vmatpush1.bf16.msra.mxu0 %v191
    %1003 = vmatprep.subr.bf16.mxu0 0
    %1004 = vmatpush1.bf16.msra.mxu0 0
    %1005 = vmatprep.subr.bf16.mxu0 0
    %1006 = vmatpush1.bf16.msra.mxu0 0
    %1007 = vmatprep.subr.bf16.mxu0 0
    %1008 = vmatpush1.bf16.msra.mxu0 0
    %1009 = vmatprep.subr.bf16.mxu0 0
    %1010 = vmatpush1.bf16.msra.mxu0 0
    %1011 = vmatprep.subr.bf16.mxu0 0
    %1012 = vmatpush1.bf16.msra.mxu0 0
    %1013 = vmatprep.subr.bf16.mxu0 0
    %1014 = vmatpush1.bf16.msra.mxu0 0
    %1015 = vmatprep.subr.bf16.mxu0 0
    %1016 = vmatpush1.bf16.msra.mxu0 0
    %1017 = vmatprep.subr.bf16.mxu0 0
    %1018 = vmatpush1.bf16.msra.mxu0 0
    %1019 = vmatprep.subr.bf16.mxu0 0
    %1020 = vmatpush1.bf16.msra.mxu0 0
    %1021 = vmatprep.subr.bf16.mxu0 0
    %1022 = vmatpush1.bf16.msra.mxu0 0
    %1023 = vmatprep.subr.bf16.mxu0 0
    %1024 = vmatpush1.bf16.msra.mxu0 0
    %1025 = vmatprep.subr.bf16.mxu0 0
    %1026 = vmatpush1.bf16.msra.mxu0 0
    %1027 = vmatprep.subr.bf16.mxu0 0
    %1028 = vmatpush1.bf16.msra.mxu0 0
    %1029 = vmatprep.subr.bf16.mxu0 0
    %1030 = vmatpush1.bf16.msra.mxu0 0
    %1031 = vmatprep.mubr.bf16.mxu0 0
    %1032 = vmatmul.mubr.bf16.gmra.mrb[0].mxu0 %v997
    %v1033 = vpop.f32.mrb[0].mxu0
    %v1034 = vadd.f32 0.0, %v1033
    %v1035 = vpop.f32.mrb[0].mxu0
    %v1036 = vpop.f32.mrb[0].mxu0
    %v1037 = vpop.f32.mrb[0].mxu0
    %1038 = vdwg.mxu0
    %v1039 = vadd.f32 %v991, %v1034
    %v1040 = vxor.u32 %v1039, 2147483648
    %v1041 = vmul.f32 %v1040, 1.442695
    %v1042 = vpow.pop %v1041
    %v1043 = vadd.f32 %v1042, 1.0
    %v1044 = vrcp.pop %v1043
    %v1045 = vmul.f32 1.0, %v1044
    %v1046 = vtanh.pop %v1039
    %v1047 = vmul.f32 %v1045, %v901
    %1049 = vrot.lane.b32.xlu0 %v1046, 64
    %v1050 = vpop.permute.xlu0 %1049
    %v1052 = vmul.f32 %v1045, %v1050
    %1054 = vrot.lane.b32.xlu0 %v1052, 32
    %v1055 = vpop.permute.xlu0 %1054
    %v1057 = vadd.f32 %v1047, %v1055
    %v1058 = vtanh.pop %v1057
    %1060 = vrot.lane.b32.xlu0 %v1058, 64
    %v1061 = vpop.permute.xlu0 %1060
    %v1063 = vmul.f32 %v1045, %v1061
    %1065 = vrot.lane.b32.xlu0 %v1063, 96
    %v1066 = vpop.permute.xlu0 %1065
    %1068 = vst.msk [vmem:[#allocation6] sm:$0x3] %vm435, %v1066
    %s1069 = scalar_lea.vmem %s0, 6
    %v1070 = vld [vmem:[%s1069] sm:$0x1]
    %v1071 = vunpack.c.l.bf16 %v1070
    %v1072 = vpack.c.bf16 %v983, %v983
    %1074 = vrot.lane.b32.xlu0 %v1072, 32
    %v1075 = vpop.permute.xlu0 %1074
    %v1077 = vsel %vm92, %v1075, 0
    %1079 = vmatprep.subr.bf16.mxu0 0
    %1080 = vmatpush1.bf16.msra.mxu0 %v88
    %1081 = vmatprep.subr.bf16.mxu0 0
    %1082 = vmatpush1.bf16.msra.mxu0 %v89
    %1083 = vmatprep.subr.bf16.mxu0 0
    %1084 = vmatpush1.bf16.msra.mxu0 0
    %1085 = vmatprep.subr.bf16.mxu0 0
    %1086 = vmatpush1.bf16.msra.mxu0 0
    %1087 = vmatprep.subr.bf16.mxu0 0
    %1088 = vmatpush1.bf16.msra.mxu0 0
    %1089 = vmatprep.subr.bf16.mxu0 0
    %1090 = vmatpush1.bf16.msra.mxu0 0
    %1091 = vmatprep.subr.bf16.mxu0 0
    %1092 = vmatpush1.bf16.msra.mxu0 0
    %1093 = vmatprep.subr.bf16.mxu0 0
    %1094 = vmatpush1.bf16.msra.mxu0 0
    %1095 = vmatprep.subr.bf16.mxu0 0
    %1096 = vmatpush1.bf16.msra.mxu0 0
    %1097 = vmatprep.subr.bf16.mxu0 0
    %1098 = vmatpush1.bf16.msra.mxu0 0
    %1099 = vmatprep.subr.bf16.mxu0 0
    %1100 = vmatpush1.bf16.msra.mxu0 0
    %1101 = vmatprep.subr.bf16.mxu0 0
    %1102 = vmatpush1.bf16.msra.mxu0 0
    %1103 = vmatprep.subr.bf16.mxu0 0
    %1104 = vmatpush1.bf16.msra.mxu0 0
    %1105 = vmatprep.subr.bf16.mxu0 0
    %1106 = vmatpush1.bf16.msra.mxu0 0
    %1107 = vmatprep.subr.bf16.mxu0 0
    %1108 = vmatpush1.bf16.msra.mxu0 0
    %1109 = vmatprep.subr.bf16.mxu0 0
    %1110 = vmatpush1.bf16.msra.mxu0 0
    %1111 = vmatprep.mubr.bf16.mxu0 0
    %1112 = vmatmul.mubr.bf16.gmra.mrb[0].mxu0 %v1077
    %v1113 = vpop.f32.mrb[0].mxu0
    %v1114 = vadd.f32 0.0, %v1113
    %v1115 = vpop.f32.mrb[0].mxu0
    %v1116 = vpop.f32.mrb[0].mxu0
    %v1117 = vpop.f32.mrb[0].mxu0
    %1118 = vdwg.mxu0
    %v1119 = vadd.f32 %v1071, %v1114
    %v1120 = vxor.u32 %v1119, 2147483648
    %v1121 = vmul.f32 %v1120, 1.442695
    %v1122 = vpow.pop %v1121
    %v1123 = vadd.f32 %v1122, 1.0
    %v1124 = vrcp.pop %v1123
    %v1125 = vmul.f32 1.0, %v1124
    %v1126 = vtanh.pop %v1119
    %v1127 = vmul.f32 %v1125, %v977
    %1129 = vrot.lane.b32.xlu0 %v1126, 64
    %v1130 = vpop.permute.xlu0 %1129
    %v1132 = vmul.f32 %v1125, %v1130
    %1134 = vrot.lane.b32.xlu0 %v1132, 32
    %v1135 = vpop.permute.xlu0 %1134
    %v1137 = vadd.f32 %v1127, %v1135
    %v1138 = vtanh.pop %v1137
    %1140 = vrot.lane.b32.xlu0 %v1138, 64
    %v1141 = vpop.permute.xlu0 %1140
    %v1143 = vmul.f32 %v1125, %v1141
    %1145 = vrot.lane.b32.xlu0 %v1143, 96
    %v1146 = vpop.permute.xlu0 %1145
    %1148 = vst.msk [vmem:[#allocation4 + $0x2] sm:$0x3] %vm435, %v1146
    %s1149 = scalar_lea.vmem %s45, 1
    %v1150 = vld [vmem:[%s1149] sm:$0x1]
    %v1151 = vunpack.c.l.bf16 %v1150
    %v1152 = vpack.c.bf16 %v1063, %v1063
    %1154 = vrot.lane.b32.xlu0 %v1152, 32
    %v1155 = vpop.permute.xlu0 %1154
    %v1157 = vsel %vm92, %v1155, 0
    %1159 = vmatprep.subr.bf16.mxu0 0
    %1160 = vmatpush1.bf16.msra.mxu0 %v190
    %1161 = vmatprep.subr.bf16.mxu0 0
    %1162 = vmatpush1.bf16.msra.mxu0 %v191
    %1163 = vmatprep.subr.bf16.mxu0 0
    %1164 = vmatpush1.bf16.msra.mxu0 0
    %1165 = vmatprep.subr.bf16.mxu0 0
    %1166 = vmatpush1.bf16.msra.mxu0 0
    %1167 = vmatprep.subr.bf16.mxu0 0
    %1168 = vmatpush1.bf16.msra.mxu0 0
    %1169 = vmatprep.subr.bf16.mxu0 0
    %1170 = vmatpush1.bf16.msra.mxu0 0
    %1171 = vmatprep.subr.bf16.mxu0 0
    %1172 = vmatpush1.bf16.msra.mxu0 0
    %1173 = vmatprep.subr.bf16.mxu0 0
    %1174 = vmatpush1.bf16.msra.mxu0 0
    %1175 = vmatprep.subr.bf16.mxu0 0
    %1176 = vmatpush1.bf16.msra.mxu0 0
    %1177 = vmatprep.subr.bf16.mxu0 0
    %1178 = vmatpush1.bf16.msra.mxu0 0
    %1179 = vmatprep.subr.bf16.mxu0 0
    %1180 = vmatpush1.bf16.msra.mxu0 0
    %1181 = vmatprep.subr.bf16.mxu0 0
    %1182 = vmatpush1.bf16.msra.mxu0 0
    %1183 = vmatprep.subr.bf16.mxu0 0
    %1184 = vmatpush1.bf16.msra.mxu0 0
    %1185 = vmatprep.subr.bf16.mxu0 0
    %1186 = vmatpush1.bf16.msra.mxu0 0
    %1187 = vmatprep.subr.bf16.mxu0 0
    %1188 = vmatpush1.bf16.msra.mxu0 0
    %1189 = vmatprep.subr.bf16.mxu0 0
    %1190 = vmatpush1.bf16.msra.mxu0 0
    %1191 = vmatprep.mubr.bf16.mxu0 0
    %1192 = vmatmul.mubr.bf16.gmra.mrb[0].mxu0 %v1157
    %v1193 = vpop.f32.mrb[0].mxu0
    %v1194 = vadd.f32 0.0, %v1193
    %v1195 = vpop.f32.mrb[0].mxu0
    %v1196 = vpop.f32.mrb[0].mxu0
    %v1197 = vpop.f32.mrb[0].mxu0
    %1198 = vdwg.mxu0
    %v1199 = vadd.f32 %v1151, %v1194
    %v1200 = vxor.u32 %v1199, 2147483648
    %v1201 = vmul.f32 %v1200, 1.442695
    %v1202 = vpow.pop %v1201
    %v1203 = vadd.f32 %v1202, 1.0
    %v1204 = vrcp.pop %v1203
    %v1205 = vmul.f32 1.0, %v1204
    %v1206 = vtanh.pop %v1199
    %v1207 = vmul.f32 %v1205, %v1057
    %1209 = vrot.lane.b32.xlu0 %v1206, 64
    %v1210 = vpop.permute.xlu0 %1209
    %v1212 = vmul.f32 %v1205, %v1210
    %1214 = vrot.lane.b32.xlu0 %v1212, 32
    %v1215 = vpop.permute.xlu0 %1214
    %v1217 = vadd.f32 %v1207, %v1215
    %v1218 = vtanh.pop %v1217
    %1220 = vrot.lane.b32.xlu0 %v1218, 64
    %v1221 = vpop.permute.xlu0 %1220
    %v1223 = vmul.f32 %v1205, %v1221
    %1225 = vrot.lane.b32.xlu0 %v1223, 64
    %v1226 = vpop.permute.xlu0 %1225
    %1228 = vst.msk [vmem:[#allocation6] sm:$0x3] %vm354, %v1226
    %s1229 = scalar_lea.vmem %s0, 7
    %v1230 = vld [vmem:[%s1229] sm:$0x1]
    %v1231 = vunpack.c.l.bf16 %v1230
    %v1232 = vpack.c.bf16 %v1143, %v1143
    %1234 = vrot.lane.b32.xlu0 %v1232, 32
    %v1235 = vpop.permute.xlu0 %1234
    %v1237 = vsel %vm92, %v1235, 0
    %1239 = vmatprep.subr.bf16.mxu0 0
    %1240 = vmatpush1.bf16.msra.mxu0 %v88
    %1241 = vmatprep.subr.bf16.mxu0 0
    %1242 = vmatpush1.bf16.msra.mxu0 %v89
    %1243 = vmatprep.subr.bf16.mxu0 0
    %1244 = vmatpush1.bf16.msra.mxu0 0
    %1245 = vmatprep.subr.bf16.mxu0 0
    %1246 = vmatpush1.bf16.msra.mxu0 0
    %1247 = vmatprep.subr.bf16.mxu0 0
    %1248 = vmatpush1.bf16.msra.mxu0 0
    %1249 = vmatprep.subr.bf16.mxu0 0
    %1250 = vmatpush1.bf16.msra.mxu0 0
    %1251 = vmatprep.subr.bf16.mxu0 0
    %1252 = vmatpush1.bf16.msra.mxu0 0
    %1253 = vmatprep.subr.bf16.mxu0 0
    %1254 = vmatpush1.bf16.msra.mxu0 0
    %1255 = vmatprep.subr.bf16.mxu0 0
    %1256 = vmatpush1.bf16.msra.mxu0 0
    %1257 = vmatprep.subr.bf16.mxu0 0
    %1258 = vmatpush1.bf16.msra.mxu0 0
    %1259 = vmatprep.subr.bf16.mxu0 0
    %1260 = vmatpush1.bf16.msra.mxu0 0
    %1261 = vmatprep.subr.bf16.mxu0 0
    %1262 = vmatpush1.bf16.msra.mxu0 0
    %1263 = vmatprep.subr.bf16.mxu0 0
    %1264 = vmatpush1.bf16.msra.mxu0 0
    %1265 = vmatprep.subr.bf16.mxu0 0
    %1266 = vmatpush1.bf16.msra.mxu0 0
    %1267 = vmatprep.subr.bf16.mxu0 0
    %1268 = vmatpush1.bf16.msra.mxu0 0
    %1269 = vmatprep.subr.bf16.mxu0 0
    %1270 = vmatpush1.bf16.msra.mxu0 0
    %1271 = vmatprep.mubr.bf16.mxu0 0
    %1272 = vmatmul.mubr.bf16.gmra.mrb[0].mxu0 %v1237
    %v1273 = vpop.f32.mrb[0].mxu0
    %v1274 = vadd.f32 0.0, %v1273
    %v1275 = vpop.f32.mrb[0].mxu0
    %v1276 = vpop.f32.mrb[0].mxu0
    %v1277 = vpop.f32.mrb[0].mxu0
    %1278 = vdwg.mxu0
    %v1279 = vadd.f32 %v1231, %v1274
    %v1280 = vxor.u32 %v1279, 2147483648
    %v1281 = vmul.f32 %v1280, 1.442695
    %v1282 = vpow.pop %v1281
    %v1283 = vadd.f32 %v1282, 1.0
    %v1284 = vrcp.pop %v1283
    %v1285 = vmul.f32 1.0, %v1284
    %v1286 = vtanh.pop %v1279
    %v1287 = vmul.f32 %v1285, %v1137
    %1289 = vrot.lane.b32.xlu0 %v1286, 64
    %v1290 = vpop.permute.xlu0 %1289
    %v1292 = vmul.f32 %v1285, %v1290
    %1294 = vrot.lane.b32.xlu0 %v1292, 32
    %v1295 = vpop.permute.xlu0 %1294
    %v1297 = vadd.f32 %v1287, %v1295
    %v1298 = vtanh.pop %v1297
    %1300 = vrot.lane.b32.xlu0 %v1298, 64
    %v1301 = vpop.permute.xlu0 %1300
    %v1303 = vmul.f32 %v1285, %v1301
    %1304 = vst.msk [vmem:[#allocation4 + $0x2] sm:$0x3] %vm273, %v1303
    %v1305 = vld [vmem:[%s45] sm:$0x1]
    %v1306 = vunpack.c.l.bf16 %v1305
    %v1307 = vpack.c.bf16 %v1223, %v1223
    %1309 = vrot.lane.b32.xlu0 %v1307, 32
    %v1310 = vpop.permute.xlu0 %1309
    %v1312 = vsel %vm92, %v1310, 0
    %1314 = vmatprep.subr.bf16.mxu0 0
    %1315 = vmatpush1.bf16.msra.mxu0 %v190
    %1316 = vmatprep.subr.bf16.mxu0 0
    %1317 = vmatpush1.bf16.msra.mxu0 %v191
    %1318 = vmatprep.subr.bf16.mxu0 0
    %1319 = vmatpush1.bf16.msra.mxu0 0
    %1320 = vmatprep.subr.bf16.mxu0 0
    %1321 = vmatpush1.bf16.msra.mxu0 0
    %1322 = vmatprep.subr.bf16.mxu0 0
    %1323 = vmatpush1.bf16.msra.mxu0 0
    %1324 = vmatprep.subr.bf16.mxu0 0
    %1325 = vmatpush1.bf16.msra.mxu0 0
    %1326 = vmatprep.subr.bf16.mxu0 0
    %1327 = vmatpush1.bf16.msra.mxu0 0
    %1328 = vmatprep.subr.bf16.mxu0 0
    %1329 = vmatpush1.bf16.msra.mxu0 0
    %1330 = vmatprep.subr.bf16.mxu0 0
    %1331 = vmatpush1.bf16.msra.mxu0 0
    %1332 = vmatprep.subr.bf16.mxu0 0
    %1333 = vmatpush1.bf16.msra.mxu0 0
    %1334 = vmatprep.subr.bf16.mxu0 0
    %1335 = vmatpush1.bf16.msra.mxu0 0
    %1336 = vmatprep.subr.bf16.mxu0 0
    %1337 = vmatpush1.bf16.msra.mxu0 0
    %1338 = vmatprep.subr.bf16.mxu0 0
    %1339 = vmatpush1.bf16.msra.mxu0 0
    %1340 = vmatprep.subr.bf16.mxu0 0
    %1341 = vmatpush1.bf16.msra.mxu0 0
    %1342 = vmatprep.subr.bf16.mxu0 0
    %1343 = vmatpush1.bf16.msra.mxu0 0
    %1344 = vmatprep.subr.bf16.mxu0 0
    %1345 = vmatpush1.bf16.msra.mxu0 0
    %1346 = vmatprep.mubr.bf16.mxu0 0
    %1347 = vmatmul.mubr.bf16.gmra.mrb[0].mxu0 %v1312
    %v1348 = vpop.f32.mrb[0].mxu0
    %v1349 = vadd.f32 0.0, %v1348
    %v1350 = vpop.f32.mrb[0].mxu0
    %v1351 = vpop.f32.mrb[0].mxu0
    %v1352 = vpop.f32.mrb[0].mxu0
    %1353 = vdwg.mxu0
    %v1354 = vadd.f32 %v1306, %v1349
    %v1355 = vxor.u32 %v1354, 2147483648
    %v1356 = vmul.f32 %v1355, 1.442695
    %v1357 = vpow.pop %v1356
    %v1358 = vadd.f32 %v1357, 1.0
    %v1359 = vrcp.pop %v1358
    %v1360 = vmul.f32 1.0, %v1359
    %v1361 = vtanh.pop %v1354
    %v1362 = vmul.f32 %v1360, %v1217
    %1364 = vrot.lane.b32.xlu0 %v1361, 64
    %v1365 = vpop.permute.xlu0 %1364
    %v1367 = vmul.f32 %v1360, %v1365
    %1369 = vrot.lane.b32.xlu0 %v1367, 32
    %v1370 = vpop.permute.xlu0 %1369
    %v1372 = vadd.f32 %v1362, %v1370
    %v1373 = vtanh.pop %v1372
    %1375 = vrot.lane.b32.xlu0 %v1373, 64
    %v1376 = vpop.permute.xlu0 %1375
    %v1378 = vmul.f32 %v1360, %v1376
    %1380 = vrot.lane.b32.xlu0 %v1378, 32
    %v1381 = vpop.permute.xlu0 %1380
    %1383 = vst.msk [vmem:[#allocation6] sm:$0x3] %vm176, %v1381
    %v1386 = vunpack.c.l.s4 1983009808
    %v1387 = vunpack.c.0.s8 %v1386
    %v1388 = vlaneseq
    %v1389 = vshrl.u32 %v1388, 7
    %v1390 = vsub.s32 %v1387, %v1389
    %v1391 = vrot.slane %v1303, %v1390
    %1392 = vrot.lane.b32.xlu0 %v1391, 32
    %v1393 = vpop.permute.xlu0 %1392
    %1395 = vst.msk [vmem:[#allocation2] sm:$0x3] %vm176, %v1393
    %v1398 = vunpack.c.l.s4 1983009808
    %v1399 = vunpack.c.0.s8 %v1398
    %v1400 = vlaneseq
    %v1401 = vshrl.u32 %v1400, 7
    %v1402 = vsub.s32 %v1399, %v1401
    %v1403 = vrot.slane %v1297, %v1402
    %1404 = vrot.lane.b32.xlu0 %v1403, 96
    %v1405 = vpop.permute.xlu0 %1404
    %1407 = vst.msk [vmem:[#allocation3] sm:$0x3] %vm176, %v1405
    %v1409 = vunpack.c.l.s4 1983009808
    %v1410 = vunpack.c.0.s8 %v1409
    %v1411 = vlaneseq
    %v1412 = vshrl.u32 %v1411, 7
    %v1413 = vsub.s32 %v1410, %v1412
    %v1414 = vrot.slane %v1378, %v1413
    %1415 = vrot.lane.b32.xlu0 %v1414, 32
    %v1416 = vpop.permute.xlu0 %1415
    %1418 = vst.msk [vmem:[%s64] sm:$0x3] %vm176, %v1416
    %v1421 = vunpack.c.l.s4 1983009808
    %v1422 = vunpack.c.0.s8 %v1421
    %v1423 = vlaneseq
    %v1424 = vshrl.u32 %v1423, 7
    %v1425 = vsub.s32 %v1422, %v1424
    %v1426 = vrot.slane %v1372, %v1425
    %1427 = vrot.lane.b32.xlu0 %v1426, 96
    %v1428 = vpop.permute.xlu0 %1427
    %1430 = vst.msk [vmem:[%s67] sm:$0x3] %vm176, %v1428
    // Predicated region
    $region30: #{encoder_forward.3} parent=1 // pred_check
      %p1431 = pneg %p50
    $region31: #{encoder_forward.3} parent=1 // pred_check_branch
      %1433 = sbr.rel (%p1431) target = $region33
    $region32: #{encoder_forward.3} parent=1 // pred_region
      %1434 = vst.msk [vmem:[%s8] sm:$0x3] %vm176, %v1393
      %1435 = vst.msk [vmem:[%s9] sm:$0x3] %vm176, %v1405
      %s1436 = scalar_lea.vmem %s8, 2
      %1437 = vst.msk [vmem:[%s1436] sm:$0x3] %vm176, %v1416
      %s1438 = scalar_lea.vmem %s9, 2
      %1439 = vst.msk [vmem:[%s1438] sm:$0x3] %vm176, %v1428
    $region33: #{encoder_forward.3} parent=1 // pred_fallthru
      _
    // Predicated region
    $region34: #{encoder_forward.3} parent=1 // pred_check
      _
    $region35: #{encoder_forward.3} parent=1 // pred_check_branch
      %1441 = sbr.rel (0) target = $region37
    $region36: #{encoder_forward.3} parent=1 // pred_region
      %s1443 = ssub.s32 64, 64
      %1444 = vsyncadd [#allocation5], %s1443
      %s1446 = sshll.u32 [#allocation4], 4
      %s1447 = int_to_ptr.vmem [resolvable:$true] %s1446
      %1449 = dma.vmem_to_hbm [thread:$0]  %s1447, 64, %s6, [#allocation5]
    $region37: #{encoder_forward.3} parent=1 // pred_fallthru
      _
    // Predicated region
    $region38: #{encoder_forward.3} parent=1 // pred_check
      _
    $region39: #{encoder_forward.3} parent=1 // pred_check_branch
      %1451 = sbr.rel (0) target = $region41
    $region40: #{encoder_forward.3} parent=1 // pred_region
      %s1452 = ssub.s32 0, 0
      %s1454 = ssub.s32 64, 64
      %1455 = vsyncadd [#allocation7], %s1454
      %s1456 = smul.addr %s1452, 2
      %s1457 = smul.addr %s1456, 32
      %s1458 = scalar_lea.hbm %s7, %s1457
      %s1460 = sshll.u32 [#allocation6], 4
      %s1461 = int_to_ptr.vmem [resolvable:$true] %s1460
      %1463 = dma.vmem_to_hbm [thread:$0]  %s1461, 64, %s1458, [#allocation7]
    $region41: #{encoder_forward.3} parent=1 // pred_fallthru
      _
    // Predicated region
    $region42: #{encoder_forward.3} parent=1 // pred_check
      _
    $region43: #{encoder_forward.3} parent=1 // pred_check_branch
      %1465 = sbr.rel (0) target = $region45
    $region44: #{encoder_forward.3} parent=1 // pred_region
      _
    $region45: #{encoder_forward.3} parent=1 // pred_fallthru
      _
    // Predicated region
    $region46: #{encoder_forward.3} parent=1 // pred_check
      _
    $region47: #{encoder_forward.3} parent=1 // pred_check_branch
      %1467 = sbr.rel (0) target = $region49
    $region48: #{encoder_forward.3} parent=1 // pred_region
      _
    $region49: #{encoder_forward.3} parent=1 // pred_fallthru
      _
    // Predicated region
    $region50: #{encoder_forward.3} parent=1 // pred_check
      _
    $region51: #{encoder_forward.3} parent=1 // pred_check_branch
      %1469 = sbr.rel (0) target = $region53
    $region52: #{encoder_forward.3} parent=1 // pred_region
      %1470 = dma.done [#allocation5], 64
    $region53: #{encoder_forward.3} parent=1 // pred_fallthru
      _
    // Predicated region
    $region54: #{encoder_forward.3} parent=1 // pred_check
      _
    $region55: #{encoder_forward.3} parent=1 // pred_check_branch
      %1472 = sbr.rel (0) target = $region57
    $region56: #{encoder_forward.3} parent=1 // pred_region
      %1473 = dma.done [#allocation7], 64
    $region57: #{encoder_forward.3} parent=1 // pred_fallthru
      _
    // Predicated region
    $region58: #{encoder_forward.3} parent=1 // pred_check
      _
    $region59: #{encoder_forward.3} parent=1 // pred_check_branch
      %1475 = sbr.rel (0) target = $region61
    $region60: #{encoder_forward.3} parent=1 // pred_region
      _
    $region61: #{encoder_forward.3} parent=1 // pred_fallthru
      _
    // Predicated region
    $region62: #{encoder_forward.3} parent=1 // pred_check
      _
    $region63: #{encoder_forward.3} parent=1 // pred_check_branch
      %1477 = sbr.rel (0) target = $region65
    $region64: #{encoder_forward.3} parent=1 // pred_region
      _
    $region65: #{encoder_forward.3} parent=1 // pred_fallthru
      _
    %1478 = vsyncpa [#allocation5], 1
    %1479 = vsyncpa [#allocation7], 1

</llo_original>
